<compile_context>
chip_gen: v6e
topology: v6e:2x2x1
jax: 0.10.0
libtpu: 0.0.40
codegen_flags: <defaults>
</compile_context>

<pallas_src>
import jax
import jax.numpy as jnp
from jax.experimental import pallas as pl
from jax.experimental.pallas import tpu as pltpu


def _round_up(x, m):
    return ((x + m - 1) // m) * m


def _leaky_relu_f32(h, slope=0.3):
    # Keep the activation in f32 on the accumulator output (v5e has no bf16
    # VPU path); cast to bf16 only at the next matmul input.
    return jnp.where(h >= 0, h, slope * h)


def mlp_kernel(x_ref, w1_ref, w2_ref, w3_ref, w4_ref, w5_ref, o_ref):
    # layer 1: [TB, x_dim] @ [x_dim, 1024]   (bf16 x bf16 -> f32 accumulate)
    h = jnp.dot(x_ref[...], w1_ref[...], preferred_element_type=jnp.float32)
    h = _leaky_relu_f32(h)
    # layer 2: [TB, 1024] @ [1024, 512]
    h = jnp.dot(h.astype(jnp.bfloat16), w2_ref[...],
                preferred_element_type=jnp.float32)
    h = _leaky_relu_f32(h)
    # layer 3: [TB, 512] @ [512, 256]
    h = jnp.dot(h.astype(jnp.bfloat16), w3_ref[...],
                preferred_element_type=jnp.float32)
    h = _leaky_relu_f32(h)
    # layer 4: [TB, 256] @ [256, 128]
    h = jnp.dot(h.astype(jnp.bfloat16), w4_ref[...],
                preferred_element_type=jnp.float32)
    h = _leaky_relu_f32(h)
    # layer 5 (output head, no activation): [TB, 128] @ [128, y_dim]
    h = jnp.dot(h.astype(jnp.bfloat16), w5_ref[...],
                preferred_element_type=jnp.float32)
    o_ref[...] = h.astype(o_ref.dtype)


def mlp_forward(x_nchw, weights, *, max_tile_b=256):
    """x_nchw: [B, C, H, W]; weights: list of (in_dim, out_dim) f32 arrays."""
    B = x_nchw.shape[0]
    x2d = x_nchw.reshape(B, -1)                      # x.flatten(1)
    x_dim = x2d.shape[1]
    y_dim = weights[-1].shape[1]

    # batch tile: multiple of 8 sublanes, capped at max_tile_b
    tb = min(max_tile_b, _round_up(B, 8))
    b_pad = _round_up(B, tb)
    if b_pad != B:
        x2d = jnp.pad(x2d, ((0, b_pad - B), (0, 0)))

    # bf16 matmul operands; accumulation stays f32 inside the kernel
    x_bf16 = x2d.astype(jnp.bfloat16)
    w_bf16 = [w.astype(jnp.bfloat16) for w in weights]

    # Weights: full-array blocks with a constant index_map -> DMA'd once,
    # VMEM-resident across all batch tiles.
    w_specs = [pl.BlockSpec(w.shape, lambda i: (0, 0)) for w in w_bf16]

    out = pl.pallas_call(
        mlp_kernel,
        out_shape=jax.ShapeDtypeStruct((b_pad, y_dim), jnp.float32),
        grid=(b_pad // tb,),
        in_specs=[pl.BlockSpec((tb, x_dim), lambda i: (i, 0))] + w_specs,
        out_specs=pl.BlockSpec((tb, y_dim), lambda i: (i, 0)),
        compiler_params=pltpu.CompilerParams(
            dimension_semantics=("parallel",),
            vmem_limit_bytes=32 * 1024 * 1024,
        ),
    )(x_bf16, *w_bf16)
    return out[:B]


def init_mlp_params(key, x_dim, y_dim):
    """Deterministic synthetic init (Kaiming-uniform-ish), shapes match torch."""
    dims = [x_dim, 1024, 512, 256, 128, y_dim]
    weights = []
    for i in range(5):
        key, sub = jax.random.split(key)
        fan_in, fan_out = dims[i], dims[i + 1]
        bound = 1.0 / jnp.sqrt(fan_in)
        # stored as (in, out); torch stores (out, in) and does x @ W.T
        w = jax.random.uniform(sub, (fan_in, fan_out), jnp.float32,
                               minval=-bound, maxval=bound)
        weights.append(w)
    return weights


def mlp_reference_bf16(x_nchw, weights):
    """Plain-JAX reference mirroring the kernel's bf16-operand / f32-accum flow."""
    h = x_nchw.reshape(x_nchw.shape[0], -1).astype(jnp.bfloat16)
    for i, w in enumerate(weights):
        h = jnp.dot(h, w.astype(jnp.bfloat16),
                    preferred_element_type=jnp.float32)
        if i < len(weights) - 1:
            h = jnp.where(h >= 0, h, 0.3 * h).astype(jnp.bfloat16)
    return h


def mlp_reference_f32(x_nchw, weights):
    """Full-precision reference of the original torch module semantics."""
    h = x_nchw.reshape(x_nchw.shape[0], -1)
    for i, w in enumerate(weights):
        h = h @ w
        if i < len(weights) - 1:
            h = jnp.where(h >= 0, h, 0.3 * h)
    return h


if __name__ == "__main__":
    key = jax.random.PRNGKey(0)
    k_x, k_w = jax.random.split(key)

    # small example input: batch=2, channels=4, spatial=16x16 -> x_dim=1024
    B, C, H, W = 2, 4, 16, 16
    x_dim = C * H * W
    y_dim = 128

    x = jax.random.normal(k_x, (B, C, H, W), jnp.float32)
    weights = init_mlp_params(k_w, x_dim, y_dim)

    out = mlp_forward(x, weights)
    out = jax.block_until_ready(out)
    assert out.shape == (B, y_dim)

    # tight check vs a reference using the same bf16-operand / f32-accum recipe
    ref_bf16 = mlp_reference_bf16(x, weights)
    assert jnp.allclose(out, ref_bf16, atol=1e-2, rtol=1e-2), \
        "mismatch vs bf16-operand reference"

    # loose check vs the full-f32 torch-equivalent reference (bf16 rounding)
    ref_f32 = mlp_reference_f32(x, weights)
    assert jnp.allclose(out, ref_f32, atol=5e-2, rtol=5e-2), \
        "mismatch vs f32 reference"

    print("KERNEL_OK")
</pallas_src>

<mosaic_0001>
module attributes {stable_mosaic.version = 11 : i64} {
  func.func @mlp_kernel(%arg0: i32, %arg1: memref<8x1024xbf16, #tpu.memory_space<vmem>>, %arg2: memref<1024x1024xbf16, #tpu.memory_space<vmem>>, %arg3: memref<1024x512xbf16, #tpu.memory_space<vmem>>, %arg4: memref<512x256xbf16, #tpu.memory_space<vmem>>, %arg5: memref<256x128xbf16, #tpu.memory_space<vmem>>, %arg6: memref<128x128xbf16, #tpu.memory_space<vmem>>, %arg7: memref<8x128xf32, #tpu.memory_space<vmem>>) attributes {dimension_semantics = [#tpu.dimension_semantics<parallel>], iteration_bounds = array<i64: 1>, scalar_prefetch = 0 : i64, scratch_operands = 0 : i64, tpu.core_type = #tpu.core_type<tc>, window_params = [{transform_indices = @transform_0, window_bounds = array<i64: 8, 1024>}, {pipeline_mode = #tpu.pipeline_mode<synchronous>, transform_indices = @transform_1, window_bounds = array<i64: 1024, 1024>}, {pipeline_mode = #tpu.pipeline_mode<synchronous>, transform_indices = @transform_2, window_bounds = array<i64: 1024, 512>}, {pipeline_mode = #tpu.pipeline_mode<synchronous>, transform_indices = @transform_3, window_bounds = array<i64: 512, 256>}, {pipeline_mode = #tpu.pipeline_mode<synchronous>, transform_indices = @transform_4, window_bounds = array<i64: 256, 128>}, {pipeline_mode = #tpu.pipeline_mode<synchronous>, transform_indices = @transform_5, window_bounds = array<i64: 128, 128>}, {transform_indices = @transform_6, window_bounds = array<i64: 8, 128>}]} {
    %c0 = arith.constant 0 : index
    %c0_0 = arith.constant 0 : index
    %0 = vector.load %arg1[%c0, %c0_0] : memref<8x1024xbf16, #tpu.memory_space<vmem>>, vector<8x1024xbf16>
    %c0_1 = arith.constant 0 : index
    %c0_2 = arith.constant 0 : index
    %1 = vector.load %arg2[%c0_1, %c0_2] : memref<1024x1024xbf16, #tpu.memory_space<vmem>>, vector<1024x1024xbf16>
    %cst = arith.constant dense<0.000000e+00> : vector<8x1024xf32>
    %2 = tpu.matmul %0, %1, %cst {dimension_numbers = #tpu.dot_dimension_numbers<[1], [0], [0], [1], [0, 0, 1, 1], [], []>} : vector<8x1024xbf16>, vector<1024x1024xbf16>, vector<8x1024xf32> -> vector<8x1024xf32>
    %cst_3 = arith.constant 0.000000e+00 : f32
    %3 = vector.broadcast %cst_3 : f32 to vector<8x1024xf32>
    %4 = arith.cmpf oge, %2, %3 : vector<8x1024xf32>
    %cst_4 = arith.constant 3.000000e-01 : f32
    %5 = vector.broadcast %cst_4 : f32 to vector<8x1024xf32>
    %6 = arith.mulf %5, %2 : vector<8x1024xf32>
    %7 = arith.select %4, %2, %6 : vector<8x1024xi1>, vector<8x1024xf32>
    %8 = arith.truncf %7 : vector<8x1024xf32> to vector<8x1024xbf16>
    %c0_5 = arith.constant 0 : index
    %c0_6 = arith.constant 0 : index
    %9 = vector.load %arg3[%c0_5, %c0_6] : memref<1024x512xbf16, #tpu.memory_space<vmem>>, vector<1024x512xbf16>
    %cst_7 = arith.constant dense<0.000000e+00> : vector<8x512xf32>
    %10 = tpu.matmul %8, %9, %cst_7 {dimension_numbers = #tpu.dot_dimension_numbers<[1], [0], [0], [1], [0, 0, 1, 1], [], []>} : vector<8x1024xbf16>, vector<1024x512xbf16>, vector<8x512xf32> -> vector<8x512xf32>
    %cst_8 = arith.constant 0.000000e+00 : f32
    %11 = vector.broadcast %cst_8 : f32 to vector<8x512xf32>
    %12 = arith.cmpf oge, %10, %11 : vector<8x512xf32>
    %cst_9 = arith.constant 3.000000e-01 : f32
    %13 = vector.broadcast %cst_9 : f32 to vector<8x512xf32>
    %14 = arith.mulf %13, %10 : vector<8x512xf32>
    %15 = arith.select %12, %10, %14 : vector<8x512xi1>, vector<8x512xf32>
    %16 = arith.truncf %15 : vector<8x512xf32> to vector<8x512xbf16>
    %c0_10 = arith.constant 0 : index
    %c0_11 = arith.constant 0 : index
    %17 = vector.load %arg4[%c0_10, %c0_11] : memref<512x256xbf16, #tpu.memory_space<vmem>>, vector<512x256xbf16>
    %cst_12 = arith.constant dense<0.000000e+00> : vector<8x256xf32>
    %18 = tpu.matmul %16, %17, %cst_12 {dimension_numbers = #tpu.dot_dimension_numbers<[1], [0], [0], [1], [0, 0, 1, 1], [], []>} : vector<8x512xbf16>, vector<512x256xbf16>, vector<8x256xf32> -> vector<8x256xf32>
    %cst_13 = arith.constant 0.000000e+00 : f32
    %19 = vector.broadcast %cst_13 : f32 to vector<8x256xf32>
    %20 = arith.cmpf oge, %18, %19 : vector<8x256xf32>
    %cst_14 = arith.constant 3.000000e-01 : f32
    %21 = vector.broadcast %cst_14 : f32 to vector<8x256xf32>
    %22 = arith.mulf %21, %18 : vector<8x256xf32>
    %23 = arith.select %20, %18, %22 : vector<8x256xi1>, vector<8x256xf32>
    %24 = arith.truncf %23 : vector<8x256xf32> to vector<8x256xbf16>
    %c0_15 = arith.constant 0 : index
    %c0_16 = arith.constant 0 : index
    %25 = vector.load %arg5[%c0_15, %c0_16] : memref<256x128xbf16, #tpu.memory_space<vmem>>, vector<256x128xbf16>
    %cst_17 = arith.constant dense<0.000000e+00> : vector<8x128xf32>
    %26 = tpu.matmul %24, %25, %cst_17 {dimension_numbers = #tpu.dot_dimension_numbers<[1], [0], [0], [1], [0, 0, 1, 1], [], []>} : vector<8x256xbf16>, vector<256x128xbf16>, vector<8x128xf32> -> vector<8x128xf32>
    %cst_18 = arith.constant 0.000000e+00 : f32
    %27 = vector.broadcast %cst_18 : f32 to vector<8x128xf32>
    %28 = arith.cmpf oge, %26, %27 : vector<8x128xf32>
    %cst_19 = arith.constant 3.000000e-01 : f32
    %29 = vector.broadcast %cst_19 : f32 to vector<8x128xf32>
    %30 = arith.mulf %29, %26 : vector<8x128xf32>
    %31 = arith.select %28, %26, %30 : vector<8x128xi1>, vector<8x128xf32>
    %32 = arith.truncf %31 : vector<8x128xf32> to vector<8x128xbf16>
    %c0_20 = arith.constant 0 : index
    %c0_21 = arith.constant 0 : index
    %33 = vector.load %arg6[%c0_20, %c0_21] : memref<128x128xbf16, #tpu.memory_space<vmem>>, vector<128x128xbf16>
    %cst_22 = arith.constant dense<0.000000e+00> : vector<8x128xf32>
    %34 = tpu.matmul %32, %33, %cst_22 {dimension_numbers = #tpu.dot_dimension_numbers<[1], [0], [0], [1], [0, 0, 1, 1], [], []>} : vector<8x128xbf16>, vector<128x128xbf16>, vector<8x128xf32> -> vector<8x128xf32>
    %c0_23 = arith.constant 0 : index
    %c0_24 = arith.constant 0 : index
    %35 = vector.load %arg7[%c0_23, %c0_24] : memref<8x128xf32, #tpu.memory_space<vmem>>, vector<8x128xf32>
    tpu.vector_store %arg7[%c0_23, %c0_24], %34 {strides = array<i32>} : memref<8x128xf32, #tpu.memory_space<vmem>>, vector<8x128xf32>,
    return
  }
  func.func @transform_0(%arg0: i32) -> (i32, i32) {
    %c0_i32 = arith.constant 0 : i32
    %c0_i32_0 = arith.constant 0 : i32
    return %arg0, %c0_i32 : i32, i32
  }
  func.func @transform_1(%arg0: i32) -> (i32, i32) {
    %c0_i32 = arith.constant 0 : i32
    %c0_i32_0 = arith.constant 0 : i32
    %c0_i32_1 = arith.constant 0 : i32
    return %c0_i32, %c0_i32_0 : i32, i32
  }
  func.func @transform_2(%arg0: i32) -> (i32, i32) {
    %c0_i32 = arith.constant 0 : i32
    %c0_i32_0 = arith.constant 0 : i32
    %c0_i32_1 = arith.constant 0 : i32
    return %c0_i32, %c0_i32_0 : i32, i32
  }
  func.func @transform_3(%arg0: i32) -> (i32, i32) {
    %c0_i32 = arith.constant 0 : i32
    %c0_i32_0 = arith.constant 0 : i32
    %c0_i32_1 = arith.constant 0 : i32
    return %c0_i32, %c0_i32_0 : i32, i32
  }
  func.func @transform_4(%arg0: i32) -> (i32, i32) {
    %c0_i32 = arith.constant 0 : i32
    %c0_i32_0 = arith.constant 0 : i32
    %c0_i32_1 = arith.constant 0 : i32
    return %c0_i32, %c0_i32_0 : i32, i32
  }
  func.func @transform_5(%arg0: i32) -> (i32, i32) {
    %c0_i32 = arith.constant 0 : i32
    %c0_i32_0 = arith.constant 0 : i32
    %c0_i32_1 = arith.constant 0 : i32
    return %c0_i32, %c0_i32_0 : i32, i32
  }
  func.func @transform_6(%arg0: i32) -> (i32, i32) {
    %c0_i32 = arith.constant 0 : i32
    %c0_i32_0 = arith.constant 0 : i32
    return %arg0, %c0_i32 : i32, i32
  }
}

</mosaic_0001>

<llo_original>
// kernel: tpu_custom_call.1
$region0: #{tpu_custom_call.1}
  #allocation0 [shape = 'u32[]', space=smem, size = 0x4, offset = 0x4, fixed_abs, tag = 'smem constant byte address 0x4 - core index']
  #allocation1 [shape = 'u32[144,128]{1,0:T(1,128)}', space=vmem, size = 0x12000, scoped, tag = 'internal scratch']
  %s0 = inlined_call_operand.hbm [shape: bf16[8,1024], index: 0, kind: input, shape index: {}]
  %s1 = inlined_call_operand.hbm [shape: bf16[1024,1024], index: 1, kind: input, shape index: {}]
  %s2 = inlined_call_operand.hbm [shape: bf16[1024,512], index: 2, kind: input, shape index: {}]
  %s3 = inlined_call_operand.hbm [shape: bf16[512,256], index: 3, kind: input, shape index: {}]
  %s4 = inlined_call_operand.hbm [shape: bf16[256,128], index: 4, kind: input, shape index: {}]
  %s5 = inlined_call_operand.hbm [shape: bf16[128,128], index: 5, kind: input, shape index: {}]
  %s6 = inlined_call_operand.hbm [shape: f32[8,128], index: 6, kind: output, shape index: {}]
  %s7 = sld [smem:[#allocation0]]
  $region58: #{tpu_custom_call.1} parent=0
    _
  %s9 = ssub.s32 1, %s7
  %s10 = scalar_select 0, %s9, %s7
  $region1: #{tpu_custom_call.1} parent=0
    #allocation2 [shape = 'u8[16384]{0}', space=vmem, size = 0x4000, scoped, tag = 'input window, operand 0, single buffered']
    #allocation3 [shape = 's32[1]{0}', space=sflag, size = 0x4, scoped, tag = 'scoped memory for tpu_custom_call.1']
    #allocation4 [shape = 's32[1]{0}', space=sflag, size = 0x4, scoped, tag = 'scoped memory for tpu_custom_call.1']
    #allocation5 [shape = 'u8[2097152]{0}', space=vmem, size = 0x200000, scoped, tag = 'input window, operand 1, single buffered']
    #allocation6 [shape = 's32[1]{0}', space=sflag, size = 0x4, scoped, tag = 'scoped memory for tpu_custom_call.1']
    #allocation7 [shape = 'u8[1048576]{0}', space=vmem, size = 0x100000, scoped, tag = 'input window, operand 2, single buffered']
    #allocation8 [shape = 'u8[262144]{0}', space=vmem, size = 0x40000, scoped, tag = 'input window, operand 3, single buffered']
    #allocation9 [shape = 's32[1]{0}', space=sflag, size = 0x4, scoped, tag = 'scoped memory for tpu_custom_call.1']
    #allocation10 [shape = 'u8[65536]{0}', space=vmem, size = 0x10000, scoped, tag = 'input window, operand 4, single buffered']
    #allocation11 [shape = 'u8[32768]{0}', space=vmem, size = 0x8000, scoped, tag = 'input window, operand 5, single buffered']
    #allocation12 [shape = 's32[1]{0}', space=sflag, size = 0x4, scoped, tag = 'scoped memory for tpu_custom_call.1']
    #allocation13 [shape = 'u8[4096]{0}', space=vmem, size = 0x1000, scoped, tag = 'output window, operand 0, single buffered']
    %11 = vsyncpa [#allocation3], 0
    %12 = vsyncpa [#allocation6], 0
    %13 = vsyncpa [#allocation9], 0
    %14 = vsyncpa [#allocation12], 0
    %15 = vsyncpa [#allocation4], 0
    // Predicated region
    $region2: #{tpu_custom_call.1} parent=1 // pred_check
      _
    $region3: #{tpu_custom_call.1} parent=1 // pred_check_branch
      %17 = sbr.rel (0) target = $region5
    $region4: #{tpu_custom_call.1} parent=1 // pred_region
      %s19 = ssub.s32 512, 512
      %20 = vsyncadd [#allocation3], %s19
      %s22 = sshll.u32 [#allocation2], 4
      %s23 = int_to_ptr.vmem [resolvable:$true] %s22
      %25 = dma.hbm_to_vmem [thread:$0]  %s0, 512, %s23, [#allocation3]
    $region5: #{tpu_custom_call.1} parent=1 // pred_fallthru
      _
    // Predicated region
    $region6: #{tpu_custom_call.1} parent=1 // pred_check
      _
    $region7: #{tpu_custom_call.1} parent=1 // pred_check_branch
      %27 = sbr.rel (0) target = $region9
    $region8: #{tpu_custom_call.1} parent=1 // pred_region
      %s29 = ssub.s32 65536, 65536
      %30 = vsyncadd [#allocation6], %s29
      %s31 = sshll.u32 [#allocation5], 4
      %s32 = int_to_ptr.vmem [resolvable:$true] %s31
      %37 = dma.hbm_to_vmem [thread:$0]  %s1, 65536, %s32, [#allocation6], 512, 512, 32
    $region9: #{tpu_custom_call.1} parent=1 // pred_fallthru
      _
    // Predicated region
    $region10: #{tpu_custom_call.1} parent=1 // pred_check
      _
    $region11: #{tpu_custom_call.1} parent=1 // pred_check_branch
      %39 = sbr.rel (0) target = $region13
    $region12: #{tpu_custom_call.1} parent=1 // pred_region
      %s41 = ssub.s32 32768, 32768
      %42 = vsyncadd [#allocation6], %s41
      %s43 = sshll.u32 [#allocation7], 4
      %s44 = int_to_ptr.vmem [resolvable:$true] %s43
      %49 = dma.hbm_to_vmem [thread:$0]  %s2, 32768, %s44, [#allocation6], 256, 256, 16
    $region13: #{tpu_custom_call.1} parent=1 // pred_fallthru
      _
    // Predicated region
    $region14: #{tpu_custom_call.1} parent=1 // pred_check
      _
    $region15: #{tpu_custom_call.1} parent=1 // pred_check_branch
      %51 = sbr.rel (0) target = $region17
    $region16: #{tpu_custom_call.1} parent=1 // pred_region
      %s53 = ssub.s32 8192, 8192
      %54 = vsyncadd [#allocation9], %s53
      %s55 = sshll.u32 [#allocation8], 4
      %s56 = int_to_ptr.vmem [resolvable:$true] %s55
      %61 = dma.hbm_to_vmem [thread:$0]  %s3, 8192, %s56, [#allocation9], 128, 128, 8
    $region17: #{tpu_custom_call.1} parent=1 // pred_fallthru
      _
    // Predicated region
    $region18: #{tpu_custom_call.1} parent=1 // pred_check
      _
    $region19: #{tpu_custom_call.1} parent=1 // pred_check_branch
      %63 = sbr.rel (0) target = $region21
    $region20: #{tpu_custom_call.1} parent=1 // pred_region
      %s65 = ssub.s32 2048, 2048
      %66 = vsyncadd [#allocation9], %s65
      %s67 = sshll.u32 [#allocation10], 4
      %s68 = int_to_ptr.vmem [resolvable:$true] %s67
      %73 = dma.hbm_to_vmem [thread:$0]  %s4, 2048, %s68, [#allocation9], 64, 64, 4
    $region21: #{tpu_custom_call.1} parent=1 // pred_fallthru
      _
    // Predicated region
    $region22: #{tpu_custom_call.1} parent=1 // pred_check
      _
    $region23: #{tpu_custom_call.1} parent=1 // pred_check_branch
      %75 = sbr.rel (0) target = $region25
    $region24: #{tpu_custom_call.1} parent=1 // pred_region
      %s77 = ssub.s32 1024, 1024
      %78 = vsyncadd [#allocation12], %s77
      %s79 = sshll.u32 [#allocation11], 4
      %s80 = int_to_ptr.vmem [resolvable:$true] %s79
      %85 = dma.hbm_to_vmem [thread:$0]  %s5, 1024, %s80, [#allocation12], 64, 64, 4
    $region25: #{tpu_custom_call.1} parent=1 // pred_fallthru
      _
    // Predicated region
    $region26: #{tpu_custom_call.1} parent=1 // pred_check
      _
    $region27: #{tpu_custom_call.1} parent=1 // pred_check_branch
      %87 = sbr.rel (0) target = $region29
    $region28: #{tpu_custom_call.1} parent=1 // pred_region
      %88 = dma.done [#allocation3], 512
    $region29: #{tpu_custom_call.1} parent=1 // pred_fallthru
      _
    // Predicated region
    $region30: #{tpu_custom_call.1} parent=1 // pred_check
      _
    $region31: #{tpu_custom_call.1} parent=1 // pred_check_branch
      %90 = sbr.rel (0) target = $region33
    $region32: #{tpu_custom_call.1} parent=1 // pred_region
      %91 = dma.done [#allocation6], 65536
    $region33: #{tpu_custom_call.1} parent=1 // pred_fallthru
      _
    // Predicated region
    $region34: #{tpu_custom_call.1} parent=1 // pred_check
      _
    $region35: #{tpu_custom_call.1} parent=1 // pred_check_branch
      %93 = sbr.rel (0) target = $region37
    $region36: #{tpu_custom_call.1} parent=1 // pred_region
      %94 = dma.done [#allocation6], 32768
    $region37: #{tpu_custom_call.1} parent=1 // pred_fallthru
      _
    // Predicated region
    $region38: #{tpu_custom_call.1} parent=1 // pred_check
      _
    $region39: #{tpu_custom_call.1} parent=1 // pred_check_branch
      %96 = sbr.rel (0) target = $region41
    $region40: #{tpu_custom_call.1} parent=1 // pred_region
      %97 = dma.done [#allocation9], 8192
    $region41: #{tpu_custom_call.1} parent=1 // pred_fallthru
      _
    // Predicated region
    $region42: #{tpu_custom_call.1} parent=1 // pred_check
      _
    $region43: #{tpu_custom_call.1} parent=1 // pred_check_branch
      %99 = sbr.rel (0) target = $region45
    $region44: #{tpu_custom_call.1} parent=1 // pred_region
      %100 = dma.done [#allocation9], 2048
    $region45: #{tpu_custom_call.1} parent=1 // pred_fallthru
      _
    // Predicated region
    $region46: #{tpu_custom_call.1} parent=1 // pred_check
      _
    $region47: #{tpu_custom_call.1} parent=1 // pred_check_branch
      %102 = sbr.rel (0) target = $region49
    $region48: #{tpu_custom_call.1} parent=1 // pred_region
      %103 = dma.done [#allocation12], 1024
    $region49: #{tpu_custom_call.1} parent=1 // pred_fallthru
      _
    %v105 = vld [vmem:[#allocation2] sm:$0xff]
    %v106 = vld [vmem:[#allocation2 + $0x8] sm:$0xff]
    %v107 = vld [vmem:[#allocation2 + $0x10] sm:$0xff]
    %v108 = vld [vmem:[#allocation2 + $0x18] sm:$0xff]
    %v109 = vld [vmem:[#allocation5] sm:$0xff]
    %v110 = vld [vmem:[#allocation5 + $0x8] sm:$0xff]
    %v111 = vld [vmem:[#allocation5 + $0x10] sm:$0xff]
    %v112 = vld [vmem:[#allocation5 + $0x18] sm:$0xff]
    %v113 = vld [vmem:[#allocation5 + $0x20] sm:$0xff]
    %v114 = vld [vmem:[#allocation5 + $0x28] sm:$0xff]
    %v115 = vld [vmem:[#allocation5 + $0x30] sm:$0xff]
    %v116 = vld [vmem:[#allocation5 + $0x38] sm:$0xff]
    %v117 = vld [vmem:[#allocation5 + $0x40] sm:$0xff]
    %v118 = vld [vmem:[#allocation5 + $0x48] sm:$0xff]
    %v119 = vld [vmem:[#allocation5 + $0x50] sm:$0xff]
    %v120 = vld [vmem:[#allocation5 + $0x58] sm:$0xff]
    %v121 = vld [vmem:[#allocation5 + $0x60] sm:$0xff]
    %v122 = vld [vmem:[#allocation5 + $0x68] sm:$0xff]
    %v123 = vld [vmem:[#allocation5 + $0x70] sm:$0xff]
    %v124 = vld [vmem:[#allocation5 + $0x78] sm:$0xff]
    %v125 = vld [vmem:[#allocation5 + $0x80] sm:$0xff]
    %v126 = vld [vmem:[#allocation5 + $0x88] sm:$0xff]
    %v127 = vld [vmem:[#allocation5 + $0x90] sm:$0xff]
    %v128 = vld [vmem:[#allocation5 + $0x98] sm:$0xff]
    %v129 = vld [vmem:[#allocation5 + $0xa0] sm:$0xff]
    %v130 = vld [vmem:[#allocation5 + $0xa8] sm:$0xff]
    %v131 = vld [vmem:[#allocation5 + $0xb0] sm:$0xff]
    %v132 = vld [vmem:[#allocation5 + $0xb8] sm:$0xff]
    %v133 = vld [vmem:[#allocation5 + $0xc0] sm:$0xff]
    %v134 = vld [vmem:[#allocation5 + $0xc8] sm:$0xff]
    %v135 = vld [vmem:[#allocation5 + $0xd0] sm:$0xff]
    %v136 = vld [vmem:[#allocation5 + $0xd8] sm:$0xff]
    %v137 = vld [vmem:[#allocation5 + $0xe0] sm:$0xff]
    %v138 = vld [vmem:[#allocation5 + $0xe8] sm:$0xff]
    %v139 = vld [vmem:[#allocation5 + $0xf0] sm:$0xff]
    %v140 = vld [vmem:[#allocation5 + $0xf8] sm:$0xff]
    %v141 = vld [vmem:[#allocation5 + $0x100] sm:$0xff]
    %v142 = vld [vmem:[#allocation5 + $0x108] sm:$0xff]
    %v143 = vld [vmem:[#allocation5 + $0x110] sm:$0xff]
    %v144 = vld [vmem:[#allocation5 + $0x118] sm:$0xff]
    %v145 = vld [vmem:[#allocation5 + $0x120] sm:$0xff]
    %v146 = vld [vmem:[#allocation5 + $0x128] sm:$0xff]
    %v147 = vld [vmem:[#allocation5 + $0x130] sm:$0xff]
    %v148 = vld [vmem:[#allocation5 + $0x138] sm:$0xff]
    %v149 = vld [vmem:[#allocation5 + $0x140] sm:$0xff]
    %v150 = vld [vmem:[#allocation5 + $0x148] sm:$0xff]
    %v151 = vld [vmem:[#allocation5 + $0x150] sm:$0xff]
    %v152 = vld [vmem:[#allocation5 + $0x158] sm:$0xff]
    %v153 = vld [vmem:[#allocation5 + $0x160] sm:$0xff]
    %v154 = vld [vmem:[#allocation5 + $0x168] sm:$0xff]
    %v155 = vld [vmem:[#allocation5 + $0x170] sm:$0xff]
    %v156 = vld [vmem:[#allocation5 + $0x178] sm:$0xff]
    %v157 = vld [vmem:[#allocation5 + $0x180] sm:$0xff]
    %v158 = vld [vmem:[#allocation5 + $0x188] sm:$0xff]
    %v159 = vld [vmem:[#allocation5 + $0x190] sm:$0xff]
    %v160 = vld [vmem:[#allocation5 + $0x198] sm:$0xff]
    %v161 = vld [vmem:[#allocation5 + $0x1a0] sm:$0xff]
    %v162 = vld [vmem:[#allocation5 + $0x1a8] sm:$0xff]
    %v163 = vld [vmem:[#allocation5 + $0x1b0] sm:$0xff]
    %v164 = vld [vmem:[#allocation5 + $0x1b8] sm:$0xff]
    %v165 = vld [vmem:[#allocation5 + $0x1c0] sm:$0xff]
    %v166 = vld [vmem:[#allocation5 + $0x1c8] sm:$0xff]
    %v167 = vld [vmem:[#allocation5 + $0x1d0] sm:$0xff]
    %v168 = vld [vmem:[#allocation5 + $0x1d8] sm:$0xff]
    %v169 = vld [vmem:[#allocation5 + $0x1e0] sm:$0xff]
    %v170 = vld [vmem:[#allocation5 + $0x1e8] sm:$0xff]
    %v171 = vld [vmem:[#allocation5 + $0x1f0] sm:$0xff]
    %v172 = vld [vmem:[#allocation5 + $0x1f8] sm:$0xff]
    %v173 = vld [vmem:[#allocation5 + $0x200] sm:$0xff]
    %v174 = vld [vmem:[#allocation5 + $0x208] sm:$0xff]
    %v175 = vld [vmem:[#allocation5 + $0x210] sm:$0xff]
    %v176 = vld [vmem:[#allocation5 + $0x218] sm:$0xff]
    %v177 = vld [vmem:[#allocation5 + $0x220] sm:$0xff]
    %v178 = vld [vmem:[#allocation5 + $0x228] sm:$0xff]
    %v179 = vld [vmem:[#allocation5 + $0x230] sm:$0xff]
    %v180 = vld [vmem:[#allocation5 + $0x238] sm:$0xff]
    %v181 = vld [vmem:[#allocation5 + $0x240] sm:$0xff]
    %v182 = vld [vmem:[#allocation5 + $0x248] sm:$0xff]
    %v183 = vld [vmem:[#allocation5 + $0x250] sm:$0xff]
    %v184 = vld [vmem:[#allocation5 + $0x258] sm:$0xff]
    %v185 = vld [vmem:[#allocation5 + $0x260] sm:$0xff]
    %v186 = vld [vmem:[#allocation5 + $0x268] sm:$0xff]
    %v187 = vld [vmem:[#allocation5 + $0x270] sm:$0xff]
    %v188 = vld [vmem:[#allocation5 + $0x278] sm:$0xff]
    %v189 = vld [vmem:[#allocation5 + $0x280] sm:$0xff]
    %v190 = vld [vmem:[#allocation5 + $0x288] sm:$0xff]
    %v191 = vld [vmem:[#allocation5 + $0x290] sm:$0xff]
    %v192 = vld [vmem:[#allocation5 + $0x298] sm:$0xff]
    %v193 = vld [vmem:[#allocation5 + $0x2a0] sm:$0xff]
    %v194 = vld [vmem:[#allocation5 + $0x2a8] sm:$0xff]
    %v195 = vld [vmem:[#allocation5 + $0x2b0] sm:$0xff]
    %v196 = vld [vmem:[#allocation5 + $0x2b8] sm:$0xff]
    %v197 = vld [vmem:[#allocation5 + $0x2c0] sm:$0xff]
    %v198 = vld [vmem:[#allocation5 + $0x2c8] sm:$0xff]
    %v199 = vld [vmem:[#allocation5 + $0x2d0] sm:$0xff]
    %v200 = vld [vmem:[#allocation5 + $0x2d8] sm:$0xff]
    %v201 = vld [vmem:[#allocation5 + $0x2e0] sm:$0xff]
    %v202 = vld [vmem:[#allocation5 + $0x2e8] sm:$0xff]
    %v203 = vld [vmem:[#allocation5 + $0x2f0] sm:$0xff]
    %v204 = vld [vmem:[#allocation5 + $0x2f8] sm:$0xff]
    %v205 = vld [vmem:[#allocation5 + $0x300] sm:$0xff]
    %v206 = vld [vmem:[#allocation5 + $0x308] sm:$0xff]
    %v207 = vld [vmem:[#allocation5 + $0x310] sm:$0xff]
    %v208 = vld [vmem:[#allocation5 + $0x318] sm:$0xff]
    %v209 = vld [vmem:[#allocation5 + $0x320] sm:$0xff]
    %v210 = vld [vmem:[#allocation5 + $0x328] sm:$0xff]
    %v211 = vld [vmem:[#allocation5 + $0x330] sm:$0xff]
    %v212 = vld [vmem:[#allocation5 + $0x338] sm:$0xff]
    %v213 = vld [vmem:[#allocation5 + $0x340] sm:$0xff]
    %v214 = vld [vmem:[#allocation5 + $0x348] sm:$0xff]
    %v215 = vld [vmem:[#allocation5 + $0x350] sm:$0xff]
    %v216 = vld [vmem:[#allocation5 + $0x358] sm:$0xff]
    %v217 = vld [vmem:[#allocation5 + $0x360] sm:$0xff]
    %v218 = vld [vmem:[#allocation5 + $0x368] sm:$0xff]
    %v219 = vld [vmem:[#allocation5 + $0x370] sm:$0xff]
    %v220 = vld [vmem:[#allocation5 + $0x378] sm:$0xff]
    %v221 = vld [vmem:[#allocation5 + $0x380] sm:$0xff]
    %v222 = vld [vmem:[#allocation5 + $0x388] sm:$0xff]
    %v223 = vld [vmem:[#allocation5 + $0x390] sm:$0xff]
    %v224 = vld [vmem:[#allocation5 + $0x398] sm:$0xff]
    %v225 = vld [vmem:[#allocation5 + $0x3a0] sm:$0xff]
    %v226 = vld [vmem:[#allocation5 + $0x3a8] sm:$0xff]
    %v227 = vld [vmem:[#allocation5 + $0x3b0] sm:$0xff]
    %v228 = vld [vmem:[#allocation5 + $0x3b8] sm:$0xff]
    %v229 = vld [vmem:[#allocation5 + $0x3c0] sm:$0xff]
    %v230 = vld [vmem:[#allocation5 + $0x3c8] sm:$0xff]
    %v231 = vld [vmem:[#allocation5 + $0x3d0] sm:$0xff]
    %v232 = vld [vmem:[#allocation5 + $0x3d8] sm:$0xff]
    %v233 = vld [vmem:[#allocation5 + $0x3e0] sm:$0xff]
    %v234 = vld [vmem:[#allocation5 + $0x3e8] sm:$0xff]
    %v235 = vld [vmem:[#allocation5 + $0x3f0] sm:$0xff]
    %v236 = vld [vmem:[#allocation5 + $0x3f8] sm:$0xff]
    %v237 = vld [vmem:[#allocation5 + $0x400] sm:$0xff]
    %v238 = vld [vmem:[#allocation5 + $0x408] sm:$0xff]
    %v239 = vld [vmem:[#allocation5 + $0x410] sm:$0xff]
    %v240 = vld [vmem:[#allocation5 + $0x418] sm:$0xff]
    %v241 = vld [vmem:[#allocation5 + $0x420] sm:$0xff]
    %v242 = vld [vmem:[#allocation5 + $0x428] sm:$0xff]
    %v243 = vld [vmem:[#allocation5 + $0x430] sm:$0xff]
    %v244 = vld [vmem:[#allocation5 + $0x438] sm:$0xff]
    %v245 = vld [vmem:[#allocation5 + $0x440] sm:$0xff]
    %v246 = vld [vmem:[#allocation5 + $0x448] sm:$0xff]
    %v247 = vld [vmem:[#allocation5 + $0x450] sm:$0xff]
    %v248 = vld [vmem:[#allocation5 + $0x458] sm:$0xff]
    %v249 = vld [vmem:[#allocation5 + $0x460] sm:$0xff]
    %v250 = vld [vmem:[#allocation5 + $0x468] sm:$0xff]
    %v251 = vld [vmem:[#allocation5 + $0x470] sm:$0xff]
    %v252 = vld [vmem:[#allocation5 + $0x478] sm:$0xff]
    %v253 = vld [vmem:[#allocation5 + $0x480] sm:$0xff]
    %v254 = vld [vmem:[#allocation5 + $0x488] sm:$0xff]
    %v255 = vld [vmem:[#allocation5 + $0x490] sm:$0xff]
    %v256 = vld [vmem:[#allocation5 + $0x498] sm:$0xff]
    %v257 = vld [vmem:[#allocation5 + $0x4a0] sm:$0xff]
    %v258 = vld [vmem:[#allocation5 + $0x4a8] sm:$0xff]
    %v259 = vld [vmem:[#allocation5 + $0x4b0] sm:$0xff]
    %v260 = vld [vmem:[#allocation5 + $0x4b8] sm:$0xff]
    %v261 = vld [vmem:[#allocation5 + $0x4c0] sm:$0xff]
    %v262 = vld [vmem:[#allocation5 + $0x4c8] sm:$0xff]
    %v263 = vld [vmem:[#allocation5 + $0x4d0] sm:$0xff]
    %v264 = vld [vmem:[#allocation5 + $0x4d8] sm:$0xff]
    %v265 = vld [vmem:[#allocation5 + $0x4e0] sm:$0xff]
    %v266 = vld [vmem:[#allocation5 + $0x4e8] sm:$0xff]
    %v267 = vld [vmem:[#allocation5 + $0x4f0] sm:$0xff]
    %v268 = vld [vmem:[#allocation5 + $0x4f8] sm:$0xff]
    %v269 = vld [vmem:[#allocation5 + $0x500] sm:$0xff]
    %v270 = vld [vmem:[#allocation5 + $0x508] sm:$0xff]
    %v271 = vld [vmem:[#allocation5 + $0x510] sm:$0xff]
    %v272 = vld [vmem:[#allocation5 + $0x518] sm:$0xff]
    %v273 = vld [vmem:[#allocation5 + $0x520] sm:$0xff]
    %v274 = vld [vmem:[#allocation5 + $0x528] sm:$0xff]
    %v275 = vld [vmem:[#allocation5 + $0x530] sm:$0xff]
    %v276 = vld [vmem:[#allocation5 + $0x538] sm:$0xff]
    %v277 = vld [vmem:[#allocation5 + $0x540] sm:$0xff]
    %v278 = vld [vmem:[#allocation5 + $0x548] sm:$0xff]
    %v279 = vld [vmem:[#allocation5 + $0x550] sm:$0xff]
    %v280 = vld [vmem:[#allocation5 + $0x558] sm:$0xff]
    %v281 = vld [vmem:[#allocation5 + $0x560] sm:$0xff]
    %v282 = vld [vmem:[#allocation5 + $0x568] sm:$0xff]
    %v283 = vld [vmem:[#allocation5 + $0x570] sm:$0xff]
    %v284 = vld [vmem:[#allocation5 + $0x578] sm:$0xff]
    %v285 = vld [vmem:[#allocation5 + $0x580] sm:$0xff]
    %v286 = vld [vmem:[#allocation5 + $0x588] sm:$0xff]
    %v287 = vld [vmem:[#allocation5 + $0x590] sm:$0xff]
    %v288 = vld [vmem:[#allocation5 + $0x598] sm:$0xff]
    %v289 = vld [vmem:[#allocation5 + $0x5a0] sm:$0xff]
    %v290 = vld [vmem:[#allocation5 + $0x5a8] sm:$0xff]
    %v291 = vld [vmem:[#allocation5 + $0x5b0] sm:$0xff]
    %v292 = vld [vmem:[#allocation5 + $0x5b8] sm:$0xff]
    %v293 = vld [vmem:[#allocation5 + $0x5c0] sm:$0xff]
    %v294 = vld [vmem:[#allocation5 + $0x5c8] sm:$0xff]
    %v295 = vld [vmem:[#allocation5 + $0x5d0] sm:$0xff]
    %v296 = vld [vmem:[#allocation5 + $0x5d8] sm:$0xff]
    %v297 = vld [vmem:[#allocation5 + $0x5e0] sm:$0xff]
    %v298 = vld [vmem:[#allocation5 + $0x5e8] sm:$0xff]
    %v299 = vld [vmem:[#allocation5 + $0x5f0] sm:$0xff]
    %v300 = vld [vmem:[#allocation5 + $0x5f8] sm:$0xff]
    %v301 = vld [vmem:[#allocation5 + $0x600] sm:$0xff]
    %v302 = vld [vmem:[#allocation5 + $0x608] sm:$0xff]
    %v303 = vld [vmem:[#allocation5 + $0x610] sm:$0xff]
    %v304 = vld [vmem:[#allocation5 + $0x618] sm:$0xff]
    %v305 = vld [vmem:[#allocation5 + $0x620] sm:$0xff]
    %v306 = vld [vmem:[#allocation5 + $0x628] sm:$0xff]
    %v307 = vld [vmem:[#allocation5 + $0x630] sm:$0xff]
    %v308 = vld [vmem:[#allocation5 + $0x638] sm:$0xff]
    %v309 = vld [vmem:[#allocation5 + $0x640] sm:$0xff]
    %v310 = vld [vmem:[#allocation5 + $0x648] sm:$0xff]
    %v311 = vld [vmem:[#allocation5 + $0x650] sm:$0xff]
    %v312 = vld [vmem:[#allocation5 + $0x658] sm:$0xff]
    %v313 = vld [vmem:[#allocation5 + $0x660] sm:$0xff]
    %v314 = vld [vmem:[#allocation5 + $0x668] sm:$0xff]
    %v315 = vld [vmem:[#allocation5 + $0x670] sm:$0xff]
    %v316 = vld [vmem:[#allocation5 + $0x678] sm:$0xff]
    %v317 = vld [vmem:[#allocation5 + $0x680] sm:$0xff]
    %v318 = vld [vmem:[#allocation5 + $0x688] sm:$0xff]
    %v319 = vld [vmem:[#allocation5 + $0x690] sm:$0xff]
    %v320 = vld [vmem:[#allocation5 + $0x698] sm:$0xff]
    %v321 = vld [vmem:[#allocation5 + $0x6a0] sm:$0xff]
    %v322 = vld [vmem:[#allocation5 + $0x6a8] sm:$0xff]
    %v323 = vld [vmem:[#allocation5 + $0x6b0] sm:$0xff]
    %v324 = vld [vmem:[#allocation5 + $0x6b8] sm:$0xff]
    %v325 = vld [vmem:[#allocation5 + $0x6c0] sm:$0xff]
    %v326 = vld [vmem:[#allocation5 + $0x6c8] sm:$0xff]
    %v327 = vld [vmem:[#allocation5 + $0x6d0] sm:$0xff]
    %v328 = vld [vmem:[#allocation5 + $0x6d8] sm:$0xff]
    %v329 = vld [vmem:[#allocation5 + $0x6e0] sm:$0xff]
    %v330 = vld [vmem:[#allocation5 + $0x6e8] sm:$0xff]
    %v331 = vld [vmem:[#allocation5 + $0x6f0] sm:$0xff]
    %v332 = vld [vmem:[#allocation5 + $0x6f8] sm:$0xff]
    %v333 = vld [vmem:[#allocation5 + $0x700] sm:$0xff]
    %v334 = vld [vmem:[#allocation5 + $0x708] sm:$0xff]
    %v335 = vld [vmem:[#allocation5 + $0x710] sm:$0xff]
    %v336 = vld [vmem:[#allocation5 + $0x718] sm:$0xff]
    %v337 = vld [vmem:[#allocation5 + $0x720] sm:$0xff]
    %v338 = vld [vmem:[#allocation5 + $0x728] sm:$0xff]
    %v339 = vld [vmem:[#allocation5 + $0x730] sm:$0xff]
    %v340 = vld [vmem:[#allocation5 + $0x738] sm:$0xff]
    %v341 = vld [vmem:[#allocation5 + $0x740] sm:$0xff]
    %v342 = vld [vmem:[#allocation5 + $0x748] sm:$0xff]
    %v343 = vld [vmem:[#allocation5 + $0x750] sm:$0xff]
    %v344 = vld [vmem:[#allocation5 + $0x758] sm:$0xff]
    %v345 = vld [vmem:[#allocation5 + $0x760] sm:$0xff]
    %v346 = vld [vmem:[#allocation5 + $0x768] sm:$0xff]
    %v347 = vld [vmem:[#allocation5 + $0x770] sm:$0xff]
    %v348 = vld [vmem:[#allocation5 + $0x778] sm:$0xff]
    %v349 = vld [vmem:[#allocation5 + $0x780] sm:$0xff]
    %v350 = vld [vmem:[#allocation5 + $0x788] sm:$0xff]
    %v351 = vld [vmem:[#allocation5 + $0x790] sm:$0xff]
    %v352 = vld [vmem:[#allocation5 + $0x798] sm:$0xff]
    %v353 = vld [vmem:[#allocation5 + $0x7a0] sm:$0xff]
    %v354 = vld [vmem:[#allocation5 + $0x7a8] sm:$0xff]
    %v355 = vld [vmem:[#allocation5 + $0x7b0] sm:$0xff]
    %v356 = vld [vmem:[#allocation5 + $0x7b8] sm:$0xff]
    %v357 = vld [vmem:[#allocation5 + $0x7c0] sm:$0xff]
    %v358 = vld [vmem:[#allocation5 + $0x7c8] sm:$0xff]
    %v359 = vld [vmem:[#allocation5 + $0x7d0] sm:$0xff]
    %v360 = vld [vmem:[#allocation5 + $0x7d8] sm:$0xff]
    %v361 = vld [vmem:[#allocation5 + $0x7e0] sm:$0xff]
    %v362 = vld [vmem:[#allocation5 + $0x7e8] sm:$0xff]
    %v363 = vld [vmem:[#allocation5 + $0x7f0] sm:$0xff]
    %v364 = vld [vmem:[#allocation5 + $0x7f8] sm:$0xff]
    %v365 = vld [vmem:[#allocation5 + $0x800] sm:$0xff]
    %v366 = vld [vmem:[#allocation5 + $0x808] sm:$0xff]
    %v367 = vld [vmem:[#allocation5 + $0x810] sm:$0xff]
    %v368 = vld [vmem:[#allocation5 + $0x818] sm:$0xff]
    %v369 = vld [vmem:[#allocation5 + $0x820] sm:$0xff]
    %v370 = vld [vmem:[#allocation5 + $0x828] sm:$0xff]
    %v371 = vld [vmem:[#allocation5 + $0x830] sm:$0xff]
    %v372 = vld [vmem:[#allocation5 + $0x838] sm:$0xff]
    %v373 = vld [vmem:[#allocation5 + $0x840] sm:$0xff]
    %v374 = vld [vmem:[#allocation5 + $0x848] sm:$0xff]
    %v375 = vld [vmem:[#allocation5 + $0x850] sm:$0xff]
    %v376 = vld [vmem:[#allocation5 + $0x858] sm:$0xff]
    %v377 = vld [vmem:[#allocation5 + $0x860] sm:$0xff]
    %v378 = vld [vmem:[#allocation5 + $0x868] sm:$0xff]
    %v379 = vld [vmem:[#allocation5 + $0x870] sm:$0xff]
    %v380 = vld [vmem:[#allocation5 + $0x878] sm:$0xff]
    %v381 = vld [vmem:[#allocation5 + $0x880] sm:$0xff]
    %v382 = vld [vmem:[#allocation5 + $0x888] sm:$0xff]
    %v383 = vld [vmem:[#allocation5 + $0x890] sm:$0xff]
    %v384 = vld [vmem:[#allocation5 + $0x898] sm:$0xff]
    %v385 = vld [vmem:[#allocation5 + $0x8a0] sm:$0xff]
    %v386 = vld [vmem:[#allocation5 + $0x8a8] sm:$0xff]
    %v387 = vld [vmem:[#allocation5 + $0x8b0] sm:$0xff]
    %v388 = vld [vmem:[#allocation5 + $0x8b8] sm:$0xff]
    %v389 = vld [vmem:[#allocation5 + $0x8c0] sm:$0xff]
    %v390 = vld [vmem:[#allocation5 + $0x8c8] sm:$0xff]
    %v391 = vld [vmem:[#allocation5 + $0x8d0] sm:$0xff]
    %v392 = vld [vmem:[#allocation5 + $0x8d8] sm:$0xff]
    %v393 = vld [vmem:[#allocation5 + $0x8e0] sm:$0xff]
    %v394 = vld [vmem:[#allocation5 + $0x8e8] sm:$0xff]
    %v395 = vld [vmem:[#allocation5 + $0x8f0] sm:$0xff]
    %v396 = vld [vmem:[#allocation5 + $0x8f8] sm:$0xff]
    %v397 = vld [vmem:[#allocation5 + $0x900] sm:$0xff]
    %v398 = vld [vmem:[#allocation5 + $0x908] sm:$0xff]
    %v399 = vld [vmem:[#allocation5 + $0x910] sm:$0xff]
    %v400 = vld [vmem:[#allocation5 + $0x918] sm:$0xff]
    %v401 = vld [vmem:[#allocation5 + $0x920] sm:$0xff]
    %v402 = vld [vmem:[#allocation5 + $0x928] sm:$0xff]
    %v403 = vld [vmem:[#allocation5 + $0x930] sm:$0xff]
    %v404 = vld [vmem:[#allocation5 + $0x938] sm:$0xff]
    %v405 = vld [vmem:[#allocation5 + $0x940] sm:$0xff]
    %v406 = vld [vmem:[#allocation5 + $0x948] sm:$0xff]
    %v407 = vld [vmem:[#allocation5 + $0x950] sm:$0xff]
    %v408 = vld [vmem:[#allocation5 + $0x958] sm:$0xff]
    %v409 = vld [vmem:[#allocation5 + $0x960] sm:$0xff]
    %v410 = vld [vmem:[#allocation5 + $0x968] sm:$0xff]
    %v411 = vld [vmem:[#allocation5 + $0x970] sm:$0xff]
    %v412 = vld [vmem:[#allocation5 + $0x978] sm:$0xff]
    %v413 = vld [vmem:[#allocation5 + $0x980] sm:$0xff]
    %v414 = vld [vmem:[#allocation5 + $0x988] sm:$0xff]
    %v415 = vld [vmem:[#allocation5 + $0x990] sm:$0xff]
    %v416 = vld [vmem:[#allocation5 + $0x998] sm:$0xff]
    %v417 = vld [vmem:[#allocation5 + $0x9a0] sm:$0xff]
    %v418 = vld [vmem:[#allocation5 + $0x9a8] sm:$0xff]
    %v419 = vld [vmem:[#allocation5 + $0x9b0] sm:$0xff]
    %v420 = vld [vmem:[#allocation5 + $0x9b8] sm:$0xff]
    %v421 = vld [vmem:[#allocation5 + $0x9c0] sm:$0xff]
    %v422 = vld [vmem:[#allocation5 + $0x9c8] sm:$0xff]
    %v423 = vld [vmem:[#allocation5 + $0x9d0] sm:$0xff]
    %v424 = vld [vmem:[#allocation5 + $0x9d8] sm:$0xff]
    %v425 = vld [vmem:[#allocation5 + $0x9e0] sm:$0xff]
    %v426 = vld [vmem:[#allocation5 + $0x9e8] sm:$0xff]
    %v427 = vld [vmem:[#allocation5 + $0x9f0] sm:$0xff]
    %v428 = vld [vmem:[#allocation5 + $0x9f8] sm:$0xff]
    %v429 = vld [vmem:[#allocation5 + $0xa00] sm:$0xff]
    %v430 = vld [vmem:[#allocation5 + $0xa08] sm:$0xff]
    %v431 = vld [vmem:[#allocation5 + $0xa10] sm:$0xff]
    %v432 = vld [vmem:[#allocation5 + $0xa18] sm:$0xff]
    %v433 = vld [vmem:[#allocation5 + $0xa20] sm:$0xff]
    %v434 = vld [vmem:[#allocation5 + $0xa28] sm:$0xff]
    %v435 = vld [vmem:[#allocation5 + $0xa30] sm:$0xff]
    %v436 = vld [vmem:[#allocation5 + $0xa38] sm:$0xff]
    %v437 = vld [vmem:[#allocation5 + $0xa40] sm:$0xff]
    %v438 = vld [vmem:[#allocation5 + $0xa48] sm:$0xff]
    %v439 = vld [vmem:[#allocation5 + $0xa50] sm:$0xff]
    %v440 = vld [vmem:[#allocation5 + $0xa58] sm:$0xff]
    %v441 = vld [vmem:[#allocation5 + $0xa60] sm:$0xff]
    %v442 = vld [vmem:[#allocation5 + $0xa68] sm:$0xff]
    %v443 = vld [vmem:[#allocation5 + $0xa70] sm:$0xff]
    %v444 = vld [vmem:[#allocation5 + $0xa78] sm:$0xff]
    %v445 = vld [vmem:[#allocation5 + $0xa80] sm:$0xff]
    %v446 = vld [vmem:[#allocation5 + $0xa88] sm:$0xff]
    %v447 = vld [vmem:[#allocation5 + $0xa90] sm:$0xff]
    %v448 = vld [vmem:[#allocation5 + $0xa98] sm:$0xff]
    %v449 = vld [vmem:[#allocation5 + $0xaa0] sm:$0xff]
    %v450 = vld [vmem:[#allocation5 + $0xaa8] sm:$0xff]
    %v451 = vld [vmem:[#allocation5 + $0xab0] sm:$0xff]
    %v452 = vld [vmem:[#allocation5 + $0xab8] sm:$0xff]
    %v453 = vld [vmem:[#allocation5 + $0xac0] sm:$0xff]
    %v454 = vld [vmem:[#allocation5 + $0xac8] sm:$0xff]
    %v455 = vld [vmem:[#allocation5 + $0xad0] sm:$0xff]
    %v456 = vld [vmem:[#allocation5 + $0xad8] sm:$0xff]
    %v457 = vld [vmem:[#allocation5 + $0xae0] sm:$0xff]
    %v458 = vld [vmem:[#allocation5 + $0xae8] sm:$0xff]
    %v459 = vld [vmem:[#allocation5 + $0xaf0] sm:$0xff]
    %v460 = vld [vmem:[#allocation5 + $0xaf8] sm:$0xff]
    %v461 = vld [vmem:[#allocation5 + $0xb00] sm:$0xff]
    %v462 = vld [vmem:[#allocation5 + $0xb08] sm:$0xff]
    %v463 = vld [vmem:[#allocation5 + $0xb10] sm:$0xff]
    %v464 = vld [vmem:[#allocation5 + $0xb18] sm:$0xff]
    %v465 = vld [vmem:[#allocation5 + $0xb20] sm:$0xff]
    %v466 = vld [vmem:[#allocation5 + $0xb28] sm:$0xff]
    %v467 = vld [vmem:[#allocation5 + $0xb30] sm:$0xff]
    %v468 = vld [vmem:[#allocation5 + $0xb38] sm:$0xff]
    %v469 = vld [vmem:[#allocation5 + $0xb40] sm:$0xff]
    %v470 = vld [vmem:[#allocation5 + $0xb48] sm:$0xff]
    %v471 = vld [vmem:[#allocation5 + $0xb50] sm:$0xff]
    %v472 = vld [vmem:[#allocation5 + $0xb58] sm:$0xff]
    %v473 = vld [vmem:[#allocation5 + $0xb60] sm:$0xff]
    %v474 = vld [vmem:[#allocation5 + $0xb68] sm:$0xff]
    %v475 = vld [vmem:[#allocation5 + $0xb70] sm:$0xff]
    %v476 = vld [vmem:[#allocation5 + $0xb78] sm:$0xff]
    %v477 = vld [vmem:[#allocation5 + $0xb80] sm:$0xff]
    %v478 = vld [vmem:[#allocation5 + $0xb88] sm:$0xff]
    %v479 = vld [vmem:[#allocation5 + $0xb90] sm:$0xff]
    %v480 = vld [vmem:[#allocation5 + $0xb98] sm:$0xff]
    %v481 = vld [vmem:[#allocation5 + $0xba0] sm:$0xff]
    %v482 = vld [vmem:[#allocation5 + $0xba8] sm:$0xff]
    %v483 = vld [vmem:[#allocation5 + $0xbb0] sm:$0xff]
    %v484 = vld [vmem:[#allocation5 + $0xbb8] sm:$0xff]
    %v485 = vld [vmem:[#allocation5 + $0xbc0] sm:$0xff]
    %v486 = vld [vmem:[#allocation5 + $0xbc8] sm:$0xff]
    %v487 = vld [vmem:[#allocation5 + $0xbd0] sm:$0xff]
    %v488 = vld [vmem:[#allocation5 + $0xbd8] sm:$0xff]
    %v489 = vld [vmem:[#allocation5 + $0xbe0] sm:$0xff]
    %v490 = vld [vmem:[#allocation5 + $0xbe8] sm:$0xff]
    %v491 = vld [vmem:[#allocation5 + $0xbf0] sm:$0xff]
    %v492 = vld [vmem:[#allocation5 + $0xbf8] sm:$0xff]
    %v493 = vld [vmem:[#allocation5 + $0xc00] sm:$0xff]
    %v494 = vld [vmem:[#allocation5 + $0xc08] sm:$0xff]
    %v495 = vld [vmem:[#allocation5 + $0xc10] sm:$0xff]
    %v496 = vld [vmem:[#allocation5 + $0xc18] sm:$0xff]
    %v497 = vld [vmem:[#allocation5 + $0xc20] sm:$0xff]
    %v498 = vld [vmem:[#allocation5 + $0xc28] sm:$0xff]
    %v499 = vld [vmem:[#allocation5 + $0xc30] sm:$0xff]
    %v500 = vld [vmem:[#allocation5 + $0xc38] sm:$0xff]
    %v501 = vld [vmem:[#allocation5 + $0xc40] sm:$0xff]
    %v502 = vld [vmem:[#allocation5 + $0xc48] sm:$0xff]
    %v503 = vld [vmem:[#allocation5 + $0xc50] sm:$0xff]
    %v504 = vld [vmem:[#allocation5 + $0xc58] sm:$0xff]
    %v505 = vld [vmem:[#allocation5 + $0xc60] sm:$0xff]
    %v506 = vld [vmem:[#allocation5 + $0xc68] sm:$0xff]
    %v507 = vld [vmem:[#allocation5 + $0xc70] sm:$0xff]
    %v508 = vld [vmem:[#allocation5 + $0xc78] sm:$0xff]
    %v509 = vld [vmem:[#allocation5 + $0xc80] sm:$0xff]
    %v510 = vld [vmem:[#allocation5 + $0xc88] sm:$0xff]
    %v511 = vld [vmem:[#allocation5 + $0xc90] sm:$0xff]
    %v512 = vld [vmem:[#allocation5 + $0xc98] sm:$0xff]
    %v513 = vld [vmem:[#allocation5 + $0xca0] sm:$0xff]
    %v514 = vld [vmem:[#allocation5 + $0xca8] sm:$0xff]
    %v515 = vld [vmem:[#allocation5 + $0xcb0] sm:$0xff]
    %v516 = vld [vmem:[#allocation5 + $0xcb8] sm:$0xff]
    %v517 = vld [vmem:[#allocation5 + $0xcc0] sm:$0xff]
    %v518 = vld [vmem:[#allocation5 + $0xcc8] sm:$0xff]
    %v519 = vld [vmem:[#allocation5 + $0xcd0] sm:$0xff]
    %v520 = vld [vmem:[#allocation5 + $0xcd8] sm:$0xff]
    %v521 = vld [vmem:[#allocation5 + $0xce0] sm:$0xff]
    %v522 = vld [vmem:[#allocation5 + $0xce8] sm:$0xff]
    %v523 = vld [vmem:[#allocation5 + $0xcf0] sm:$0xff]
    %v524 = vld [vmem:[#allocation5 + $0xcf8] sm:$0xff]
    %v525 = vld [vmem:[#allocation5 + $0xd00] sm:$0xff]
    %v526 = vld [vmem:[#allocation5 + $0xd08] sm:$0xff]
    %v527 = vld [vmem:[#allocation5 + $0xd10] sm:$0xff]
    %v528 = vld [vmem:[#allocation5 + $0xd18] sm:$0xff]
    %v529 = vld [vmem:[#allocation5 + $0xd20] sm:$0xff]
    %v530 = vld [vmem:[#allocation5 + $0xd28] sm:$0xff]
    %v531 = vld [vmem:[#allocation5 + $0xd30] sm:$0xff]
    %v532 = vld [vmem:[#allocation5 + $0xd38] sm:$0xff]
    %v533 = vld [vmem:[#allocation5 + $0xd40] sm:$0xff]
    %v534 = vld [vmem:[#allocation5 + $0xd48] sm:$0xff]
    %v535 = vld [vmem:[#allocation5 + $0xd50] sm:$0xff]
    %v536 = vld [vmem:[#allocation5 + $0xd58] sm:$0xff]
    %v537 = vld [vmem:[#allocation5 + $0xd60] sm:$0xff]
    %v538 = vld [vmem:[#allocation5 + $0xd68] sm:$0xff]
    %v539 = vld [vmem:[#allocation5 + $0xd70] sm:$0xff]
    %v540 = vld [vmem:[#allocation5 + $0xd78] sm:$0xff]
    %v541 = vld [vmem:[#allocation5 + $0xd80] sm:$0xff]
    %v542 = vld [vmem:[#allocation5 + $0xd88] sm:$0xff]
    %v543 = vld [vmem:[#allocation5 + $0xd90] sm:$0xff]
    %v544 = vld [vmem:[#allocation5 + $0xd98] sm:$0xff]
    %v545 = vld [vmem:[#allocation5 + $0xda0] sm:$0xff]
    %v546 = vld [vmem:[#allocation5 + $0xda8] sm:$0xff]
    %v547 = vld [vmem:[#allocation5 + $0xdb0] sm:$0xff]
    %v548 = vld [vmem:[#allocation5 + $0xdb8] sm:$0xff]
    %v549 = vld [vmem:[#allocation5 + $0xdc0] sm:$0xff]
    %v550 = vld [vmem:[#allocation5 + $0xdc8] sm:$0xff]
    %v551 = vld [vmem:[#allocation5 + $0xdd0] sm:$0xff]
    %v552 = vld [vmem:[#allocation5 + $0xdd8] sm:$0xff]
    %v553 = vld [vmem:[#allocation5 + $0xde0] sm:$0xff]
    %v554 = vld [vmem:[#allocation5 + $0xde8] sm:$0xff]
    %v555 = vld [vmem:[#allocation5 + $0xdf0] sm:$0xff]
    %v556 = vld [vmem:[#allocation5 + $0xdf8] sm:$0xff]
    %v557 = vld [vmem:[#allocation5 + $0xe00] sm:$0xff]
    %v558 = vld [vmem:[#allocation5 + $0xe08] sm:$0xff]
    %v559 = vld [vmem:[#allocation5 + $0xe10] sm:$0xff]
    %v560 = vld [vmem:[#allocation5 + $0xe18] sm:$0xff]
    %v561 = vld [vmem:[#allocation5 + $0xe20] sm:$0xff]
    %v562 = vld [vmem:[#allocation5 + $0xe28] sm:$0xff]
    %v563 = vld [vmem:[#allocation5 + $0xe30] sm:$0xff]
    %v564 = vld [vmem:[#allocation5 + $0xe38] sm:$0xff]
    %v565 = vld [vmem:[#allocation5 + $0xe40] sm:$0xff]
    %v566 = vld [vmem:[#allocation5 + $0xe48] sm:$0xff]
    %v567 = vld [vmem:[#allocation5 + $0xe50] sm:$0xff]
    %v568 = vld [vmem:[#allocation5 + $0xe58] sm:$0xff]
    %v569 = vld [vmem:[#allocation5 + $0xe60] sm:$0xff]
    %v570 = vld [vmem:[#allocation5 + $0xe68] sm:$0xff]
    %v571 = vld [vmem:[#allocation5 + $0xe70] sm:$0xff]
    %v572 = vld [vmem:[#allocation5 + $0xe78] sm:$0xff]
    %v573 = vld [vmem:[#allocation5 + $0xe80] sm:$0xff]
    %v574 = vld [vmem:[#allocation5 + $0xe88] sm:$0xff]
    %v575 = vld [vmem:[#allocation5 + $0xe90] sm:$0xff]
    %v576 = vld [vmem:[#allocation5 + $0xe98] sm:$0xff]
    %v577 = vld [vmem:[#allocation5 + $0xea0] sm:$0xff]
    %v578 = vld [vmem:[#allocation5 + $0xea8] sm:$0xff]
    %v579 = vld [vmem:[#allocation5 + $0xeb0] sm:$0xff]
    %v580 = vld [vmem:[#allocation5 + $0xeb8] sm:$0xff]
    %v581 = vld [vmem:[#allocation5 + $0xec0] sm:$0xff]
    %v582 = vld [vmem:[#allocation5 + $0xec8] sm:$0xff]
    %v583 = vld [vmem:[#allocation5 + $0xed0] sm:$0xff]
    %v584 = vld [vmem:[#allocation5 + $0xed8] sm:$0xff]
    %v585 = vld [vmem:[#allocation5 + $0xee0] sm:$0xff]
    %v586 = vld [vmem:[#allocation5 + $0xee8] sm:$0xff]
    %v587 = vld [vmem:[#allocation5 + $0xef0] sm:$0xff]
    %v588 = vld [vmem:[#allocation5 + $0xef8] sm:$0xff]
    %v589 = vld [vmem:[#allocation5 + $0xf00] sm:$0xff]
    %v590 = vld [vmem:[#allocation5 + $0xf08] sm:$0xff]
    %v591 = vld [vmem:[#allocation5 + $0xf10] sm:$0xff]
    %v592 = vld [vmem:[#allocation5 + $0xf18] sm:$0xff]
    %v593 = vld [vmem:[#allocation5 + $0xf20] sm:$0xff]
    %v594 = vld [vmem:[#allocation5 + $0xf28] sm:$0xff]
    %v595 = vld [vmem:[#allocation5 + $0xf30] sm:$0xff]
    %v596 = vld [vmem:[#allocation5 + $0xf38] sm:$0xff]
    %v597 = vld [vmem:[#allocation5 + $0xf40] sm:$0xff]
    %v598 = vld [vmem:[#allocation5 + $0xf48] sm:$0xff]
    %v599 = vld [vmem:[#allocation5 + $0xf50] sm:$0xff]
    %v600 = vld [vmem:[#allocation5 + $0xf58] sm:$0xff]
    %v601 = vld [vmem:[#allocation5 + $0xf60] sm:$0xff]
    %v602 = vld [vmem:[#allocation5 + $0xf68] sm:$0xff]
    %v603 = vld [vmem:[#allocation5 + $0xf70] sm:$0xff]
    %v604 = vld [vmem:[#allocation5 + $0xf78] sm:$0xff]
    %v605 = vld [vmem:[#allocation5 + $0xf80] sm:$0xff]
    %v606 = vld [vmem:[#allocation5 + $0xf88] sm:$0xff]
    %v607 = vld [vmem:[#allocation5 + $0xf90] sm:$0xff]
    %v608 = vld [vmem:[#allocation5 + $0xf98] sm:$0xff]
    %v609 = vld [vmem:[#allocation5 + $0xfa0] sm:$0xff]
    %v610 = vld [vmem:[#allocation5 + $0xfa8] sm:$0xff]
    %v611 = vld [vmem:[#allocation5 + $0xfb0] sm:$0xff]
    %v612 = vld [vmem:[#allocation5 + $0xfb8] sm:$0xff]
    %v613 = vld [vmem:[#allocation5 + $0xfc0] sm:$0xff]
    %v614 = vld [vmem:[#allocation5 + $0xfc8] sm:$0xff]
    %v615 = vld [vmem:[#allocation5 + $0xfd0] sm:$0xff]
    %v616 = vld [vmem:[#allocation5 + $0xfd8] sm:$0xff]
    %v617 = vld [vmem:[#allocation5 + $0xfe0] sm:$0xff]
    %v618 = vld [vmem:[#allocation5 + $0xfe8] sm:$0xff]
    %v619 = vld [vmem:[#allocation5 + $0xff0] sm:$0xff]
    %v620 = vld [vmem:[#allocation5 + $0xff8] sm:$0xff]
    %v625 = vunpack.c.l.b16 %v105
    %v626 = vunpack.c.h.b16 %v105
    %v627 = vunpack.c.l.b16 %v106
    %v628 = vunpack.c.h.b16 %v106
    %v629 = vunpack.c.l.b16 %v107
    %v630 = vunpack.c.h.b16 %v107
    %v631 = vunpack.c.l.b16 %v108
    %v632 = vunpack.c.h.b16 %v108
    %v633 = vpack.c.b16 %v625, %v625
    %v634 = vpack.c.b16 %v626, %v626
    %v635 = vpack.c.b16 %v627, %v627
    %v636 = vpack.c.b16 %v628, %v628
    %v637 = vpack.c.b16 %v629, %v629
    %v638 = vpack.c.b16 %v630, %v630
    %v639 = vpack.c.b16 %v631, %v631
    %v640 = vpack.c.b16 %v632, %v632
    %v1161 = vunpack.c.l.b16 %v109
    %v1162 = vunpack.c.h.b16 %v109
    %v1163 = vunpack.c.l.b16 %v110
    %v1164 = vunpack.c.h.b16 %v110
    %v1165 = vunpack.c.l.b16 %v111
    %v1166 = vunpack.c.h.b16 %v111
    %v1167 = vunpack.c.l.b16 %v112
    %v1168 = vunpack.c.h.b16 %v112
    %v1169 = vunpack.c.l.b16 %v113
    %v1170 = vunpack.c.h.b16 %v113
    %v1171 = vunpack.c.l.b16 %v114
    %v1172 = vunpack.c.h.b16 %v114
    %v1173 = vunpack.c.l.b16 %v115
    %v1174 = vunpack.c.h.b16 %v115
    %v1175 = vunpack.c.l.b16 %v116
    %v1176 = vunpack.c.h.b16 %v116
    %v1177 = vunpack.c.l.b16 %v117
    %v1178 = vunpack.c.h.b16 %v117
    %v1179 = vunpack.c.l.b16 %v118
    %v1180 = vunpack.c.h.b16 %v118
    %v1181 = vunpack.c.l.b16 %v119
    %v1182 = vunpack.c.h.b16 %v119
    %v1183 = vunpack.c.l.b16 %v120
    %v1184 = vunpack.c.h.b16 %v120
    %v1185 = vunpack.c.l.b16 %v121
    %v1186 = vunpack.c.h.b16 %v121
    %v1187 = vunpack.c.l.b16 %v122
    %v1188 = vunpack.c.h.b16 %v122
    %v1189 = vunpack.c.l.b16 %v123
    %v1190 = vunpack.c.h.b16 %v123
    %v1191 = vunpack.c.l.b16 %v124
    %v1192 = vunpack.c.h.b16 %v124
    %v1193 = vunpack.c.l.b16 %v125
    %v1194 = vunpack.c.h.b16 %v125
    %v1195 = vunpack.c.l.b16 %v126
    %v1196 = vunpack.c.h.b16 %v126
    %v1197 = vunpack.c.l.b16 %v127
    %v1198 = vunpack.c.h.b16 %v127
    %v1199 = vunpack.c.l.b16 %v128
    %v1200 = vunpack.c.h.b16 %v128
    %v1201 = vunpack.c.l.b16 %v129
    %v1202 = vunpack.c.h.b16 %v129
    %v1203 = vunpack.c.l.b16 %v130
    %v1204 = vunpack.c.h.b16 %v130
    %v1205 = vunpack.c.l.b16 %v131
    %v1206 = vunpack.c.h.b16 %v131
    %v1207 = vunpack.c.l.b16 %v132
    %v1208 = vunpack.c.h.b16 %v132
    %v1209 = vunpack.c.l.b16 %v133
    %v1210 = vunpack.c.h.b16 %v133
    %v1211 = vunpack.c.l.b16 %v134
    %v1212 = vunpack.c.h.b16 %v134
    %v1213 = vunpack.c.l.b16 %v135
    %v1214 = vunpack.c.h.b16 %v135
    %v1215 = vunpack.c.l.b16 %v136
    %v1216 = vunpack.c.h.b16 %v136
    %v1217 = vunpack.c.l.b16 %v137
    %v1218 = vunpack.c.h.b16 %v137
    %v1219 = vunpack.c.l.b16 %v138
    %v1220 = vunpack.c.h.b16 %v138
    %v1221 = vunpack.c.l.b16 %v139
    %v1222 = vunpack.c.h.b16 %v139
    %v1223 = vunpack.c.l.b16 %v140
    %v1224 = vunpack.c.h.b16 %v140
    %v1225 = vunpack.c.l.b16 %v141
    %v1226 = vunpack.c.h.b16 %v141
    %v1227 = vunpack.c.l.b16 %v142
    %v1228 = vunpack.c.h.b16 %v142
    %v1229 = vunpack.c.l.b16 %v143
    %v1230 = vunpack.c.h.b16 %v143
    %v1231 = vunpack.c.l.b16 %v144
    %v1232 = vunpack.c.h.b16 %v144
    %v1233 = vunpack.c.l.b16 %v145
    %v1234 = vunpack.c.h.b16 %v145
    %v1235 = vunpack.c.l.b16 %v146
    %v1236 = vunpack.c.h.b16 %v146
    %v1237 = vunpack.c.l.b16 %v147
    %v1238 = vunpack.c.h.b16 %v147
    %v1239 = vunpack.c.l.b16 %v148
    %v1240 = vunpack.c.h.b16 %v148
    %v1241 = vunpack.c.l.b16 %v149
    %v1242 = vunpack.c.h.b16 %v149
    %v1243 = vunpack.c.l.b16 %v150
    %v1244 = vunpack.c.h.b16 %v150
    %v1245 = vunpack.c.l.b16 %v151
    %v1246 = vunpack.c.h.b16 %v151
    %v1247 = vunpack.c.l.b16 %v152
    %v1248 = vunpack.c.h.b16 %v152
    %v1249 = vunpack.c.l.b16 %v153
    %v1250 = vunpack.c.h.b16 %v153
    %v1251 = vunpack.c.l.b16 %v154
    %v1252 = vunpack.c.h.b16 %v154
    %v1253 = vunpack.c.l.b16 %v155
    %v1254 = vunpack.c.h.b16 %v155
    %v1255 = vunpack.c.l.b16 %v156
    %v1256 = vunpack.c.h.b16 %v156
    %v1257 = vunpack.c.l.b16 %v157
    %v1258 = vunpack.c.h.b16 %v157
    %v1259 = vunpack.c.l.b16 %v158
    %v1260 = vunpack.c.h.b16 %v158
    %v1261 = vunpack.c.l.b16 %v159
    %v1262 = vunpack.c.h.b16 %v159
    %v1263 = vunpack.c.l.b16 %v160
    %v1264 = vunpack.c.h.b16 %v160
    %v1265 = vunpack.c.l.b16 %v161
    %v1266 = vunpack.c.h.b16 %v161
    %v1267 = vunpack.c.l.b16 %v162
    %v1268 = vunpack.c.h.b16 %v162
    %v1269 = vunpack.c.l.b16 %v163
    %v1270 = vunpack.c.h.b16 %v163
    %v1271 = vunpack.c.l.b16 %v164
    %v1272 = vunpack.c.h.b16 %v164
    %v1273 = vunpack.c.l.b16 %v165
    %v1274 = vunpack.c.h.b16 %v165
    %v1275 = vunpack.c.l.b16 %v166
    %v1276 = vunpack.c.h.b16 %v166
    %v1277 = vunpack.c.l.b16 %v167
    %v1278 = vunpack.c.h.b16 %v167
    %v1279 = vunpack.c.l.b16 %v168
    %v1280 = vunpack.c.h.b16 %v168
    %v1281 = vunpack.c.l.b16 %v169
    %v1282 = vunpack.c.h.b16 %v169
    %v1283 = vunpack.c.l.b16 %v170
    %v1284 = vunpack.c.h.b16 %v170
    %v1285 = vunpack.c.l.b16 %v171
    %v1286 = vunpack.c.h.b16 %v171
    %v1287 = vunpack.c.l.b16 %v172
    %v1288 = vunpack.c.h.b16 %v172
    %v1289 = vunpack.c.l.b16 %v173
    %v1290 = vunpack.c.h.b16 %v173
    %v1291 = vunpack.c.l.b16 %v174
    %v1292 = vunpack.c.h.b16 %v174
    %v1293 = vunpack.c.l.b16 %v175
    %v1294 = vunpack.c.h.b16 %v175
    %v1295 = vunpack.c.l.b16 %v176
    %v1296 = vunpack.c.h.b16 %v176
    %v1297 = vunpack.c.l.b16 %v177
    %v1298 = vunpack.c.h.b16 %v177
    %v1299 = vunpack.c.l.b16 %v178
    %v1300 = vunpack.c.h.b16 %v178
    %v1301 = vunpack.c.l.b16 %v179
    %v1302 = vunpack.c.h.b16 %v179
    %v1303 = vunpack.c.l.b16 %v180
    %v1304 = vunpack.c.h.b16 %v180
    %v1305 = vunpack.c.l.b16 %v181
    %v1306 = vunpack.c.h.b16 %v181
    %v1307 = vunpack.c.l.b16 %v182
    %v1308 = vunpack.c.h.b16 %v182
    %v1309 = vunpack.c.l.b16 %v183
    %v1310 = vunpack.c.h.b16 %v183
    %v1311 = vunpack.c.l.b16 %v184
    %v1312 = vunpack.c.h.b16 %v184
    %v1313 = vunpack.c.l.b16 %v185
    %v1314 = vunpack.c.h.b16 %v185
    %v1315 = vunpack.c.l.b16 %v186
    %v1316 = vunpack.c.h.b16 %v186
    %v1317 = vunpack.c.l.b16 %v187
    %v1318 = vunpack.c.h.b16 %v187
    %v1319 = vunpack.c.l.b16 %v188
    %v1320 = vunpack.c.h.b16 %v188
    %v1321 = vunpack.c.l.b16 %v189
    %v1322 = vunpack.c.h.b16 %v189
    %v1323 = vunpack.c.l.b16 %v190
    %v1324 = vunpack.c.h.b16 %v190
    %v1325 = vunpack.c.l.b16 %v191
    %v1326 = vunpack.c.h.b16 %v191
    %v1327 = vunpack.c.l.b16 %v192
    %v1328 = vunpack.c.h.b16 %v192
    %v1329 = vunpack.c.l.b16 %v193
    %v1330 = vunpack.c.h.b16 %v193
    %v1331 = vunpack.c.l.b16 %v194
    %v1332 = vunpack.c.h.b16 %v194
    %v1333 = vunpack.c.l.b16 %v195
    %v1334 = vunpack.c.h.b16 %v195
    %v1335 = vunpack.c.l.b16 %v196
    %v1336 = vunpack.c.h.b16 %v196
    %v1337 = vunpack.c.l.b16 %v197
    %v1338 = vunpack.c.h.b16 %v197
    %v1339 = vunpack.c.l.b16 %v198
    %v1340 = vunpack.c.h.b16 %v198
    %v1341 = vunpack.c.l.b16 %v199
    %v1342 = vunpack.c.h.b16 %v199
    %v1343 = vunpack.c.l.b16 %v200
    %v1344 = vunpack.c.h.b16 %v200
    %v1345 = vunpack.c.l.b16 %v201
    %v1346 = vunpack.c.h.b16 %v201
    %v1347 = vunpack.c.l.b16 %v202
    %v1348 = vunpack.c.h.b16 %v202
    %v1349 = vunpack.c.l.b16 %v203
    %v1350 = vunpack.c.h.b16 %v203
    %v1351 = vunpack.c.l.b16 %v204
    %v1352 = vunpack.c.h.b16 %v204
    %v1353 = vunpack.c.l.b16 %v205
    %v1354 = vunpack.c.h.b16 %v205
    %v1355 = vunpack.c.l.b16 %v206
    %v1356 = vunpack.c.h.b16 %v206
    %v1357 = vunpack.c.l.b16 %v207
    %v1358 = vunpack.c.h.b16 %v207
    %v1359 = vunpack.c.l.b16 %v208
    %v1360 = vunpack.c.h.b16 %v208
    %v1361 = vunpack.c.l.b16 %v209
    %v1362 = vunpack.c.h.b16 %v209
    %v1363 = vunpack.c.l.b16 %v210
    %v1364 = vunpack.c.h.b16 %v210
    %v1365 = vunpack.c.l.b16 %v211
    %v1366 = vunpack.c.h.b16 %v211
    %v1367 = vunpack.c.l.b16 %v212
    %v1368 = vunpack.c.h.b16 %v212
    %v1369 = vunpack.c.l.b16 %v213
    %v1370 = vunpack.c.h.b16 %v213
    %v1371 = vunpack.c.l.b16 %v214
    %v1372 = vunpack.c.h.b16 %v214
    %v1373 = vunpack.c.l.b16 %v215
    %v1374 = vunpack.c.h.b16 %v215
    %v1375 = vunpack.c.l.b16 %v216
    %v1376 = vunpack.c.h.b16 %v216
    %v1377 = vunpack.c.l.b16 %v217
    %v1378 = vunpack.c.h.b16 %v217
    %v1379 = vunpack.c.l.b16 %v218
    %v1380 = vunpack.c.h.b16 %v218
    %v1381 = vunpack.c.l.b16 %v219
    %v1382 = vunpack.c.h.b16 %v219
    %v1383 = vunpack.c.l.b16 %v220
    %v1384 = vunpack.c.h.b16 %v220
    %v1385 = vunpack.c.l.b16 %v221
    %v1386 = vunpack.c.h.b16 %v221
    %v1387 = vunpack.c.l.b16 %v222
    %v1388 = vunpack.c.h.b16 %v222
    %v1389 = vunpack.c.l.b16 %v223
    %v1390 = vunpack.c.h.b16 %v223
    %v1391 = vunpack.c.l.b16 %v224
    %v1392 = vunpack.c.h.b16 %v224
    %v1393 = vunpack.c.l.b16 %v225
    %v1394 = vunpack.c.h.b16 %v225
    %v1395 = vunpack.c.l.b16 %v226
    %v1396 = vunpack.c.h.b16 %v226
    %v1397 = vunpack.c.l.b16 %v227
    %v1398 = vunpack.c.h.b16 %v227
    %v1399 = vunpack.c.l.b16 %v228
    %v1400 = vunpack.c.h.b16 %v228
    %v1401 = vunpack.c.l.b16 %v229
    %v1402 = vunpack.c.h.b16 %v229
    %v1403 = vunpack.c.l.b16 %v230
    %v1404 = vunpack.c.h.b16 %v230
    %v1405 = vunpack.c.l.b16 %v231
    %v1406 = vunpack.c.h.b16 %v231
    %v1407 = vunpack.c.l.b16 %v232
    %v1408 = vunpack.c.h.b16 %v232
    %v1409 = vunpack.c.l.b16 %v233
    %v1410 = vunpack.c.h.b16 %v233
    %v1411 = vunpack.c.l.b16 %v234
    %v1412 = vunpack.c.h.b16 %v234
    %v1413 = vunpack.c.l.b16 %v235
    %v1414 = vunpack.c.h.b16 %v235
    %v1415 = vunpack.c.l.b16 %v236
    %v1416 = vunpack.c.h.b16 %v236
    %v1417 = vunpack.c.l.b16 %v237
    %v1418 = vunpack.c.h.b16 %v237
    %v1419 = vunpack.c.l.b16 %v238
    %v1420 = vunpack.c.h.b16 %v238
    %v1421 = vunpack.c.l.b16 %v239
    %v1422 = vunpack.c.h.b16 %v239
    %v1423 = vunpack.c.l.b16 %v240
    %v1424 = vunpack.c.h.b16 %v240
    %v1425 = vunpack.c.l.b16 %v241
    %v1426 = vunpack.c.h.b16 %v241
    %v1427 = vunpack.c.l.b16 %v242
    %v1428 = vunpack.c.h.b16 %v242
    %v1429 = vunpack.c.l.b16 %v243
    %v1430 = vunpack.c.h.b16 %v243
    %v1431 = vunpack.c.l.b16 %v244
    %v1432 = vunpack.c.h.b16 %v244
    %v1433 = vunpack.c.l.b16 %v245
    %v1434 = vunpack.c.h.b16 %v245
    %v1435 = vunpack.c.l.b16 %v246
    %v1436 = vunpack.c.h.b16 %v246
    %v1437 = vunpack.c.l.b16 %v247
    %v1438 = vunpack.c.h.b16 %v247
    %v1439 = vunpack.c.l.b16 %v248
    %v1440 = vunpack.c.h.b16 %v248
    %v1441 = vunpack.c.l.b16 %v249
    %v1442 = vunpack.c.h.b16 %v249
    %v1443 = vunpack.c.l.b16 %v250
    %v1444 = vunpack.c.h.b16 %v250
    %v1445 = vunpack.c.l.b16 %v251
    %v1446 = vunpack.c.h.b16 %v251
    %v1447 = vunpack.c.l.b16 %v252
    %v1448 = vunpack.c.h.b16 %v252
    %v1449 = vunpack.c.l.b16 %v253
    %v1450 = vunpack.c.h.b16 %v253
    %v1451 = vunpack.c.l.b16 %v254
    %v1452 = vunpack.c.h.b16 %v254
    %v1453 = vunpack.c.l.b16 %v255
    %v1454 = vunpack.c.h.b16 %v255
    %v1455 = vunpack.c.l.b16 %v256
    %v1456 = vunpack.c.h.b16 %v256
    %v1457 = vunpack.c.l.b16 %v257
    %v1458 = vunpack.c.h.b16 %v257
    %v1459 = vunpack.c.l.b16 %v258
    %v1460 = vunpack.c.h.b16 %v258
    %v1461 = vunpack.c.l.b16 %v259
    %v1462 = vunpack.c.h.b16 %v259
    %v1463 = vunpack.c.l.b16 %v260
    %v1464 = vunpack.c.h.b16 %v260
    %v1465 = vunpack.c.l.b16 %v261
    %v1466 = vunpack.c.h.b16 %v261
    %v1467 = vunpack.c.l.b16 %v262
    %v1468 = vunpack.c.h.b16 %v262
    %v1469 = vunpack.c.l.b16 %v263
    %v1470 = vunpack.c.h.b16 %v263
    %v1471 = vunpack.c.l.b16 %v264
    %v1472 = vunpack.c.h.b16 %v264
    %v1473 = vunpack.c.l.b16 %v265
    %v1474 = vunpack.c.h.b16 %v265
    %v1475 = vunpack.c.l.b16 %v266
    %v1476 = vunpack.c.h.b16 %v266
    %v1477 = vunpack.c.l.b16 %v267
    %v1478 = vunpack.c.h.b16 %v267
    %v1479 = vunpack.c.l.b16 %v268
    %v1480 = vunpack.c.h.b16 %v268
    %v1481 = vunpack.c.l.b16 %v269
    %v1482 = vunpack.c.h.b16 %v269
    %v1483 = vunpack.c.l.b16 %v270
    %v1484 = vunpack.c.h.b16 %v270
    %v1485 = vunpack.c.l.b16 %v271
    %v1486 = vunpack.c.h.b16 %v271
    %v1487 = vunpack.c.l.b16 %v272
    %v1488 = vunpack.c.h.b16 %v272
    %v1489 = vunpack.c.l.b16 %v273
    %v1490 = vunpack.c.h.b16 %v273
    %v1491 = vunpack.c.l.b16 %v274
    %v1492 = vunpack.c.h.b16 %v274
    %v1493 = vunpack.c.l.b16 %v275
    %v1494 = vunpack.c.h.b16 %v275
    %v1495 = vunpack.c.l.b16 %v276
    %v1496 = vunpack.c.h.b16 %v276
    %v1497 = vunpack.c.l.b16 %v277
    %v1498 = vunpack.c.h.b16 %v277
    %v1499 = vunpack.c.l.b16 %v278
    %v1500 = vunpack.c.h.b16 %v278
    %v1501 = vunpack.c.l.b16 %v279
    %v1502 = vunpack.c.h.b16 %v279
    %v1503 = vunpack.c.l.b16 %v280
    %v1504 = vunpack.c.h.b16 %v280
    %v1505 = vunpack.c.l.b16 %v281
    %v1506 = vunpack.c.h.b16 %v281
    %v1507 = vunpack.c.l.b16 %v282
    %v1508 = vunpack.c.h.b16 %v282
    %v1509 = vunpack.c.l.b16 %v283
    %v1510 = vunpack.c.h.b16 %v283
    %v1511 = vunpack.c.l.b16 %v284
    %v1512 = vunpack.c.h.b16 %v284
    %v1513 = vunpack.c.l.b16 %v285
    %v1514 = vunpack.c.h.b16 %v285
    %v1515 = vunpack.c.l.b16 %v286
    %v1516 = vunpack.c.h.b16 %v286
    %v1517 = vunpack.c.l.b16 %v287
    %v1518 = vunpack.c.h.b16 %v287
    %v1519 = vunpack.c.l.b16 %v288
    %v1520 = vunpack.c.h.b16 %v288
    %v1521 = vunpack.c.l.b16 %v289
    %v1522 = vunpack.c.h.b16 %v289
    %v1523 = vunpack.c.l.b16 %v290
    %v1524 = vunpack.c.h.b16 %v290
    %v1525 = vunpack.c.l.b16 %v291
    %v1526 = vunpack.c.h.b16 %v291
    %v1527 = vunpack.c.l.b16 %v292
    %v1528 = vunpack.c.h.b16 %v292
    %v1529 = vunpack.c.l.b16 %v293
    %v1530 = vunpack.c.h.b16 %v293
    %v1531 = vunpack.c.l.b16 %v294
    %v1532 = vunpack.c.h.b16 %v294
    %v1533 = vunpack.c.l.b16 %v295
    %v1534 = vunpack.c.h.b16 %v295
    %v1535 = vunpack.c.l.b16 %v296
    %v1536 = vunpack.c.h.b16 %v296
    %v1537 = vunpack.c.l.b16 %v297
    %v1538 = vunpack.c.h.b16 %v297
    %v1539 = vunpack.c.l.b16 %v298
    %v1540 = vunpack.c.h.b16 %v298
    %v1541 = vunpack.c.l.b16 %v299
    %v1542 = vunpack.c.h.b16 %v299
    %v1543 = vunpack.c.l.b16 %v300
    %v1544 = vunpack.c.h.b16 %v300
    %v1545 = vunpack.c.l.b16 %v301
    %v1546 = vunpack.c.h.b16 %v301
    %v1547 = vunpack.c.l.b16 %v302
    %v1548 = vunpack.c.h.b16 %v302
    %v1549 = vunpack.c.l.b16 %v303
    %v1550 = vunpack.c.h.b16 %v303
    %v1551 = vunpack.c.l.b16 %v304
    %v1552 = vunpack.c.h.b16 %v304
    %v1553 = vunpack.c.l.b16 %v305
    %v1554 = vunpack.c.h.b16 %v305
    %v1555 = vunpack.c.l.b16 %v306
    %v1556 = vunpack.c.h.b16 %v306
    %v1557 = vunpack.c.l.b16 %v307
    %v1558 = vunpack.c.h.b16 %v307
    %v1559 = vunpack.c.l.b16 %v308
    %v1560 = vunpack.c.h.b16 %v308
    %v1561 = vunpack.c.l.b16 %v309
    %v1562 = vunpack.c.h.b16 %v309
    %v1563 = vunpack.c.l.b16 %v310
    %v1564 = vunpack.c.h.b16 %v310
    %v1565 = vunpack.c.l.b16 %v311
    %v1566 = vunpack.c.h.b16 %v311
    %v1567 = vunpack.c.l.b16 %v312
    %v1568 = vunpack.c.h.b16 %v312
    %v1569 = vunpack.c.l.b16 %v313
    %v1570 = vunpack.c.h.b16 %v313
    %v1571 = vunpack.c.l.b16 %v314
    %v1572 = vunpack.c.h.b16 %v314
    %v1573 = vunpack.c.l.b16 %v315
    %v1574 = vunpack.c.h.b16 %v315
    %v1575 = vunpack.c.l.b16 %v316
    %v1576 = vunpack.c.h.b16 %v316
    %v1577 = vunpack.c.l.b16 %v317
    %v1578 = vunpack.c.h.b16 %v317
    %v1579 = vunpack.c.l.b16 %v318
    %v1580 = vunpack.c.h.b16 %v318
    %v1581 = vunpack.c.l.b16 %v319
    %v1582 = vunpack.c.h.b16 %v319
    %v1583 = vunpack.c.l.b16 %v320
    %v1584 = vunpack.c.h.b16 %v320
    %v1585 = vunpack.c.l.b16 %v321
    %v1586 = vunpack.c.h.b16 %v321
    %v1587 = vunpack.c.l.b16 %v322
    %v1588 = vunpack.c.h.b16 %v322
    %v1589 = vunpack.c.l.b16 %v323
    %v1590 = vunpack.c.h.b16 %v323
    %v1591 = vunpack.c.l.b16 %v324
    %v1592 = vunpack.c.h.b16 %v324
    %v1593 = vunpack.c.l.b16 %v325
    %v1594 = vunpack.c.h.b16 %v325
    %v1595 = vunpack.c.l.b16 %v326
    %v1596 = vunpack.c.h.b16 %v326
    %v1597 = vunpack.c.l.b16 %v327
    %v1598 = vunpack.c.h.b16 %v327
    %v1599 = vunpack.c.l.b16 %v328
    %v1600 = vunpack.c.h.b16 %v328
    %v1601 = vunpack.c.l.b16 %v329
    %v1602 = vunpack.c.h.b16 %v329
    %v1603 = vunpack.c.l.b16 %v330
    %v1604 = vunpack.c.h.b16 %v330
    %v1605 = vunpack.c.l.b16 %v331
    %v1606 = vunpack.c.h.b16 %v331
    %v1607 = vunpack.c.l.b16 %v332
    %v1608 = vunpack.c.h.b16 %v332
    %v1609 = vunpack.c.l.b16 %v333
    %v1610 = vunpack.c.h.b16 %v333
    %v1611 = vunpack.c.l.b16 %v334
    %v1612 = vunpack.c.h.b16 %v334
    %v1613 = vunpack.c.l.b16 %v335
    %v1614 = vunpack.c.h.b16 %v335
    %v1615 = vunpack.c.l.b16 %v336
    %v1616 = vunpack.c.h.b16 %v336
    %v1617 = vunpack.c.l.b16 %v337
    %v1618 = vunpack.c.h.b16 %v337
    %v1619 = vunpack.c.l.b16 %v338
    %v1620 = vunpack.c.h.b16 %v338
    %v1621 = vunpack.c.l.b16 %v339
    %v1622 = vunpack.c.h.b16 %v339
    %v1623 = vunpack.c.l.b16 %v340
    %v1624 = vunpack.c.h.b16 %v340
    %v1625 = vunpack.c.l.b16 %v341
    %v1626 = vunpack.c.h.b16 %v341
    %v1627 = vunpack.c.l.b16 %v342
    %v1628 = vunpack.c.h.b16 %v342
    %v1629 = vunpack.c.l.b16 %v343
    %v1630 = vunpack.c.h.b16 %v343
    %v1631 = vunpack.c.l.b16 %v344
    %v1632 = vunpack.c.h.b16 %v344
    %v1633 = vunpack.c.l.b16 %v345
    %v1634 = vunpack.c.h.b16 %v345
    %v1635 = vunpack.c.l.b16 %v346
    %v1636 = vunpack.c.h.b16 %v346
    %v1637 = vunpack.c.l.b16 %v347
    %v1638 = vunpack.c.h.b16 %v347
    %v1639 = vunpack.c.l.b16 %v348
    %v1640 = vunpack.c.h.b16 %v348
    %v1641 = vunpack.c.l.b16 %v349
    %v1642 = vunpack.c.h.b16 %v349
    %v1643 = vunpack.c.l.b16 %v350
    %v1644 = vunpack.c.h.b16 %v350
    %v1645 = vunpack.c.l.b16 %v351
    %v1646 = vunpack.c.h.b16 %v351
    %v1647 = vunpack.c.l.b16 %v352
    %v1648 = vunpack.c.h.b16 %v352
    %v1649 = vunpack.c.l.b16 %v353
    %v1650 = vunpack.c.h.b16 %v353
    %v1651 = vunpack.c.l.b16 %v354
    %v1652 = vunpack.c.h.b16 %v354
    %v1653 = vunpack.c.l.b16 %v355
    %v1654 = vunpack.c.h.b16 %v355
    %v1655 = vunpack.c.l.b16 %v356
    %v1656 = vunpack.c.h.b16 %v356
    %v1657 = vunpack.c.l.b16 %v357
    %v1658 = vunpack.c.h.b16 %v357
    %v1659 = vunpack.c.l.b16 %v358
    %v1660 = vunpack.c.h.b16 %v358
    %v1661 = vunpack.c.l.b16 %v359
    %v1662 = vunpack.c.h.b16 %v359
    %v1663 = vunpack.c.l.b16 %v360
    %v1664 = vunpack.c.h.b16 %v360
    %v1665 = vunpack.c.l.b16 %v361
    %v1666 = vunpack.c.h.b16 %v361
    %v1667 = vunpack.c.l.b16 %v362
    %v1668 = vunpack.c.h.b16 %v362
    %v1669 = vunpack.c.l.b16 %v363
    %v1670 = vunpack.c.h.b16 %v363
    %v1671 = vunpack.c.l.b16 %v364
    %v1672 = vunpack.c.h.b16 %v364
    %v1673 = vunpack.c.l.b16 %v365
    %v1674 = vunpack.c.h.b16 %v365
    %v1675 = vunpack.c.l.b16 %v366
    %v1676 = vunpack.c.h.b16 %v366
    %v1677 = vunpack.c.l.b16 %v367
    %v1678 = vunpack.c.h.b16 %v367
    %v1679 = vunpack.c.l.b16 %v368
    %v1680 = vunpack.c.h.b16 %v368
    %v1681 = vunpack.c.l.b16 %v369
    %v1682 = vunpack.c.h.b16 %v369
    %v1683 = vunpack.c.l.b16 %v370
    %v1684 = vunpack.c.h.b16 %v370
    %v1685 = vunpack.c.l.b16 %v371
    %v1686 = vunpack.c.h.b16 %v371
    %v1687 = vunpack.c.l.b16 %v372
    %v1688 = vunpack.c.h.b16 %v372
    %v1689 = vunpack.c.l.b16 %v373
    %v1690 = vunpack.c.h.b16 %v373
    %v1691 = vunpack.c.l.b16 %v374
    %v1692 = vunpack.c.h.b16 %v374
    %v1693 = vunpack.c.l.b16 %v375
    %v1694 = vunpack.c.h.b16 %v375
    %v1695 = vunpack.c.l.b16 %v376
    %v1696 = vunpack.c.h.b16 %v376
    %v1697 = vunpack.c.l.b16 %v377
    %v1698 = vunpack.c.h.b16 %v377
    %v1699 = vunpack.c.l.b16 %v378
    %v1700 = vunpack.c.h.b16 %v378
    %v1701 = vunpack.c.l.b16 %v379
    %v1702 = vunpack.c.h.b16 %v379
    %v1703 = vunpack.c.l.b16 %v380
    %v1704 = vunpack.c.h.b16 %v380
    %v1705 = vunpack.c.l.b16 %v381
    %v1706 = vunpack.c.h.b16 %v381
    %v1707 = vunpack.c.l.b16 %v382
    %v1708 = vunpack.c.h.b16 %v382
    %v1709 = vunpack.c.l.b16 %v383
    %v1710 = vunpack.c.h.b16 %v383
    %v1711 = vunpack.c.l.b16 %v384
    %v1712 = vunpack.c.h.b16 %v384
    %v1713 = vunpack.c.l.b16 %v385
    %v1714 = vunpack.c.h.b16 %v385
    %v1715 = vunpack.c.l.b16 %v386
    %v1716 = vunpack.c.h.b16 %v386
    %v1717 = vunpack.c.l.b16 %v387
    %v1718 = vunpack.c.h.b16 %v387
    %v1719 = vunpack.c.l.b16 %v388
    %v1720 = vunpack.c.h.b16 %v388
    %v1721 = vunpack.c.l.b16 %v389
    %v1722 = vunpack.c.h.b16 %v389
    %v1723 = vunpack.c.l.b16 %v390
    %v1724 = vunpack.c.h.b16 %v390
    %v1725 = vunpack.c.l.b16 %v391
    %v1726 = vunpack.c.h.b16 %v391
    %v1727 = vunpack.c.l.b16 %v392
    %v1728 = vunpack.c.h.b16 %v392
    %v1729 = vunpack.c.l.b16 %v393
    %v1730 = vunpack.c.h.b16 %v393
    %v1731 = vunpack.c.l.b16 %v394
    %v1732 = vunpack.c.h.b16 %v394
    %v1733 = vunpack.c.l.b16 %v395
    %v1734 = vunpack.c.h.b16 %v395
    %v1735 = vunpack.c.l.b16 %v396
    %v1736 = vunpack.c.h.b16 %v396
    %v1737 = vunpack.c.l.b16 %v397
    %v1738 = vunpack.c.h.b16 %v397
    %v1739 = vunpack.c.l.b16 %v398
    %v1740 = vunpack.c.h.b16 %v398
    %v1741 = vunpack.c.l.b16 %v399
    %v1742 = vunpack.c.h.b16 %v399
    %v1743 = vunpack.c.l.b16 %v400
    %v1744 = vunpack.c.h.b16 %v400
    %v1745 = vunpack.c.l.b16 %v401
    %v1746 = vunpack.c.h.b16 %v401
    %v1747 = vunpack.c.l.b16 %v402
    %v1748 = vunpack.c.h.b16 %v402
    %v1749 = vunpack.c.l.b16 %v403
    %v1750 = vunpack.c.h.b16 %v403
    %v1751 = vunpack.c.l.b16 %v404
    %v1752 = vunpack.c.h.b16 %v404
    %v1753 = vunpack.c.l.b16 %v405
    %v1754 = vunpack.c.h.b16 %v405
    %v1755 = vunpack.c.l.b16 %v406
    %v1756 = vunpack.c.h.b16 %v406
    %v1757 = vunpack.c.l.b16 %v407
    %v1758 = vunpack.c.h.b16 %v407
    %v1759 = vunpack.c.l.b16 %v408
    %v1760 = vunpack.c.h.b16 %v408
    %v1761 = vunpack.c.l.b16 %v409
    %v1762 = vunpack.c.h.b16 %v409
    %v1763 = vunpack.c.l.b16 %v410
    %v1764 = vunpack.c.h.b16 %v410
    %v1765 = vunpack.c.l.b16 %v411
    %v1766 = vunpack.c.h.b16 %v411
    %v1767 = vunpack.c.l.b16 %v412
    %v1768 = vunpack.c.h.b16 %v412
    %v1769 = vunpack.c.l.b16 %v413
    %v1770 = vunpack.c.h.b16 %v413
    %v1771 = vunpack.c.l.b16 %v414
    %v1772 = vunpack.c.h.b16 %v414
    %v1773 = vunpack.c.l.b16 %v415
    %v1774 = vunpack.c.h.b16 %v415
    %v1775 = vunpack.c.l.b16 %v416
    %v1776 = vunpack.c.h.b16 %v416
    %v1777 = vunpack.c.l.b16 %v417
    %v1778 = vunpack.c.h.b16 %v417
    %v1779 = vunpack.c.l.b16 %v418
    %v1780 = vunpack.c.h.b16 %v418
    %v1781 = vunpack.c.l.b16 %v419
    %v1782 = vunpack.c.h.b16 %v419
    %v1783 = vunpack.c.l.b16 %v420
    %v1784 = vunpack.c.h.b16 %v420
    %v1785 = vunpack.c.l.b16 %v421
    %v1786 = vunpack.c.h.b16 %v421
    %v1787 = vunpack.c.l.b16 %v422
    %v1788 = vunpack.c.h.b16 %v422
    %v1789 = vunpack.c.l.b16 %v423
    %v1790 = vunpack.c.h.b16 %v423
    %v1791 = vunpack.c.l.b16 %v424
    %v1792 = vunpack.c.h.b16 %v424
    %v1793 = vunpack.c.l.b16 %v425
    %v1794 = vunpack.c.h.b16 %v425
    %v1795 = vunpack.c.l.b16 %v426
    %v1796 = vunpack.c.h.b16 %v426
    %v1797 = vunpack.c.l.b16 %v427
    %v1798 = vunpack.c.h.b16 %v427
    %v1799 = vunpack.c.l.b16 %v428
    %v1800 = vunpack.c.h.b16 %v428
    %v1801 = vunpack.c.l.b16 %v429
    %v1802 = vunpack.c.h.b16 %v429
    %v1803 = vunpack.c.l.b16 %v430
    %v1804 = vunpack.c.h.b16 %v430
    %v1805 = vunpack.c.l.b16 %v431
    %v1806 = vunpack.c.h.b16 %v431
    %v1807 = vunpack.c.l.b16 %v432
    %v1808 = vunpack.c.h.b16 %v432
    %v1809 = vunpack.c.l.b16 %v433
    %v1810 = vunpack.c.h.b16 %v433
    %v1811 = vunpack.c.l.b16 %v434
    %v1812 = vunpack.c.h.b16 %v434
    %v1813 = vunpack.c.l.b16 %v435
    %v1814 = vunpack.c.h.b16 %v435
    %v1815 = vunpack.c.l.b16 %v436
    %v1816 = vunpack.c.h.b16 %v436
    %v1817 = vunpack.c.l.b16 %v437
    %v1818 = vunpack.c.h.b16 %v437
    %v1819 = vunpack.c.l.b16 %v438
    %v1820 = vunpack.c.h.b16 %v438
    %v1821 = vunpack.c.l.b16 %v439
    %v1822 = vunpack.c.h.b16 %v439
    %v1823 = vunpack.c.l.b16 %v440
    %v1824 = vunpack.c.h.b16 %v440
    %v1825 = vunpack.c.l.b16 %v441
    %v1826 = vunpack.c.h.b16 %v441
    %v1827 = vunpack.c.l.b16 %v442
    %v1828 = vunpack.c.h.b16 %v442
    %v1829 = vunpack.c.l.b16 %v443
    %v1830 = vunpack.c.h.b16 %v443
    %v1831 = vunpack.c.l.b16 %v444
    %v1832 = vunpack.c.h.b16 %v444
    %v1833 = vunpack.c.l.b16 %v445
    %v1834 = vunpack.c.h.b16 %v445
    %v1835 = vunpack.c.l.b16 %v446
    %v1836 = vunpack.c.h.b16 %v446
    %v1837 = vunpack.c.l.b16 %v447
    %v1838 = vunpack.c.h.b16 %v447
    %v1839 = vunpack.c.l.b16 %v448
    %v1840 = vunpack.c.h.b16 %v448
    %v1841 = vunpack.c.l.b16 %v449
    %v1842 = vunpack.c.h.b16 %v449
    %v1843 = vunpack.c.l.b16 %v450
    %v1844 = vunpack.c.h.b16 %v450
    %v1845 = vunpack.c.l.b16 %v451
    %v1846 = vunpack.c.h.b16 %v451
    %v1847 = vunpack.c.l.b16 %v452
    %v1848 = vunpack.c.h.b16 %v452
    %v1849 = vunpack.c.l.b16 %v453
    %v1850 = vunpack.c.h.b16 %v453
    %v1851 = vunpack.c.l.b16 %v454
    %v1852 = vunpack.c.h.b16 %v454
    %v1853 = vunpack.c.l.b16 %v455
    %v1854 = vunpack.c.h.b16 %v455
    %v1855 = vunpack.c.l.b16 %v456
    %v1856 = vunpack.c.h.b16 %v456
    %v1857 = vunpack.c.l.b16 %v457
    %v1858 = vunpack.c.h.b16 %v457
    %v1859 = vunpack.c.l.b16 %v458
    %v1860 = vunpack.c.h.b16 %v458
    %v1861 = vunpack.c.l.b16 %v459
    %v1862 = vunpack.c.h.b16 %v459
    %v1863 = vunpack.c.l.b16 %v460
    %v1864 = vunpack.c.h.b16 %v460
    %v1865 = vunpack.c.l.b16 %v461
    %v1866 = vunpack.c.h.b16 %v461
    %v1867 = vunpack.c.l.b16 %v462
    %v1868 = vunpack.c.h.b16 %v462
    %v1869 = vunpack.c.l.b16 %v463
    %v1870 = vunpack.c.h.b16 %v463
    %v1871 = vunpack.c.l.b16 %v464
    %v1872 = vunpack.c.h.b16 %v464
    %v1873 = vunpack.c.l.b16 %v465
    %v1874 = vunpack.c.h.b16 %v465
    %v1875 = vunpack.c.l.b16 %v466
    %v1876 = vunpack.c.h.b16 %v466
    %v1877 = vunpack.c.l.b16 %v467
    %v1878 = vunpack.c.h.b16 %v467
    %v1879 = vunpack.c.l.b16 %v468
    %v1880 = vunpack.c.h.b16 %v468
    %v1881 = vunpack.c.l.b16 %v469
    %v1882 = vunpack.c.h.b16 %v469
    %v1883 = vunpack.c.l.b16 %v470
    %v1884 = vunpack.c.h.b16 %v470
    %v1885 = vunpack.c.l.b16 %v471
    %v1886 = vunpack.c.h.b16 %v471
    %v1887 = vunpack.c.l.b16 %v472
    %v1888 = vunpack.c.h.b16 %v472
    %v1889 = vunpack.c.l.b16 %v473
    %v1890 = vunpack.c.h.b16 %v473
    %v1891 = vunpack.c.l.b16 %v474
    %v1892 = vunpack.c.h.b16 %v474
    %v1893 = vunpack.c.l.b16 %v475
    %v1894 = vunpack.c.h.b16 %v475
    %v1895 = vunpack.c.l.b16 %v476
    %v1896 = vunpack.c.h.b16 %v476
    %v1897 = vunpack.c.l.b16 %v477
    %v1898 = vunpack.c.h.b16 %v477
    %v1899 = vunpack.c.l.b16 %v478
    %v1900 = vunpack.c.h.b16 %v478
    %v1901 = vunpack.c.l.b16 %v479
    %v1902 = vunpack.c.h.b16 %v479
    %v1903 = vunpack.c.l.b16 %v480
    %v1904 = vunpack.c.h.b16 %v480
    %v1905 = vunpack.c.l.b16 %v481
    %v1906 = vunpack.c.h.b16 %v481
    %v1907 = vunpack.c.l.b16 %v482
    %v1908 = vunpack.c.h.b16 %v482
    %v1909 = vunpack.c.l.b16 %v483
    %v1910 = vunpack.c.h.b16 %v483
    %v1911 = vunpack.c.l.b16 %v484
    %v1912 = vunpack.c.h.b16 %v484
    %v1913 = vunpack.c.l.b16 %v485
    %v1914 = vunpack.c.h.b16 %v485
    %v1915 = vunpack.c.l.b16 %v486
    %v1916 = vunpack.c.h.b16 %v486
    %v1917 = vunpack.c.l.b16 %v487
    %v1918 = vunpack.c.h.b16 %v487
    %v1919 = vunpack.c.l.b16 %v488
    %v1920 = vunpack.c.h.b16 %v488
    %v1921 = vunpack.c.l.b16 %v489
    %v1922 = vunpack.c.h.b16 %v489
    %v1923 = vunpack.c.l.b16 %v490
    %v1924 = vunpack.c.h.b16 %v490
    %v1925 = vunpack.c.l.b16 %v491
    %v1926 = vunpack.c.h.b16 %v491
    %v1927 = vunpack.c.l.b16 %v492
    %v1928 = vunpack.c.h.b16 %v492
    %v1929 = vunpack.c.l.b16 %v493
    %v1930 = vunpack.c.h.b16 %v493
    %v1931 = vunpack.c.l.b16 %v494
    %v1932 = vunpack.c.h.b16 %v494
    %v1933 = vunpack.c.l.b16 %v495
    %v1934 = vunpack.c.h.b16 %v495
    %v1935 = vunpack.c.l.b16 %v496
    %v1936 = vunpack.c.h.b16 %v496
    %v1937 = vunpack.c.l.b16 %v497
    %v1938 = vunpack.c.h.b16 %v497
    %v1939 = vunpack.c.l.b16 %v498
    %v1940 = vunpack.c.h.b16 %v498
    %v1941 = vunpack.c.l.b16 %v499
    %v1942 = vunpack.c.h.b16 %v499
    %v1943 = vunpack.c.l.b16 %v500
    %v1944 = vunpack.c.h.b16 %v500
    %v1945 = vunpack.c.l.b16 %v501
    %v1946 = vunpack.c.h.b16 %v501
    %v1947 = vunpack.c.l.b16 %v502
    %v1948 = vunpack.c.h.b16 %v502
    %v1949 = vunpack.c.l.b16 %v503
    %v1950 = vunpack.c.h.b16 %v503
    %v1951 = vunpack.c.l.b16 %v504
    %v1952 = vunpack.c.h.b16 %v504
    %v1953 = vunpack.c.l.b16 %v505
    %v1954 = vunpack.c.h.b16 %v505
    %v1955 = vunpack.c.l.b16 %v506
    %v1956 = vunpack.c.h.b16 %v506
    %v1957 = vunpack.c.l.b16 %v507
    %v1958 = vunpack.c.h.b16 %v507
    %v1959 = vunpack.c.l.b16 %v508
    %v1960 = vunpack.c.h.b16 %v508
    %v1961 = vunpack.c.l.b16 %v509
    %v1962 = vunpack.c.h.b16 %v509
    %v1963 = vunpack.c.l.b16 %v510
    %v1964 = vunpack.c.h.b16 %v510
    %v1965 = vunpack.c.l.b16 %v511
    %v1966 = vunpack.c.h.b16 %v511
    %v1967 = vunpack.c.l.b16 %v512
    %v1968 = vunpack.c.h.b16 %v512
    %v1969 = vunpack.c.l.b16 %v513
    %v1970 = vunpack.c.h.b16 %v513
    %v1971 = vunpack.c.l.b16 %v514
    %v1972 = vunpack.c.h.b16 %v514
    %v1973 = vunpack.c.l.b16 %v515
    %v1974 = vunpack.c.h.b16 %v515
    %v1975 = vunpack.c.l.b16 %v516
    %v1976 = vunpack.c.h.b16 %v516
    %v1977 = vunpack.c.l.b16 %v517
    %v1978 = vunpack.c.h.b16 %v517
    %v1979 = vunpack.c.l.b16 %v518
    %v1980 = vunpack.c.h.b16 %v518
    %v1981 = vunpack.c.l.b16 %v519
    %v1982 = vunpack.c.h.b16 %v519
    %v1983 = vunpack.c.l.b16 %v520
    %v1984 = vunpack.c.h.b16 %v520
    %v1985 = vunpack.c.l.b16 %v521
    %v1986 = vunpack.c.h.b16 %v521
    %v1987 = vunpack.c.l.b16 %v522
    %v1988 = vunpack.c.h.b16 %v522
    %v1989 = vunpack.c.l.b16 %v523
    %v1990 = vunpack.c.h.b16 %v523
    %v1991 = vunpack.c.l.b16 %v524
    %v1992 = vunpack.c.h.b16 %v524
    %v1993 = vunpack.c.l.b16 %v525
    %v1994 = vunpack.c.h.b16 %v525
    %v1995 = vunpack.c.l.b16 %v526
    %v1996 = vunpack.c.h.b16 %v526
    %v1997 = vunpack.c.l.b16 %v527
    %v1998 = vunpack.c.h.b16 %v527
    %v1999 = vunpack.c.l.b16 %v528
    %v2000 = vunpack.c.h.b16 %v528
    %v2001 = vunpack.c.l.b16 %v529
    %v2002 = vunpack.c.h.b16 %v529
    %v2003 = vunpack.c.l.b16 %v530
    %v2004 = vunpack.c.h.b16 %v530
    %v2005 = vunpack.c.l.b16 %v531
    %v2006 = vunpack.c.h.b16 %v531
    %v2007 = vunpack.c.l.b16 %v532
    %v2008 = vunpack.c.h.b16 %v532
    %v2009 = vunpack.c.l.b16 %v533
    %v2010 = vunpack.c.h.b16 %v533
    %v2011 = vunpack.c.l.b16 %v534
    %v2012 = vunpack.c.h.b16 %v534
    %v2013 = vunpack.c.l.b16 %v535
    %v2014 = vunpack.c.h.b16 %v535
    %v2015 = vunpack.c.l.b16 %v536
    %v2016 = vunpack.c.h.b16 %v536
    %v2017 = vunpack.c.l.b16 %v537
    %v2018 = vunpack.c.h.b16 %v537
    %v2019 = vunpack.c.l.b16 %v538
    %v2020 = vunpack.c.h.b16 %v538
    %v2021 = vunpack.c.l.b16 %v539
    %v2022 = vunpack.c.h.b16 %v539
    %v2023 = vunpack.c.l.b16 %v540
    %v2024 = vunpack.c.h.b16 %v540
    %v2025 = vunpack.c.l.b16 %v541
    %v2026 = vunpack.c.h.b16 %v541
    %v2027 = vunpack.c.l.b16 %v542
    %v2028 = vunpack.c.h.b16 %v542
    %v2029 = vunpack.c.l.b16 %v543
    %v2030 = vunpack.c.h.b16 %v543
    %v2031 = vunpack.c.l.b16 %v544
    %v2032 = vunpack.c.h.b16 %v544
    %v2033 = vunpack.c.l.b16 %v545
    %v2034 = vunpack.c.h.b16 %v545
    %v2035 = vunpack.c.l.b16 %v546
    %v2036 = vunpack.c.h.b16 %v546
    %v2037 = vunpack.c.l.b16 %v547
    %v2038 = vunpack.c.h.b16 %v547
    %v2039 = vunpack.c.l.b16 %v548
    %v2040 = vunpack.c.h.b16 %v548
    %v2041 = vunpack.c.l.b16 %v549
    %v2042 = vunpack.c.h.b16 %v549
    %v2043 = vunpack.c.l.b16 %v550
    %v2044 = vunpack.c.h.b16 %v550
    %v2045 = vunpack.c.l.b16 %v551
    %v2046 = vunpack.c.h.b16 %v551
    %v2047 = vunpack.c.l.b16 %v552
    %v2048 = vunpack.c.h.b16 %v552
    %v2049 = vunpack.c.l.b16 %v553
    %v2050 = vunpack.c.h.b16 %v553
    %v2051 = vunpack.c.l.b16 %v554
    %v2052 = vunpack.c.h.b16 %v554
    %v2053 = vunpack.c.l.b16 %v555
    %v2054 = vunpack.c.h.b16 %v555
    %v2055 = vunpack.c.l.b16 %v556
    %v2056 = vunpack.c.h.b16 %v556
    %v2057 = vunpack.c.l.b16 %v557
    %v2058 = vunpack.c.h.b16 %v557
    %v2059 = vunpack.c.l.b16 %v558
    %v2060 = vunpack.c.h.b16 %v558
    %v2061 = vunpack.c.l.b16 %v559
    %v2062 = vunpack.c.h.b16 %v559
    %v2063 = vunpack.c.l.b16 %v560
    %v2064 = vunpack.c.h.b16 %v560
    %v2065 = vunpack.c.l.b16 %v561
    %v2066 = vunpack.c.h.b16 %v561
    %v2067 = vunpack.c.l.b16 %v562
    %v2068 = vunpack.c.h.b16 %v562
    %v2069 = vunpack.c.l.b16 %v563
    %v2070 = vunpack.c.h.b16 %v563
    %v2071 = vunpack.c.l.b16 %v564
    %v2072 = vunpack.c.h.b16 %v564
    %v2073 = vunpack.c.l.b16 %v565
    %v2074 = vunpack.c.h.b16 %v565
    %v2075 = vunpack.c.l.b16 %v566
    %v2076 = vunpack.c.h.b16 %v566
    %v2077 = vunpack.c.l.b16 %v567
    %v2078 = vunpack.c.h.b16 %v567
    %v2079 = vunpack.c.l.b16 %v568
    %v2080 = vunpack.c.h.b16 %v568
    %v2081 = vunpack.c.l.b16 %v569
    %v2082 = vunpack.c.h.b16 %v569
    %v2083 = vunpack.c.l.b16 %v570
    %v2084 = vunpack.c.h.b16 %v570
    %v2085 = vunpack.c.l.b16 %v571
    %v2086 = vunpack.c.h.b16 %v571
    %v2087 = vunpack.c.l.b16 %v572
    %v2088 = vunpack.c.h.b16 %v572
    %v2089 = vunpack.c.l.b16 %v573
    %v2090 = vunpack.c.h.b16 %v573
    %v2091 = vunpack.c.l.b16 %v574
    %v2092 = vunpack.c.h.b16 %v574
    %v2093 = vunpack.c.l.b16 %v575
    %v2094 = vunpack.c.h.b16 %v575
    %v2095 = vunpack.c.l.b16 %v576
    %v2096 = vunpack.c.h.b16 %v576
    %v2097 = vunpack.c.l.b16 %v577
    %v2098 = vunpack.c.h.b16 %v577
    %v2099 = vunpack.c.l.b16 %v578
    %v2100 = vunpack.c.h.b16 %v578
    %v2101 = vunpack.c.l.b16 %v579
    %v2102 = vunpack.c.h.b16 %v579
    %v2103 = vunpack.c.l.b16 %v580
    %v2104 = vunpack.c.h.b16 %v580
    %v2105 = vunpack.c.l.b16 %v581
    %v2106 = vunpack.c.h.b16 %v581
    %v2107 = vunpack.c.l.b16 %v582
    %v2108 = vunpack.c.h.b16 %v582
    %v2109 = vunpack.c.l.b16 %v583
    %v2110 = vunpack.c.h.b16 %v583
    %v2111 = vunpack.c.l.b16 %v584
    %v2112 = vunpack.c.h.b16 %v584
    %v2113 = vunpack.c.l.b16 %v585
    %v2114 = vunpack.c.h.b16 %v585
    %v2115 = vunpack.c.l.b16 %v586
    %v2116 = vunpack.c.h.b16 %v586
    %v2117 = vunpack.c.l.b16 %v587
    %v2118 = vunpack.c.h.b16 %v587
    %v2119 = vunpack.c.l.b16 %v588
    %v2120 = vunpack.c.h.b16 %v588
    %v2121 = vunpack.c.l.b16 %v589
    %v2122 = vunpack.c.h.b16 %v589
    %v2123 = vunpack.c.l.b16 %v590
    %v2124 = vunpack.c.h.b16 %v590
    %v2125 = vunpack.c.l.b16 %v591
    %v2126 = vunpack.c.h.b16 %v591
    %v2127 = vunpack.c.l.b16 %v592
    %v2128 = vunpack.c.h.b16 %v592
    %v2129 = vunpack.c.l.b16 %v593
    %v2130 = vunpack.c.h.b16 %v593
    %v2131 = vunpack.c.l.b16 %v594
    %v2132 = vunpack.c.h.b16 %v594
    %v2133 = vunpack.c.l.b16 %v595
    %v2134 = vunpack.c.h.b16 %v595
    %v2135 = vunpack.c.l.b16 %v596
    %v2136 = vunpack.c.h.b16 %v596
    %v2137 = vunpack.c.l.b16 %v597
    %v2138 = vunpack.c.h.b16 %v597
    %v2139 = vunpack.c.l.b16 %v598
    %v2140 = vunpack.c.h.b16 %v598
    %v2141 = vunpack.c.l.b16 %v599
    %v2142 = vunpack.c.h.b16 %v599
    %v2143 = vunpack.c.l.b16 %v600
    %v2144 = vunpack.c.h.b16 %v600
    %v2145 = vunpack.c.l.b16 %v601
    %v2146 = vunpack.c.h.b16 %v601
    %v2147 = vunpack.c.l.b16 %v602
    %v2148 = vunpack.c.h.b16 %v602
    %v2149 = vunpack.c.l.b16 %v603
    %v2150 = vunpack.c.h.b16 %v603
    %v2151 = vunpack.c.l.b16 %v604
    %v2152 = vunpack.c.h.b16 %v604
    %v2153 = vunpack.c.l.b16 %v605
    %v2154 = vunpack.c.h.b16 %v605
    %v2155 = vunpack.c.l.b16 %v606
    %v2156 = vunpack.c.h.b16 %v606
    %v2157 = vunpack.c.l.b16 %v607
    %v2158 = vunpack.c.h.b16 %v607
    %v2159 = vunpack.c.l.b16 %v608
    %v2160 = vunpack.c.h.b16 %v608
    %v2161 = vunpack.c.l.b16 %v609
    %v2162 = vunpack.c.h.b16 %v609
    %v2163 = vunpack.c.l.b16 %v610
    %v2164 = vunpack.c.h.b16 %v610
    %v2165 = vunpack.c.l.b16 %v611
    %v2166 = vunpack.c.h.b16 %v611
    %v2167 = vunpack.c.l.b16 %v612
    %v2168 = vunpack.c.h.b16 %v612
    %v2169 = vunpack.c.l.b16 %v613
    %v2170 = vunpack.c.h.b16 %v613
    %v2171 = vunpack.c.l.b16 %v614
    %v2172 = vunpack.c.h.b16 %v614
    %v2173 = vunpack.c.l.b16 %v615
    %v2174 = vunpack.c.h.b16 %v615
    %v2175 = vunpack.c.l.b16 %v616
    %v2176 = vunpack.c.h.b16 %v616
    %v2177 = vunpack.c.l.b16 %v617
    %v2178 = vunpack.c.h.b16 %v617
    %v2179 = vunpack.c.l.b16 %v618
    %v2180 = vunpack.c.h.b16 %v618
    %v2181 = vunpack.c.l.b16 %v619
    %v2182 = vunpack.c.h.b16 %v619
    %v2183 = vunpack.c.l.b16 %v620
    %v2184 = vunpack.c.h.b16 %v620
    %v2185 = vpack.c.b16 %v1169, %v1161
    %v2186 = vpack.c.b16 %v1170, %v1162
    %v2187 = vpack.c.b16 %v1171, %v1163
    %v2188 = vpack.c.b16 %v1172, %v1164
    %v2189 = vpack.c.b16 %v1173, %v1165
    %v2190 = vpack.c.b16 %v1174, %v1166
    %v2191 = vpack.c.b16 %v1175, %v1167
    %v2192 = vpack.c.b16 %v1176, %v1168
    %v2193 = vpack.c.b16 %v1185, %v1177
    %v2194 = vpack.c.b16 %v1186, %v1178
    %v2195 = vpack.c.b16 %v1187, %v1179
    %v2196 = vpack.c.b16 %v1188, %v1180
    %v2197 = vpack.c.b16 %v1189, %v1181
    %v2198 = vpack.c.b16 %v1190, %v1182
    %v2199 = vpack.c.b16 %v1191, %v1183
    %v2200 = vpack.c.b16 %v1192, %v1184
    %v2201 = vpack.c.b16 %v1201, %v1193
    %v2202 = vpack.c.b16 %v1202, %v1194
    %v2203 = vpack.c.b16 %v1203, %v1195
    %v2204 = vpack.c.b16 %v1204, %v1196
    %v2205 = vpack.c.b16 %v1205, %v1197
    %v2206 = vpack.c.b16 %v1206, %v1198
    %v2207 = vpack.c.b16 %v1207, %v1199
    %v2208 = vpack.c.b16 %v1208, %v1200
    %v2209 = vpack.c.b16 %v1217, %v1209
    %v2210 = vpack.c.b16 %v1218, %v1210
    %v2211 = vpack.c.b16 %v1219, %v1211
    %v2212 = vpack.c.b16 %v1220, %v1212
    %v2213 = vpack.c.b16 %v1221, %v1213
    %v2214 = vpack.c.b16 %v1222, %v1214
    %v2215 = vpack.c.b16 %v1223, %v1215
    %v2216 = vpack.c.b16 %v1224, %v1216
    %v2217 = vpack.c.b16 %v1233, %v1225
    %v2218 = vpack.c.b16 %v1234, %v1226
    %v2219 = vpack.c.b16 %v1235, %v1227
    %v2220 = vpack.c.b16 %v1236, %v1228
    %v2221 = vpack.c.b16 %v1237, %v1229
    %v2222 = vpack.c.b16 %v1238, %v1230
    %v2223 = vpack.c.b16 %v1239, %v1231
    %v2224 = vpack.c.b16 %v1240, %v1232
    %v2225 = vpack.c.b16 %v1249, %v1241
    %v2226 = vpack.c.b16 %v1250, %v1242
    %v2227 = vpack.c.b16 %v1251, %v1243
    %v2228 = vpack.c.b16 %v1252, %v1244
    %v2229 = vpack.c.b16 %v1253, %v1245
    %v2230 = vpack.c.b16 %v1254, %v1246
    %v2231 = vpack.c.b16 %v1255, %v1247
    %v2232 = vpack.c.b16 %v1256, %v1248
    %v2233 = vpack.c.b16 %v1265, %v1257
    %v2234 = vpack.c.b16 %v1266, %v1258
    %v2235 = vpack.c.b16 %v1267, %v1259
    %v2236 = vpack.c.b16 %v1268, %v1260
    %v2237 = vpack.c.b16 %v1269, %v1261
    %v2238 = vpack.c.b16 %v1270, %v1262
    %v2239 = vpack.c.b16 %v1271, %v1263
    %v2240 = vpack.c.b16 %v1272, %v1264
    %v2241 = vpack.c.b16 %v1281, %v1273
    %v2242 = vpack.c.b16 %v1282, %v1274
    %v2243 = vpack.c.b16 %v1283, %v1275
    %v2244 = vpack.c.b16 %v1284, %v1276
    %v2245 = vpack.c.b16 %v1285, %v1277
    %v2246 = vpack.c.b16 %v1286, %v1278
    %v2247 = vpack.c.b16 %v1287, %v1279
    %v2248 = vpack.c.b16 %v1288, %v1280
    %v2249 = vpack.c.b16 %v1297, %v1289
    %v2250 = vpack.c.b16 %v1298, %v1290
    %v2251 = vpack.c.b16 %v1299, %v1291
    %v2252 = vpack.c.b16 %v1300, %v1292
    %v2253 = vpack.c.b16 %v1301, %v1293
    %v2254 = vpack.c.b16 %v1302, %v1294
    %v2255 = vpack.c.b16 %v1303, %v1295
    %v2256 = vpack.c.b16 %v1304, %v1296
    %v2257 = vpack.c.b16 %v1313, %v1305
    %v2258 = vpack.c.b16 %v1314, %v1306
    %v2259 = vpack.c.b16 %v1315, %v1307
    %v2260 = vpack.c.b16 %v1316, %v1308
    %v2261 = vpack.c.b16 %v1317, %v1309
    %v2262 = vpack.c.b16 %v1318, %v1310
    %v2263 = vpack.c.b16 %v1319, %v1311
    %v2264 = vpack.c.b16 %v1320, %v1312
    %v2265 = vpack.c.b16 %v1329, %v1321
    %v2266 = vpack.c.b16 %v1330, %v1322
    %v2267 = vpack.c.b16 %v1331, %v1323
    %v2268 = vpack.c.b16 %v1332, %v1324
    %v2269 = vpack.c.b16 %v1333, %v1325
    %v2270 = vpack.c.b16 %v1334, %v1326
    %v2271 = vpack.c.b16 %v1335, %v1327
    %v2272 = vpack.c.b16 %v1336, %v1328
    %v2273 = vpack.c.b16 %v1345, %v1337
    %v2274 = vpack.c.b16 %v1346, %v1338
    %v2275 = vpack.c.b16 %v1347, %v1339
    %v2276 = vpack.c.b16 %v1348, %v1340
    %v2277 = vpack.c.b16 %v1349, %v1341
    %v2278 = vpack.c.b16 %v1350, %v1342
    %v2279 = vpack.c.b16 %v1351, %v1343
    %v2280 = vpack.c.b16 %v1352, %v1344
    %v2281 = vpack.c.b16 %v1361, %v1353
    %v2282 = vpack.c.b16 %v1362, %v1354
    %v2283 = vpack.c.b16 %v1363, %v1355
    %v2284 = vpack.c.b16 %v1364, %v1356
    %v2285 = vpack.c.b16 %v1365, %v1357
    %v2286 = vpack.c.b16 %v1366, %v1358
    %v2287 = vpack.c.b16 %v1367, %v1359
    %v2288 = vpack.c.b16 %v1368, %v1360
    %v2289 = vpack.c.b16 %v1377, %v1369
    %v2290 = vpack.c.b16 %v1378, %v1370
    %v2291 = vpack.c.b16 %v1379, %v1371
    %v2292 = vpack.c.b16 %v1380, %v1372
    %v2293 = vpack.c.b16 %v1381, %v1373
    %v2294 = vpack.c.b16 %v1382, %v1374
    %v2295 = vpack.c.b16 %v1383, %v1375
    %v2296 = vpack.c.b16 %v1384, %v1376
    %v2297 = vpack.c.b16 %v1393, %v1385
    %v2298 = vpack.c.b16 %v1394, %v1386
    %v2299 = vpack.c.b16 %v1395, %v1387
    %v2300 = vpack.c.b16 %v1396, %v1388
    %v2301 = vpack.c.b16 %v1397, %v1389
    %v2302 = vpack.c.b16 %v1398, %v1390
    %v2303 = vpack.c.b16 %v1399, %v1391
    %v2304 = vpack.c.b16 %v1400, %v1392
    %v2305 = vpack.c.b16 %v1409, %v1401
    %v2306 = vpack.c.b16 %v1410, %v1402
    %v2307 = vpack.c.b16 %v1411, %v1403
    %v2308 = vpack.c.b16 %v1412, %v1404
    %v2309 = vpack.c.b16 %v1413, %v1405
    %v2310 = vpack.c.b16 %v1414, %v1406
    %v2311 = vpack.c.b16 %v1415, %v1407
    %v2312 = vpack.c.b16 %v1416, %v1408
    %v2313 = vpack.c.b16 %v1425, %v1417
    %v2314 = vpack.c.b16 %v1426, %v1418
    %v2315 = vpack.c.b16 %v1427, %v1419
    %v2316 = vpack.c.b16 %v1428, %v1420
    %v2317 = vpack.c.b16 %v1429, %v1421
    %v2318 = vpack.c.b16 %v1430, %v1422
    %v2319 = vpack.c.b16 %v1431, %v1423
    %v2320 = vpack.c.b16 %v1432, %v1424
    %v2321 = vpack.c.b16 %v1441, %v1433
    %v2322 = vpack.c.b16 %v1442, %v1434
    %v2323 = vpack.c.b16 %v1443, %v1435
    %v2324 = vpack.c.b16 %v1444, %v1436
    %v2325 = vpack.c.b16 %v1445, %v1437
    %v2326 = vpack.c.b16 %v1446, %v1438
    %v2327 = vpack.c.b16 %v1447, %v1439
    %v2328 = vpack.c.b16 %v1448, %v1440
    %v2329 = vpack.c.b16 %v1457, %v1449
    %v2330 = vpack.c.b16 %v1458, %v1450
    %v2331 = vpack.c.b16 %v1459, %v1451
    %v2332 = vpack.c.b16 %v1460, %v1452
    %v2333 = vpack.c.b16 %v1461, %v1453
    %v2334 = vpack.c.b16 %v1462, %v1454
    %v2335 = vpack.c.b16 %v1463, %v1455
    %v2336 = vpack.c.b16 %v1464, %v1456
    %v2337 = vpack.c.b16 %v1473, %v1465
    %v2338 = vpack.c.b16 %v1474, %v1466
    %v2339 = vpack.c.b16 %v1475, %v1467
    %v2340 = vpack.c.b16 %v1476, %v1468
    %v2341 = vpack.c.b16 %v1477, %v1469
    %v2342 = vpack.c.b16 %v1478, %v1470
    %v2343 = vpack.c.b16 %v1479, %v1471
    %v2344 = vpack.c.b16 %v1480, %v1472
    %v2345 = vpack.c.b16 %v1489, %v1481
    %v2346 = vpack.c.b16 %v1490, %v1482
    %v2347 = vpack.c.b16 %v1491, %v1483
    %v2348 = vpack.c.b16 %v1492, %v1484
    %v2349 = vpack.c.b16 %v1493, %v1485
    %v2350 = vpack.c.b16 %v1494, %v1486
    %v2351 = vpack.c.b16 %v1495, %v1487
    %v2352 = vpack.c.b16 %v1496, %v1488
    %v2353 = vpack.c.b16 %v1505, %v1497
    %v2354 = vpack.c.b16 %v1506, %v1498
    %v2355 = vpack.c.b16 %v1507, %v1499
    %v2356 = vpack.c.b16 %v1508, %v1500
    %v2357 = vpack.c.b16 %v1509, %v1501
    %v2358 = vpack.c.b16 %v1510, %v1502
    %v2359 = vpack.c.b16 %v1511, %v1503
    %v2360 = vpack.c.b16 %v1512, %v1504
    %v2361 = vpack.c.b16 %v1521, %v1513
    %v2362 = vpack.c.b16 %v1522, %v1514
    %v2363 = vpack.c.b16 %v1523, %v1515
    %v2364 = vpack.c.b16 %v1524, %v1516
    %v2365 = vpack.c.b16 %v1525, %v1517
    %v2366 = vpack.c.b16 %v1526, %v1518
    %v2367 = vpack.c.b16 %v1527, %v1519
    %v2368 = vpack.c.b16 %v1528, %v1520
    %v2369 = vpack.c.b16 %v1537, %v1529
    %v2370 = vpack.c.b16 %v1538, %v1530
    %v2371 = vpack.c.b16 %v1539, %v1531
    %v2372 = vpack.c.b16 %v1540, %v1532
    %v2373 = vpack.c.b16 %v1541, %v1533
    %v2374 = vpack.c.b16 %v1542, %v1534
    %v2375 = vpack.c.b16 %v1543, %v1535
    %v2376 = vpack.c.b16 %v1544, %v1536
    %v2377 = vpack.c.b16 %v1553, %v1545
    %v2378 = vpack.c.b16 %v1554, %v1546
    %v2379 = vpack.c.b16 %v1555, %v1547
    %v2380 = vpack.c.b16 %v1556, %v1548
    %v2381 = vpack.c.b16 %v1557, %v1549
    %v2382 = vpack.c.b16 %v1558, %v1550
    %v2383 = vpack.c.b16 %v1559, %v1551
    %v2384 = vpack.c.b16 %v1560, %v1552
    %v2385 = vpack.c.b16 %v1569, %v1561
    %v2386 = vpack.c.b16 %v1570, %v1562
    %v2387 = vpack.c.b16 %v1571, %v1563
    %v2388 = vpack.c.b16 %v1572, %v1564
    %v2389 = vpack.c.b16 %v1573, %v1565
    %v2390 = vpack.c.b16 %v1574, %v1566
    %v2391 = vpack.c.b16 %v1575, %v1567
    %v2392 = vpack.c.b16 %v1576, %v1568
    %v2393 = vpack.c.b16 %v1585, %v1577
    %v2394 = vpack.c.b16 %v1586, %v1578
    %v2395 = vpack.c.b16 %v1587, %v1579
    %v2396 = vpack.c.b16 %v1588, %v1580
    %v2397 = vpack.c.b16 %v1589, %v1581
    %v2398 = vpack.c.b16 %v1590, %v1582
    %v2399 = vpack.c.b16 %v1591, %v1583
    %v2400 = vpack.c.b16 %v1592, %v1584
    %v2401 = vpack.c.b16 %v1601, %v1593
    %v2402 = vpack.c.b16 %v1602, %v1594
    %v2403 = vpack.c.b16 %v1603, %v1595
    %v2404 = vpack.c.b16 %v1604, %v1596
    %v2405 = vpack.c.b16 %v1605, %v1597
    %v2406 = vpack.c.b16 %v1606, %v1598
    %v2407 = vpack.c.b16 %v1607, %v1599
    %v2408 = vpack.c.b16 %v1608, %v1600
    %v2409 = vpack.c.b16 %v1617, %v1609
    %v2410 = vpack.c.b16 %v1618, %v1610
    %v2411 = vpack.c.b16 %v1619, %v1611
    %v2412 = vpack.c.b16 %v1620, %v1612
    %v2413 = vpack.c.b16 %v1621, %v1613
    %v2414 = vpack.c.b16 %v1622, %v1614
    %v2415 = vpack.c.b16 %v1623, %v1615
    %v2416 = vpack.c.b16 %v1624, %v1616
    %v2417 = vpack.c.b16 %v1633, %v1625
    %v2418 = vpack.c.b16 %v1634, %v1626
    %v2419 = vpack.c.b16 %v1635, %v1627
    %v2420 = vpack.c.b16 %v1636, %v1628
    %v2421 = vpack.c.b16 %v1637, %v1629
    %v2422 = vpack.c.b16 %v1638, %v1630
    %v2423 = vpack.c.b16 %v1639, %v1631
    %v2424 = vpack.c.b16 %v1640, %v1632
    %v2425 = vpack.c.b16 %v1649, %v1641
    %v2426 = vpack.c.b16 %v1650, %v1642
    %v2427 = vpack.c.b16 %v1651, %v1643
    %v2428 = vpack.c.b16 %v1652, %v1644
    %v2429 = vpack.c.b16 %v1653, %v1645
    %v2430 = vpack.c.b16 %v1654, %v1646
    %v2431 = vpack.c.b16 %v1655, %v1647
    %v2432 = vpack.c.b16 %v1656, %v1648
    %v2433 = vpack.c.b16 %v1665, %v1657
    %v2434 = vpack.c.b16 %v1666, %v1658
    %v2435 = vpack.c.b16 %v1667, %v1659
    %v2436 = vpack.c.b16 %v1668, %v1660
    %v2437 = vpack.c.b16 %v1669, %v1661
    %v2438 = vpack.c.b16 %v1670, %v1662
    %v2439 = vpack.c.b16 %v1671, %v1663
    %v2440 = vpack.c.b16 %v1672, %v1664
    %v2441 = vpack.c.b16 %v1681, %v1673
    %v2442 = vpack.c.b16 %v1682, %v1674
    %v2443 = vpack.c.b16 %v1683, %v1675
    %v2444 = vpack.c.b16 %v1684, %v1676
    %v2445 = vpack.c.b16 %v1685, %v1677
    %v2446 = vpack.c.b16 %v1686, %v1678
    %v2447 = vpack.c.b16 %v1687, %v1679
    %v2448 = vpack.c.b16 %v1688, %v1680
    %v2449 = vpack.c.b16 %v1697, %v1689
    %v2450 = vpack.c.b16 %v1698, %v1690
    %v2451 = vpack.c.b16 %v1699, %v1691
    %v2452 = vpack.c.b16 %v1700, %v1692
    %v2453 = vpack.c.b16 %v1701, %v1693
    %v2454 = vpack.c.b16 %v1702, %v1694
    %v2455 = vpack.c.b16 %v1703, %v1695
    %v2456 = vpack.c.b16 %v1704, %v1696
    %v2457 = vpack.c.b16 %v1713, %v1705
    %v2458 = vpack.c.b16 %v1714, %v1706
    %v2459 = vpack.c.b16 %v1715, %v1707
    %v2460 = vpack.c.b16 %v1716, %v1708
    %v2461 = vpack.c.b16 %v1717, %v1709
    %v2462 = vpack.c.b16 %v1718, %v1710
    %v2463 = vpack.c.b16 %v1719, %v1711
    %v2464 = vpack.c.b16 %v1720, %v1712
    %v2465 = vpack.c.b16 %v1729, %v1721
    %v2466 = vpack.c.b16 %v1730, %v1722
    %v2467 = vpack.c.b16 %v1731, %v1723
    %v2468 = vpack.c.b16 %v1732, %v1724
    %v2469 = vpack.c.b16 %v1733, %v1725
    %v2470 = vpack.c.b16 %v1734, %v1726
    %v2471 = vpack.c.b16 %v1735, %v1727
    %v2472 = vpack.c.b16 %v1736, %v1728
    %v2473 = vpack.c.b16 %v1745, %v1737
    %v2474 = vpack.c.b16 %v1746, %v1738
    %v2475 = vpack.c.b16 %v1747, %v1739
    %v2476 = vpack.c.b16 %v1748, %v1740
    %v2477 = vpack.c.b16 %v1749, %v1741
    %v2478 = vpack.c.b16 %v1750, %v1742
    %v2479 = vpack.c.b16 %v1751, %v1743
    %v2480 = vpack.c.b16 %v1752, %v1744
    %v2481 = vpack.c.b16 %v1761, %v1753
    %v2482 = vpack.c.b16 %v1762, %v1754
    %v2483 = vpack.c.b16 %v1763, %v1755
    %v2484 = vpack.c.b16 %v1764, %v1756
    %v2485 = vpack.c.b16 %v1765, %v1757
    %v2486 = vpack.c.b16 %v1766, %v1758
    %v2487 = vpack.c.b16 %v1767, %v1759
    %v2488 = vpack.c.b16 %v1768, %v1760
    %v2489 = vpack.c.b16 %v1777, %v1769
    %v2490 = vpack.c.b16 %v1778, %v1770
    %v2491 = vpack.c.b16 %v1779, %v1771
    %v2492 = vpack.c.b16 %v1780, %v1772
    %v2493 = vpack.c.b16 %v1781, %v1773
    %v2494 = vpack.c.b16 %v1782, %v1774
    %v2495 = vpack.c.b16 %v1783, %v1775
    %v2496 = vpack.c.b16 %v1784, %v1776
    %v2497 = vpack.c.b16 %v1793, %v1785
    %v2498 = vpack.c.b16 %v1794, %v1786
    %v2499 = vpack.c.b16 %v1795, %v1787
    %v2500 = vpack.c.b16 %v1796, %v1788
    %v2501 = vpack.c.b16 %v1797, %v1789
    %v2502 = vpack.c.b16 %v1798, %v1790
    %v2503 = vpack.c.b16 %v1799, %v1791
    %v2504 = vpack.c.b16 %v1800, %v1792
    %v2505 = vpack.c.b16 %v1809, %v1801
    %v2506 = vpack.c.b16 %v1810, %v1802
    %v2507 = vpack.c.b16 %v1811, %v1803
    %v2508 = vpack.c.b16 %v1812, %v1804
    %v2509 = vpack.c.b16 %v1813, %v1805
    %v2510 = vpack.c.b16 %v1814, %v1806
    %v2511 = vpack.c.b16 %v1815, %v1807
    %v2512 = vpack.c.b16 %v1816, %v1808
    %v2513 = vpack.c.b16 %v1825, %v1817
    %v2514 = vpack.c.b16 %v1826, %v1818
    %v2515 = vpack.c.b16 %v1827, %v1819
    %v2516 = vpack.c.b16 %v1828, %v1820
    %v2517 = vpack.c.b16 %v1829, %v1821
    %v2518 = vpack.c.b16 %v1830, %v1822
    %v2519 = vpack.c.b16 %v1831, %v1823
    %v2520 = vpack.c.b16 %v1832, %v1824
    %v2521 = vpack.c.b16 %v1841, %v1833
    %v2522 = vpack.c.b16 %v1842, %v1834
    %v2523 = vpack.c.b16 %v1843, %v1835
    %v2524 = vpack.c.b16 %v1844, %v1836
    %v2525 = vpack.c.b16 %v1845, %v1837
    %v2526 = vpack.c.b16 %v1846, %v1838
    %v2527 = vpack.c.b16 %v1847, %v1839
    %v2528 = vpack.c.b16 %v1848, %v1840
    %v2529 = vpack.c.b16 %v1857, %v1849
    %v2530 = vpack.c.b16 %v1858, %v1850
    %v2531 = vpack.c.b16 %v1859, %v1851
    %v2532 = vpack.c.b16 %v1860, %v1852
    %v2533 = vpack.c.b16 %v1861, %v1853
    %v2534 = vpack.c.b16 %v1862, %v1854
    %v2535 = vpack.c.b16 %v1863, %v1855
    %v2536 = vpack.c.b16 %v1864, %v1856
    %v2537 = vpack.c.b16 %v1873, %v1865
    %v2538 = vpack.c.b16 %v1874, %v1866
    %v2539 = vpack.c.b16 %v1875, %v1867
    %v2540 = vpack.c.b16 %v1876, %v1868
    %v2541 = vpack.c.b16 %v1877, %v1869
    %v2542 = vpack.c.b16 %v1878, %v1870
    %v2543 = vpack.c.b16 %v1879, %v1871
    %v2544 = vpack.c.b16 %v1880, %v1872
    %v2545 = vpack.c.b16 %v1889, %v1881
    %v2546 = vpack.c.b16 %v1890, %v1882
    %v2547 = vpack.c.b16 %v1891, %v1883
    %v2548 = vpack.c.b16 %v1892, %v1884
    %v2549 = vpack.c.b16 %v1893, %v1885
    %v2550 = vpack.c.b16 %v1894, %v1886
    %v2551 = vpack.c.b16 %v1895, %v1887
    %v2552 = vpack.c.b16 %v1896, %v1888
    %v2553 = vpack.c.b16 %v1905, %v1897
    %v2554 = vpack.c.b16 %v1906, %v1898
    %v2555 = vpack.c.b16 %v1907, %v1899
    %v2556 = vpack.c.b16 %v1908, %v1900
    %v2557 = vpack.c.b16 %v1909, %v1901
    %v2558 = vpack.c.b16 %v1910, %v1902
    %v2559 = vpack.c.b16 %v1911, %v1903
    %v2560 = vpack.c.b16 %v1912, %v1904
    %v2561 = vpack.c.b16 %v1921, %v1913
    %v2562 = vpack.c.b16 %v1922, %v1914
    %v2563 = vpack.c.b16 %v1923, %v1915
    %v2564 = vpack.c.b16 %v1924, %v1916
    %v2565 = vpack.c.b16 %v1925, %v1917
    %v2566 = vpack.c.b16 %v1926, %v1918
    %v2567 = vpack.c.b16 %v1927, %v1919
    %v2568 = vpack.c.b16 %v1928, %v1920
    %v2569 = vpack.c.b16 %v1937, %v1929
    %v2570 = vpack.c.b16 %v1938, %v1930
    %v2571 = vpack.c.b16 %v1939, %v1931
    %v2572 = vpack.c.b16 %v1940, %v1932
    %v2573 = vpack.c.b16 %v1941, %v1933
    %v2574 = vpack.c.b16 %v1942, %v1934
    %v2575 = vpack.c.b16 %v1943, %v1935
    %v2576 = vpack.c.b16 %v1944, %v1936
    %v2577 = vpack.c.b16 %v1953, %v1945
    %v2578 = vpack.c.b16 %v1954, %v1946
    %v2579 = vpack.c.b16 %v1955, %v1947
    %v2580 = vpack.c.b16 %v1956, %v1948
    %v2581 = vpack.c.b16 %v1957, %v1949
    %v2582 = vpack.c.b16 %v1958, %v1950
    %v2583 = vpack.c.b16 %v1959, %v1951
    %v2584 = vpack.c.b16 %v1960, %v1952
    %v2585 = vpack.c.b16 %v1969, %v1961
    %v2586 = vpack.c.b16 %v1970, %v1962
    %v2587 = vpack.c.b16 %v1971, %v1963
    %v2588 = vpack.c.b16 %v1972, %v1964
    %v2589 = vpack.c.b16 %v1973, %v1965
    %v2590 = vpack.c.b16 %v1974, %v1966
    %v2591 = vpack.c.b16 %v1975, %v1967
    %v2592 = vpack.c.b16 %v1976, %v1968
    %v2593 = vpack.c.b16 %v1985, %v1977
    %v2594 = vpack.c.b16 %v1986, %v1978
    %v2595 = vpack.c.b16 %v1987, %v1979
    %v2596 = vpack.c.b16 %v1988, %v1980
    %v2597 = vpack.c.b16 %v1989, %v1981
    %v2598 = vpack.c.b16 %v1990, %v1982
    %v2599 = vpack.c.b16 %v1991, %v1983
    %v2600 = vpack.c.b16 %v1992, %v1984
    %v2601 = vpack.c.b16 %v2001, %v1993
    %v2602 = vpack.c.b16 %v2002, %v1994
    %v2603 = vpack.c.b16 %v2003, %v1995
    %v2604 = vpack.c.b16 %v2004, %v1996
    %v2605 = vpack.c.b16 %v2005, %v1997
    %v2606 = vpack.c.b16 %v2006, %v1998
    %v2607 = vpack.c.b16 %v2007, %v1999
    %v2608 = vpack.c.b16 %v2008, %v2000
    %v2609 = vpack.c.b16 %v2017, %v2009
    %v2610 = vpack.c.b16 %v2018, %v2010
    %v2611 = vpack.c.b16 %v2019, %v2011
    %v2612 = vpack.c.b16 %v2020, %v2012
    %v2613 = vpack.c.b16 %v2021, %v2013
    %v2614 = vpack.c.b16 %v2022, %v2014
    %v2615 = vpack.c.b16 %v2023, %v2015
    %v2616 = vpack.c.b16 %v2024, %v2016
    %v2617 = vpack.c.b16 %v2033, %v2025
    %v2618 = vpack.c.b16 %v2034, %v2026
    %v2619 = vpack.c.b16 %v2035, %v2027
    %v2620 = vpack.c.b16 %v2036, %v2028
    %v2621 = vpack.c.b16 %v2037, %v2029
    %v2622 = vpack.c.b16 %v2038, %v2030
    %v2623 = vpack.c.b16 %v2039, %v2031
    %v2624 = vpack.c.b16 %v2040, %v2032
    %v2625 = vpack.c.b16 %v2049, %v2041
    %v2626 = vpack.c.b16 %v2050, %v2042
    %v2627 = vpack.c.b16 %v2051, %v2043
    %v2628 = vpack.c.b16 %v2052, %v2044
    %v2629 = vpack.c.b16 %v2053, %v2045
    %v2630 = vpack.c.b16 %v2054, %v2046
    %v2631 = vpack.c.b16 %v2055, %v2047
    %v2632 = vpack.c.b16 %v2056, %v2048
    %v2633 = vpack.c.b16 %v2065, %v2057
    %v2634 = vpack.c.b16 %v2066, %v2058
    %v2635 = vpack.c.b16 %v2067, %v2059
    %v2636 = vpack.c.b16 %v2068, %v2060
    %v2637 = vpack.c.b16 %v2069, %v2061
    %v2638 = vpack.c.b16 %v2070, %v2062
    %v2639 = vpack.c.b16 %v2071, %v2063
    %v2640 = vpack.c.b16 %v2072, %v2064
    %v2641 = vpack.c.b16 %v2081, %v2073
    %v2642 = vpack.c.b16 %v2082, %v2074
    %v2643 = vpack.c.b16 %v2083, %v2075
    %v2644 = vpack.c.b16 %v2084, %v2076
    %v2645 = vpack.c.b16 %v2085, %v2077
    %v2646 = vpack.c.b16 %v2086, %v2078
    %v2647 = vpack.c.b16 %v2087, %v2079
    %v2648 = vpack.c.b16 %v2088, %v2080
    %v2649 = vpack.c.b16 %v2097, %v2089
    %v2650 = vpack.c.b16 %v2098, %v2090
    %v2651 = vpack.c.b16 %v2099, %v2091
    %v2652 = vpack.c.b16 %v2100, %v2092
    %v2653 = vpack.c.b16 %v2101, %v2093
    %v2654 = vpack.c.b16 %v2102, %v2094
    %v2655 = vpack.c.b16 %v2103, %v2095
    %v2656 = vpack.c.b16 %v2104, %v2096
    %v2657 = vpack.c.b16 %v2113, %v2105
    %v2658 = vpack.c.b16 %v2114, %v2106
    %v2659 = vpack.c.b16 %v2115, %v2107
    %v2660 = vpack.c.b16 %v2116, %v2108
    %v2661 = vpack.c.b16 %v2117, %v2109
    %v2662 = vpack.c.b16 %v2118, %v2110
    %v2663 = vpack.c.b16 %v2119, %v2111
    %v2664 = vpack.c.b16 %v2120, %v2112
    %v2665 = vpack.c.b16 %v2129, %v2121
    %v2666 = vpack.c.b16 %v2130, %v2122
    %v2667 = vpack.c.b16 %v2131, %v2123
    %v2668 = vpack.c.b16 %v2132, %v2124
    %v2669 = vpack.c.b16 %v2133, %v2125
    %v2670 = vpack.c.b16 %v2134, %v2126
    %v2671 = vpack.c.b16 %v2135, %v2127
    %v2672 = vpack.c.b16 %v2136, %v2128
    %v2673 = vpack.c.b16 %v2145, %v2137
    %v2674 = vpack.c.b16 %v2146, %v2138
    %v2675 = vpack.c.b16 %v2147, %v2139
    %v2676 = vpack.c.b16 %v2148, %v2140
    %v2677 = vpack.c.b16 %v2149, %v2141
    %v2678 = vpack.c.b16 %v2150, %v2142
    %v2679 = vpack.c.b16 %v2151, %v2143
    %v2680 = vpack.c.b16 %v2152, %v2144
    %v2681 = vpack.c.b16 %v2161, %v2153
    %v2682 = vpack.c.b16 %v2162, %v2154
    %v2683 = vpack.c.b16 %v2163, %v2155
    %v2684 = vpack.c.b16 %v2164, %v2156
    %v2685 = vpack.c.b16 %v2165, %v2157
    %v2686 = vpack.c.b16 %v2166, %v2158
    %v2687 = vpack.c.b16 %v2167, %v2159
    %v2688 = vpack.c.b16 %v2168, %v2160
    %v2689 = vpack.c.b16 %v2177, %v2169
    %v2690 = vpack.c.b16 %v2178, %v2170
    %v2691 = vpack.c.b16 %v2179, %v2171
    %v2692 = vpack.c.b16 %v2180, %v2172
    %v2693 = vpack.c.b16 %v2181, %v2173
    %v2694 = vpack.c.b16 %v2182, %v2174
    %v2695 = vpack.c.b16 %v2183, %v2175
    %v2696 = vpack.c.b16 %v2184, %v2176
    %3209 = vmatprep.subr.bf16.mxu0 %v2242
    %3210 = vmatpush1.bf16.msra.mxu0 %v2241
    %3211 = vmatprep.subr.bf16.mxu0 %v2234
    %3212 = vmatpush1.bf16.msra.mxu0 %v2233
    %3213 = vmatprep.subr.bf16.mxu0 %v2226
    %3214 = vmatpush1.bf16.msra.mxu0 %v2225
    %3215 = vmatprep.subr.bf16.mxu0 %v2218
    %3216 = vmatpush1.bf16.msra.mxu0 %v2217
    %3217 = vmatprep.subr.bf16.mxu0 %v2210
    %3218 = vmatpush1.bf16.msra.mxu0 %v2209
    %3219 = vmatprep.subr.bf16.mxu0 %v2202
    %3220 = vmatpush1.bf16.msra.mxu0 %v2201
    %3221 = vmatprep.subr.bf16.mxu0 %v2194
    %3222 = vmatpush1.bf16.msra.mxu0 %v2193
    %3223 = vmatprep.subr.bf16.mxu0 %v2186
    %3224 = vmatpush1.bf16.msra.mxu0 %v2185
    %3225 = vmatprep.subr.bf16.mxu0 %v2306
    %3226 = vmatpush2.bf16.msra.mxu0 %v2305
    %3227 = vmatprep.subr.bf16.mxu0 %v2298
    %3228 = vmatpush2.bf16.msra.mxu0 %v2297
    %3229 = vmatprep.subr.bf16.mxu0 %v2290
    %3230 = vmatpush2.bf16.msra.mxu0 %v2289
    %3231 = vmatprep.subr.bf16.mxu0 %v2282
    %3232 = vmatpush2.bf16.msra.mxu0 %v2281
    %3233 = vmatprep.subr.bf16.mxu0 %v2274
    %3234 = vmatpush2.bf16.msra.mxu0 %v2273
    %3235 = vmatprep.subr.bf16.mxu0 %v2266
    %3236 = vmatpush2.bf16.msra.mxu0 %v2265
    %3237 = vmatprep.subr.bf16.mxu0 %v2258
    %3238 = vmatpush2.bf16.msra.mxu0 %v2257
    %3239 = vmatprep.subr.bf16.mxu0 %v2250
    %3240 = vmatpush2.bf16.msra.mxu0 %v2249
    %3241 = vmatprep.mubr.bf16.mxu0 %v634
    %3242 = vmatmul.mubr.bf16.gmra.mxu0 %v633
    %v3243 = vpop.f32.mrf.mxu0
    %v3244 = vadd.f32 0.0, %v3243
    %v3245 = vpop.f32.mrf.mxu0
    %v3246 = vadd.f32 0.0, %v3245
    %v3247 = vpop.f32.mrf.mxu0
    %v3248 = vpop.f32.mrf.mxu0
    %3249 = vdwg.mxu0
    %3250 = vmatprep.subr.bf16.mxu0 %v2370
    %3251 = vmatpush1.bf16.msra.mxu0 %v2369
    %3252 = vmatprep.subr.bf16.mxu0 %v2362
    %3253 = vmatpush1.bf16.msra.mxu0 %v2361
    %3254 = vmatprep.subr.bf16.mxu0 %v2354
    %3255 = vmatpush1.bf16.msra.mxu0 %v2353
    %3256 = vmatprep.subr.bf16.mxu0 %v2346
    %3257 = vmatpush1.bf16.msra.mxu0 %v2345
    %3258 = vmatprep.subr.bf16.mxu0 %v2338
    %3259 = vmatpush1.bf16.msra.mxu0 %v2337
    %3260 = vmatprep.subr.bf16.mxu0 %v2330
    %3261 = vmatpush1.bf16.msra.mxu0 %v2329
    %3262 = vmatprep.subr.bf16.mxu0 %v2322
    %3263 = vmatpush1.bf16.msra.mxu0 %v2321
    %3264 = vmatprep.subr.bf16.mxu0 %v2314
    %3265 = vmatpush1.bf16.msra.mxu0 %v2313
    %3266 = vmatprep.subr.bf16.mxu0 %v2434
    %3267 = vmatpush2.bf16.msra.mxu0 %v2433
    %3268 = vmatprep.subr.bf16.mxu0 %v2426
    %3269 = vmatpush2.bf16.msra.mxu0 %v2425
    %3270 = vmatprep.subr.bf16.mxu0 %v2418
    %3271 = vmatpush2.bf16.msra.mxu0 %v2417
    %3272 = vmatprep.subr.bf16.mxu0 %v2410
    %3273 = vmatpush2.bf16.msra.mxu0 %v2409
    %3274 = vmatprep.subr.bf16.mxu0 %v2402
    %3275 = vmatpush2.bf16.msra.mxu0 %v2401
    %3276 = vmatprep.subr.bf16.mxu0 %v2394
    %3277 = vmatpush2.bf16.msra.mxu0 %v2393
    %3278 = vmatprep.subr.bf16.mxu0 %v2386
    %3279 = vmatpush2.bf16.msra.mxu0 %v2385
    %3280 = vmatprep.subr.bf16.mxu0 %v2378
    %3281 = vmatpush2.bf16.msra.mxu0 %v2377
    %3282 = vmatprep.mubr.bf16.mxu0 %v636
    %3283 = vmatmul.mubr.bf16.gmra.mxu0 %v635
    %v3284 = vpop.f32.mrf.mxu0
    %v3285 = vadd.f32 %v3244, %v3284
    %v3286 = vpop.f32.mrf.mxu0
    %v3287 = vadd.f32 %v3246, %v3286
    %v3288 = vpop.f32.mrf.mxu0
    %v3289 = vpop.f32.mrf.mxu0
    %3290 = vdwg.mxu0
    %3291 = vmatprep.subr.bf16.mxu0 %v2498
    %3292 = vmatpush1.bf16.msra.mxu0 %v2497
    %3293 = vmatprep.subr.bf16.mxu0 %v2490
    %3294 = vmatpush1.bf16.msra.mxu0 %v2489
    %3295 = vmatprep.subr.bf16.mxu0 %v2482
    %3296 = vmatpush1.bf16.msra.mxu0 %v2481
    %3297 = vmatprep.subr.bf16.mxu0 %v2474
    %3298 = vmatpush1.bf16.msra.mxu0 %v2473
    %3299 = vmatprep.subr.bf16.mxu0 %v2466
    %3300 = vmatpush1.bf16.msra.mxu0 %v2465
    %3301 = vmatprep.subr.bf16.mxu0 %v2458
    %3302 = vmatpush1.bf16.msra.mxu0 %v2457
    %3303 = vmatprep.subr.bf16.mxu0 %v2450
    %3304 = vmatpush1.bf16.msra.mxu0 %v2449
    %3305 = vmatprep.subr.bf16.mxu0 %v2442
    %3306 = vmatpush1.bf16.msra.mxu0 %v2441
    %3307 = vmatprep.subr.bf16.mxu0 %v2562
    %3308 = vmatpush2.bf16.msra.mxu0 %v2561
    %3309 = vmatprep.subr.bf16.mxu0 %v2554
    %3310 = vmatpush2.bf16.msra.mxu0 %v2553
    %3311 = vmatprep.subr.bf16.mxu0 %v2546
    %3312 = vmatpush2.bf16.msra.mxu0 %v2545
    %3313 = vmatprep.subr.bf16.mxu0 %v2538
    %3314 = vmatpush2.bf16.msra.mxu0 %v2537
    %3315 = vmatprep.subr.bf16.mxu0 %v2530
    %3316 = vmatpush2.bf16.msra.mxu0 %v2529
    %3317 = vmatprep.subr.bf16.mxu0 %v2522
    %3318 = vmatpush2.bf16.msra.mxu0 %v2521
    %3319 = vmatprep.subr.bf16.mxu0 %v2514
    %3320 = vmatpush2.bf16.msra.mxu0 %v2513
    %3321 = vmatprep.subr.bf16.mxu0 %v2506
    %3322 = vmatpush2.bf16.msra.mxu0 %v2505
    %3323 = vmatprep.mubr.bf16.mxu0 %v638
    %3324 = vmatmul.mubr.bf16.gmra.mxu0 %v637
    %v3325 = vpop.f32.mrf.mxu0
    %v3326 = vadd.f32 %v3285, %v3325
    %v3327 = vpop.f32.mrf.mxu0
    %v3328 = vadd.f32 %v3287, %v3327
    %v3329 = vpop.f32.mrf.mxu0
    %v3330 = vpop.f32.mrf.mxu0
    %3331 = vdwg.mxu0
    %3332 = vmatprep.subr.bf16.mxu0 %v2626
    %3333 = vmatpush1.bf16.msra.mxu0 %v2625
    %3334 = vmatprep.subr.bf16.mxu0 %v2618
    %3335 = vmatpush1.bf16.msra.mxu0 %v2617
    %3336 = vmatprep.subr.bf16.mxu0 %v2610
    %3337 = vmatpush1.bf16.msra.mxu0 %v2609
    %3338 = vmatprep.subr.bf16.mxu0 %v2602
    %3339 = vmatpush1.bf16.msra.mxu0 %v2601
    %3340 = vmatprep.subr.bf16.mxu0 %v2594
    %3341 = vmatpush1.bf16.msra.mxu0 %v2593
    %3342 = vmatprep.subr.bf16.mxu0 %v2586
    %3343 = vmatpush1.bf16.msra.mxu0 %v2585
    %3344 = vmatprep.subr.bf16.mxu0 %v2578
    %3345 = vmatpush1.bf16.msra.mxu0 %v2577
    %3346 = vmatprep.subr.bf16.mxu0 %v2570
    %3347 = vmatpush1.bf16.msra.mxu0 %v2569
    %3348 = vmatprep.subr.bf16.mxu0 %v2690
    %3349 = vmatpush2.bf16.msra.mxu0 %v2689
    %3350 = vmatprep.subr.bf16.mxu0 %v2682
    %3351 = vmatpush2.bf16.msra.mxu0 %v2681
    %3352 = vmatprep.subr.bf16.mxu0 %v2674
    %3353 = vmatpush2.bf16.msra.mxu0 %v2673
    %3354 = vmatprep.subr.bf16.mxu0 %v2666
    %3355 = vmatpush2.bf16.msra.mxu0 %v2665
    %3356 = vmatprep.subr.bf16.mxu0 %v2658
    %3357 = vmatpush2.bf16.msra.mxu0 %v2657
    %3358 = vmatprep.subr.bf16.mxu0 %v2650
    %3359 = vmatpush2.bf16.msra.mxu0 %v2649
    %3360 = vmatprep.subr.bf16.mxu0 %v2642
    %3361 = vmatpush2.bf16.msra.mxu0 %v2641
    %3362 = vmatprep.subr.bf16.mxu0 %v2634
    %3363 = vmatpush2.bf16.msra.mxu0 %v2633
    %3364 = vmatprep.mubr.bf16.mxu0 %v640
    %3365 = vmatmul.mubr.bf16.gmra.mxu0 %v639
    %v3366 = vpop.f32.mrf.mxu0
    %v3367 = vadd.f32 %v3326, %v3366
    %v3368 = vpop.f32.mrf.mxu0
    %v3369 = vadd.f32 %v3328, %v3368
    %v3370 = vpop.f32.mrf.mxu0
    %v3371 = vpop.f32.mrf.mxu0
    %3372 = vdwg.mxu0
    %3373 = vmatprep.subr.bf16.mxu0 %v2244
    %3374 = vmatpush1.bf16.msra.mxu0 %v2243
    %3375 = vmatprep.subr.bf16.mxu0 %v2236
    %3376 = vmatpush1.bf16.msra.mxu0 %v2235
    %3377 = vmatprep.subr.bf16.mxu0 %v2228
    %3378 = vmatpush1.bf16.msra.mxu0 %v2227
    %3379 = vmatprep.subr.bf16.mxu0 %v2220
    %3380 = vmatpush1.bf16.msra.mxu0 %v2219
    %3381 = vmatprep.subr.bf16.mxu0 %v2212
    %3382 = vmatpush1.bf16.msra.mxu0 %v2211
    %3383 = vmatprep.subr.bf16.mxu0 %v2204
    %3384 = vmatpush1.bf16.msra.mxu0 %v2203
    %3385 = vmatprep.subr.bf16.mxu0 %v2196
    %3386 = vmatpush1.bf16.msra.mxu0 %v2195
    %3387 = vmatprep.subr.bf16.mxu0 %v2188
    %3388 = vmatpush1.bf16.msra.mxu0 %v2187
    %3389 = vmatprep.subr.bf16.mxu0 %v2308
    %3390 = vmatpush2.bf16.msra.mxu0 %v2307
    %3391 = vmatprep.subr.bf16.mxu0 %v2300
    %3392 = vmatpush2.bf16.msra.mxu0 %v2299
    %3393 = vmatprep.subr.bf16.mxu0 %v2292
    %3394 = vmatpush2.bf16.msra.mxu0 %v2291
    %3395 = vmatprep.subr.bf16.mxu0 %v2284
    %3396 = vmatpush2.bf16.msra.mxu0 %v2283
    %3397 = vmatprep.subr.bf16.mxu0 %v2276
    %3398 = vmatpush2.bf16.msra.mxu0 %v2275
    %3399 = vmatprep.subr.bf16.mxu0 %v2268
    %3400 = vmatpush2.bf16.msra.mxu0 %v2267
    %3401 = vmatprep.subr.bf16.mxu0 %v2260
    %3402 = vmatpush2.bf16.msra.mxu0 %v2259
    %3403 = vmatprep.subr.bf16.mxu0 %v2252
    %3404 = vmatpush2.bf16.msra.mxu0 %v2251
    %3405 = vmatprep.mubr.bf16.mxu0 %v634
    %3406 = vmatmul.mubr.bf16.gmra.mxu0 %v633
    %v3407 = vpop.f32.mrf.mxu0
    %v3408 = vadd.f32 0.0, %v3407
    %v3409 = vpop.f32.mrf.mxu0
    %v3410 = vadd.f32 0.0, %v3409
    %v3411 = vpop.f32.mrf.mxu0
    %v3412 = vpop.f32.mrf.mxu0
    %3413 = vdwg.mxu0
    %3414 = vmatprep.subr.bf16.mxu0 %v2372
    %3415 = vmatpush1.bf16.msra.mxu0 %v2371
    %3416 = vmatprep.subr.bf16.mxu0 %v2364
    %3417 = vmatpush1.bf16.msra.mxu0 %v2363
    %3418 = vmatprep.subr.bf16.mxu0 %v2356
    %3419 = vmatpush1.bf16.msra.mxu0 %v2355
    %3420 = vmatprep.subr.bf16.mxu0 %v2348
    %3421 = vmatpush1.bf16.msra.mxu0 %v2347
    %3422 = vmatprep.subr.bf16.mxu0 %v2340
    %3423 = vmatpush1.bf16.msra.mxu0 %v2339
    %3424 = vmatprep.subr.bf16.mxu0 %v2332
    %3425 = vmatpush1.bf16.msra.mxu0 %v2331
    %3426 = vmatprep.subr.bf16.mxu0 %v2324
    %3427 = vmatpush1.bf16.msra.mxu0 %v2323
    %3428 = vmatprep.subr.bf16.mxu0 %v2316
    %3429 = vmatpush1.bf16.msra.mxu0 %v2315
    %3430 = vmatprep.subr.bf16.mxu0 %v2436
    %3431 = vmatpush2.bf16.msra.mxu0 %v2435
    %3432 = vmatprep.subr.bf16.mxu0 %v2428
    %3433 = vmatpush2.bf16.msra.mxu0 %v2427
    %3434 = vmatprep.subr.bf16.mxu0 %v2420
    %3435 = vmatpush2.bf16.msra.mxu0 %v2419
    %3436 = vmatprep.subr.bf16.mxu0 %v2412
    %3437 = vmatpush2.bf16.msra.mxu0 %v2411
    %3438 = vmatprep.subr.bf16.mxu0 %v2404
    %3439 = vmatpush2.bf16.msra.mxu0 %v2403
    %3440 = vmatprep.subr.bf16.mxu0 %v2396
    %3441 = vmatpush2.bf16.msra.mxu0 %v2395
    %3442 = vmatprep.subr.bf16.mxu0 %v2388
    %3443 = vmatpush2.bf16.msra.mxu0 %v2387
    %3444 = vmatprep.subr.bf16.mxu0 %v2380
    %3445 = vmatpush2.bf16.msra.mxu0 %v2379
    %3446 = vmatprep.mubr.bf16.mxu0 %v636
    %3447 = vmatmul.mubr.bf16.gmra.mxu0 %v635
    %v3448 = vpop.f32.mrf.mxu0
    %v3449 = vadd.f32 %v3408, %v3448
    %v3450 = vpop.f32.mrf.mxu0
    %v3451 = vadd.f32 %v3410, %v3450
    %v3452 = vpop.f32.mrf.mxu0
    %v3453 = vpop.f32.mrf.mxu0
    %3454 = vdwg.mxu0
    %3455 = vmatprep.subr.bf16.mxu0 %v2500
    %3456 = vmatpush1.bf16.msra.mxu0 %v2499
    %3457 = vmatprep.subr.bf16.mxu0 %v2492
    %3458 = vmatpush1.bf16.msra.mxu0 %v2491
    %3459 = vmatprep.subr.bf16.mxu0 %v2484
    %3460 = vmatpush1.bf16.msra.mxu0 %v2483
    %3461 = vmatprep.subr.bf16.mxu0 %v2476
    %3462 = vmatpush1.bf16.msra.mxu0 %v2475
    %3463 = vmatprep.subr.bf16.mxu0 %v2468
    %3464 = vmatpush1.bf16.msra.mxu0 %v2467
    %3465 = vmatprep.subr.bf16.mxu0 %v2460
    %3466 = vmatpush1.bf16.msra.mxu0 %v2459
    %3467 = vmatprep.subr.bf16.mxu0 %v2452
    %3468 = vmatpush1.bf16.msra.mxu0 %v2451
    %3469 = vmatprep.subr.bf16.mxu0 %v2444
    %3470 = vmatpush1.bf16.msra.mxu0 %v2443
    %3471 = vmatprep.subr.bf16.mxu0 %v2564
    %3472 = vmatpush2.bf16.msra.mxu0 %v2563
    %3473 = vmatprep.subr.bf16.mxu0 %v2556
    %3474 = vmatpush2.bf16.msra.mxu0 %v2555
    %3475 = vmatprep.subr.bf16.mxu0 %v2548
    %3476 = vmatpush2.bf16.msra.mxu0 %v2547
    %3477 = vmatprep.subr.bf16.mxu0 %v2540
    %3478 = vmatpush2.bf16.msra.mxu0 %v2539
    %3479 = vmatprep.subr.bf16.mxu0 %v2532
    %3480 = vmatpush2.bf16.msra.mxu0 %v2531
    %3481 = vmatprep.subr.bf16.mxu0 %v2524
    %3482 = vmatpush2.bf16.msra.mxu0 %v2523
    %3483 = vmatprep.subr.bf16.mxu0 %v2516
    %3484 = vmatpush2.bf16.msra.mxu0 %v2515
    %3485 = vmatprep.subr.bf16.mxu0 %v2508
    %3486 = vmatpush2.bf16.msra.mxu0 %v2507
    %3487 = vmatprep.mubr.bf16.mxu0 %v638
    %3488 = vmatmul.mubr.bf16.gmra.mxu0 %v637
    %v3489 = vpop.f32.mrf.mxu0
    %v3490 = vadd.f32 %v3449, %v3489
    %v3491 = vpop.f32.mrf.mxu0
    %v3492 = vadd.f32 %v3451, %v3491
    %v3493 = vpop.f32.mrf.mxu0
    %v3494 = vpop.f32.mrf.mxu0
    %3495 = vdwg.mxu0
    %3496 = vmatprep.subr.bf16.mxu0 %v2628
    %3497 = vmatpush1.bf16.msra.mxu0 %v2627
    %3498 = vmatprep.subr.bf16.mxu0 %v2620
    %3499 = vmatpush1.bf16.msra.mxu0 %v2619
    %3500 = vmatprep.subr.bf16.mxu0 %v2612
    %3501 = vmatpush1.bf16.msra.mxu0 %v2611
    %3502 = vmatprep.subr.bf16.mxu0 %v2604
    %3503 = vmatpush1.bf16.msra.mxu0 %v2603
    %3504 = vmatprep.subr.bf16.mxu0 %v2596
    %3505 = vmatpush1.bf16.msra.mxu0 %v2595
    %3506 = vmatprep.subr.bf16.mxu0 %v2588
    %3507 = vmatpush1.bf16.msra.mxu0 %v2587
    %3508 = vmatprep.subr.bf16.mxu0 %v2580
    %3509 = vmatpush1.bf16.msra.mxu0 %v2579
    %3510 = vmatprep.subr.bf16.mxu0 %v2572
    %3511 = vmatpush1.bf16.msra.mxu0 %v2571
    %3512 = vmatprep.subr.bf16.mxu0 %v2692
    %3513 = vmatpush2.bf16.msra.mxu0 %v2691
    %3514 = vmatprep.subr.bf16.mxu0 %v2684
    %3515 = vmatpush2.bf16.msra.mxu0 %v2683
    %3516 = vmatprep.subr.bf16.mxu0 %v2676
    %3517 = vmatpush2.bf16.msra.mxu0 %v2675
    %3518 = vmatprep.subr.bf16.mxu0 %v2668
    %3519 = vmatpush2.bf16.msra.mxu0 %v2667
    %3520 = vmatprep.subr.bf16.mxu0 %v2660
    %3521 = vmatpush2.bf16.msra.mxu0 %v2659
    %3522 = vmatprep.subr.bf16.mxu0 %v2652
    %3523 = vmatpush2.bf16.msra.mxu0 %v2651
    %3524 = vmatprep.subr.bf16.mxu0 %v2644
    %3525 = vmatpush2.bf16.msra.mxu0 %v2643
    %3526 = vmatprep.subr.bf16.mxu0 %v2636
    %3527 = vmatpush2.bf16.msra.mxu0 %v2635
    %3528 = vmatprep.mubr.bf16.mxu0 %v640
    %3529 = vmatmul.mubr.bf16.gmra.mxu0 %v639
    %v3530 = vpop.f32.mrf.mxu0
    %v3531 = vadd.f32 %v3490, %v3530
    %v3532 = vpop.f32.mrf.mxu0
    %v3533 = vadd.f32 %v3492, %v3532
    %v3534 = vpop.f32.mrf.mxu0
    %v3535 = vpop.f32.mrf.mxu0
    %3536 = vdwg.mxu0
    %3537 = vmatprep.subr.bf16.mxu0 %v2246
    %3538 = vmatpush1.bf16.msra.mxu0 %v2245
    %3539 = vmatprep.subr.bf16.mxu0 %v2238
    %3540 = vmatpush1.bf16.msra.mxu0 %v2237
    %3541 = vmatprep.subr.bf16.mxu0 %v2230
    %3542 = vmatpush1.bf16.msra.mxu0 %v2229
    %3543 = vmatprep.subr.bf16.mxu0 %v2222
    %3544 = vmatpush1.bf16.msra.mxu0 %v2221
    %3545 = vmatprep.subr.bf16.mxu0 %v2214
    %3546 = vmatpush1.bf16.msra.mxu0 %v2213
    %3547 = vmatprep.subr.bf16.mxu0 %v2206
    %3548 = vmatpush1.bf16.msra.mxu0 %v2205
    %3549 = vmatprep.subr.bf16.mxu0 %v2198
    %3550 = vmatpush1.bf16.msra.mxu0 %v2197
    %3551 = vmatprep.subr.bf16.mxu0 %v2190
    %3552 = vmatpush1.bf16.msra.mxu0 %v2189
    %3553 = vmatprep.subr.bf16.mxu0 %v2310
    %3554 = vmatpush2.bf16.msra.mxu0 %v2309
    %3555 = vmatprep.subr.bf16.mxu0 %v2302
    %3556 = vmatpush2.bf16.msra.mxu0 %v2301
    %3557 = vmatprep.subr.bf16.mxu0 %v2294
    %3558 = vmatpush2.bf16.msra.mxu0 %v2293
    %3559 = vmatprep.subr.bf16.mxu0 %v2286
    %3560 = vmatpush2.bf16.msra.mxu0 %v2285
    %3561 = vmatprep.subr.bf16.mxu0 %v2278
    %3562 = vmatpush2.bf16.msra.mxu0 %v2277
    %3563 = vmatprep.subr.bf16.mxu0 %v2270
    %3564 = vmatpush2.bf16.msra.mxu0 %v2269
    %3565 = vmatprep.subr.bf16.mxu0 %v2262
    %3566 = vmatpush2.bf16.msra.mxu0 %v2261
    %3567 = vmatprep.subr.bf16.mxu0 %v2254
    %3568 = vmatpush2.bf16.msra.mxu0 %v2253
    %3569 = vmatprep.mubr.bf16.mxu0 %v634
    %3570 = vmatmul.mubr.bf16.gmra.mxu0 %v633
    %v3571 = vpop.f32.mrf.mxu0
    %v3572 = vadd.f32 0.0, %v3571
    %v3573 = vpop.f32.mrf.mxu0
    %v3574 = vadd.f32 0.0, %v3573
    %v3575 = vpop.f32.mrf.mxu0
    %v3576 = vpop.f32.mrf.mxu0
    %3577 = vdwg.mxu0
    %3578 = vmatprep.subr.bf16.mxu0 %v2374
    %3579 = vmatpush1.bf16.msra.mxu0 %v2373
    %3580 = vmatprep.subr.bf16.mxu0 %v2366
    %3581 = vmatpush1.bf16.msra.mxu0 %v2365
    %3582 = vmatprep.subr.bf16.mxu0 %v2358
    %3583 = vmatpush1.bf16.msra.mxu0 %v2357
    %3584 = vmatprep.subr.bf16.mxu0 %v2350
    %3585 = vmatpush1.bf16.msra.mxu0 %v2349
    %3586 = vmatprep.subr.bf16.mxu0 %v2342
    %3587 = vmatpush1.bf16.msra.mxu0 %v2341
    %3588 = vmatprep.subr.bf16.mxu0 %v2334
    %3589 = vmatpush1.bf16.msra.mxu0 %v2333
    %3590 = vmatprep.subr.bf16.mxu0 %v2326
    %3591 = vmatpush1.bf16.msra.mxu0 %v2325
    %3592 = vmatprep.subr.bf16.mxu0 %v2318
    %3593 = vmatpush1.bf16.msra.mxu0 %v2317
    %3594 = vmatprep.subr.bf16.mxu0 %v2438
    %3595 = vmatpush2.bf16.msra.mxu0 %v2437
    %3596 = vmatprep.subr.bf16.mxu0 %v2430
    %3597 = vmatpush2.bf16.msra.mxu0 %v2429
    %3598 = vmatprep.subr.bf16.mxu0 %v2422
    %3599 = vmatpush2.bf16.msra.mxu0 %v2421
    %3600 = vmatprep.subr.bf16.mxu0 %v2414
    %3601 = vmatpush2.bf16.msra.mxu0 %v2413
    %3602 = vmatprep.subr.bf16.mxu0 %v2406
    %3603 = vmatpush2.bf16.msra.mxu0 %v2405
    %3604 = vmatprep.subr.bf16.mxu0 %v2398
    %3605 = vmatpush2.bf16.msra.mxu0 %v2397
    %3606 = vmatprep.subr.bf16.mxu0 %v2390
    %3607 = vmatpush2.bf16.msra.mxu0 %v2389
    %3608 = vmatprep.subr.bf16.mxu0 %v2382
    %3609 = vmatpush2.bf16.msra.mxu0 %v2381
    %3610 = vmatprep.mubr.bf16.mxu0 %v636
    %3611 = vmatmul.mubr.bf16.gmra.mxu0 %v635
    %v3612 = vpop.f32.mrf.mxu0
    %v3613 = vadd.f32 %v3572, %v3612
    %v3614 = vpop.f32.mrf.mxu0
    %v3615 = vadd.f32 %v3574, %v3614
    %v3616 = vpop.f32.mrf.mxu0
    %v3617 = vpop.f32.mrf.mxu0
    %3618 = vdwg.mxu0
    %3619 = vmatprep.subr.bf16.mxu0 %v2502
    %3620 = vmatpush1.bf16.msra.mxu0 %v2501
    %3621 = vmatprep.subr.bf16.mxu0 %v2494
    %3622 = vmatpush1.bf16.msra.mxu0 %v2493
    %3623 = vmatprep.subr.bf16.mxu0 %v2486
    %3624 = vmatpush1.bf16.msra.mxu0 %v2485
    %3625 = vmatprep.subr.bf16.mxu0 %v2478
    %3626 = vmatpush1.bf16.msra.mxu0 %v2477
    %3627 = vmatprep.subr.bf16.mxu0 %v2470
    %3628 = vmatpush1.bf16.msra.mxu0 %v2469
    %3629 = vmatprep.subr.bf16.mxu0 %v2462
    %3630 = vmatpush1.bf16.msra.mxu0 %v2461
    %3631 = vmatprep.subr.bf16.mxu0 %v2454
    %3632 = vmatpush1.bf16.msra.mxu0 %v2453
    %3633 = vmatprep.subr.bf16.mxu0 %v2446
    %3634 = vmatpush1.bf16.msra.mxu0 %v2445
    %3635 = vmatprep.subr.bf16.mxu0 %v2566
    %3636 = vmatpush2.bf16.msra.mxu0 %v2565
    %3637 = vmatprep.subr.bf16.mxu0 %v2558
    %3638 = vmatpush2.bf16.msra.mxu0 %v2557
    %3639 = vmatprep.subr.bf16.mxu0 %v2550
    %3640 = vmatpush2.bf16.msra.mxu0 %v2549
    %3641 = vmatprep.subr.bf16.mxu0 %v2542
    %3642 = vmatpush2.bf16.msra.mxu0 %v2541
    %3643 = vmatprep.subr.bf16.mxu0 %v2534
    %3644 = vmatpush2.bf16.msra.mxu0 %v2533
    %3645 = vmatprep.subr.bf16.mxu0 %v2526
    %3646 = vmatpush2.bf16.msra.mxu0 %v2525
    %3647 = vmatprep.subr.bf16.mxu0 %v2518
    %3648 = vmatpush2.bf16.msra.mxu0 %v2517
    %3649 = vmatprep.subr.bf16.mxu0 %v2510
    %3650 = vmatpush2.bf16.msra.mxu0 %v2509
    %3651 = vmatprep.mubr.bf16.mxu0 %v638
    %3652 = vmatmul.mubr.bf16.gmra.mxu0 %v637
    %v3653 = vpop.f32.mrf.mxu0
    %v3654 = vadd.f32 %v3613, %v3653
    %v3655 = vpop.f32.mrf.mxu0
    %v3656 = vadd.f32 %v3615, %v3655
    %v3657 = vpop.f32.mrf.mxu0
    %v3658 = vpop.f32.mrf.mxu0
    %3659 = vdwg.mxu0
    %3660 = vmatprep.subr.bf16.mxu0 %v2630
    %3661 = vmatpush1.bf16.msra.mxu0 %v2629
    %3662 = vmatprep.subr.bf16.mxu0 %v2622
    %3663 = vmatpush1.bf16.msra.mxu0 %v2621
    %3664 = vmatprep.subr.bf16.mxu0 %v2614
    %3665 = vmatpush1.bf16.msra.mxu0 %v2613
    %3666 = vmatprep.subr.bf16.mxu0 %v2606
    %3667 = vmatpush1.bf16.msra.mxu0 %v2605
    %3668 = vmatprep.subr.bf16.mxu0 %v2598
    %3669 = vmatpush1.bf16.msra.mxu0 %v2597
    %3670 = vmatprep.subr.bf16.mxu0 %v2590
    %3671 = vmatpush1.bf16.msra.mxu0 %v2589
    %3672 = vmatprep.subr.bf16.mxu0 %v2582
    %3673 = vmatpush1.bf16.msra.mxu0 %v2581
    %3674 = vmatprep.subr.bf16.mxu0 %v2574
    %3675 = vmatpush1.bf16.msra.mxu0 %v2573
    %3676 = vmatprep.subr.bf16.mxu0 %v2694
    %3677 = vmatpush2.bf16.msra.mxu0 %v2693
    %3678 = vmatprep.subr.bf16.mxu0 %v2686
    %3679 = vmatpush2.bf16.msra.mxu0 %v2685
    %3680 = vmatprep.subr.bf16.mxu0 %v2678
    %3681 = vmatpush2.bf16.msra.mxu0 %v2677
    %3682 = vmatprep.subr.bf16.mxu0 %v2670
    %3683 = vmatpush2.bf16.msra.mxu0 %v2669
    %3684 = vmatprep.subr.bf16.mxu0 %v2662
    %3685 = vmatpush2.bf16.msra.mxu0 %v2661
    %3686 = vmatprep.subr.bf16.mxu0 %v2654
    %3687 = vmatpush2.bf16.msra.mxu0 %v2653
    %3688 = vmatprep.subr.bf16.mxu0 %v2646
    %3689 = vmatpush2.bf16.msra.mxu0 %v2645
    %3690 = vmatprep.subr.bf16.mxu0 %v2638
    %3691 = vmatpush2.bf16.msra.mxu0 %v2637
    %3692 = vmatprep.mubr.bf16.mxu0 %v640
    %3693 = vmatmul.mubr.bf16.gmra.mxu0 %v639
    %v3694 = vpop.f32.mrf.mxu0
    %v3695 = vadd.f32 %v3654, %v3694
    %v3696 = vpop.f32.mrf.mxu0
    %v3697 = vadd.f32 %v3656, %v3696
    %v3698 = vpop.f32.mrf.mxu0
    %v3699 = vpop.f32.mrf.mxu0
    %3700 = vdwg.mxu0
    %3701 = vmatprep.subr.bf16.mxu0 %v2248
    %3702 = vmatpush1.bf16.msra.mxu0 %v2247
    %3703 = vmatprep.subr.bf16.mxu0 %v2240
    %3704 = vmatpush1.bf16.msra.mxu0 %v2239
    %3705 = vmatprep.subr.bf16.mxu0 %v2232
    %3706 = vmatpush1.bf16.msra.mxu0 %v2231
    %3707 = vmatprep.subr.bf16.mxu0 %v2224
    %3708 = vmatpush1.bf16.msra.mxu0 %v2223
    %3709 = vmatprep.subr.bf16.mxu0 %v2216
    %3710 = vmatpush1.bf16.msra.mxu0 %v2215
    %3711 = vmatprep.subr.bf16.mxu0 %v2208
    %3712 = vmatpush1.bf16.msra.mxu0 %v2207
    %3713 = vmatprep.subr.bf16.mxu0 %v2200
    %3714 = vmatpush1.bf16.msra.mxu0 %v2199
    %3715 = vmatprep.subr.bf16.mxu0 %v2192
    %3716 = vmatpush1.bf16.msra.mxu0 %v2191
    %3717 = vmatprep.subr.bf16.mxu0 %v2312
    %3718 = vmatpush2.bf16.msra.mxu0 %v2311
    %3719 = vmatprep.subr.bf16.mxu0 %v2304
    %3720 = vmatpush2.bf16.msra.mxu0 %v2303
    %3721 = vmatprep.subr.bf16.mxu0 %v2296
    %3722 = vmatpush2.bf16.msra.mxu0 %v2295
    %3723 = vmatprep.subr.bf16.mxu0 %v2288
    %3724 = vmatpush2.bf16.msra.mxu0 %v2287
    %3725 = vmatprep.subr.bf16.mxu0 %v2280
    %3726 = vmatpush2.bf16.msra.mxu0 %v2279
    %3727 = vmatprep.subr.bf16.mxu0 %v2272
    %3728 = vmatpush2.bf16.msra.mxu0 %v2271
    %3729 = vmatprep.subr.bf16.mxu0 %v2264
    %3730 = vmatpush2.bf16.msra.mxu0 %v2263
    %3731 = vmatprep.subr.bf16.mxu0 %v2256
    %3732 = vmatpush2.bf16.msra.mxu0 %v2255
    %3733 = vmatprep.mubr.bf16.mxu0 %v634
    %3734 = vmatmul.mubr.bf16.gmra.mxu0 %v633
    %v3735 = vpop.f32.mrf.mxu0
    %v3736 = vadd.f32 0.0, %v3735
    %v3737 = vpop.f32.mrf.mxu0
    %v3738 = vadd.f32 0.0, %v3737
    %v3739 = vpop.f32.mrf.mxu0
    %v3740 = vpop.f32.mrf.mxu0
    %3741 = vdwg.mxu0
    %3742 = vmatprep.subr.bf16.mxu0 %v2376
    %3743 = vmatpush1.bf16.msra.mxu0 %v2375
    %3744 = vmatprep.subr.bf16.mxu0 %v2368
    %3745 = vmatpush1.bf16.msra.mxu0 %v2367
    %3746 = vmatprep.subr.bf16.mxu0 %v2360
    %3747 = vmatpush1.bf16.msra.mxu0 %v2359
    %3748 = vmatprep.subr.bf16.mxu0 %v2352
    %3749 = vmatpush1.bf16.msra.mxu0 %v2351
    %3750 = vmatprep.subr.bf16.mxu0 %v2344
    %3751 = vmatpush1.bf16.msra.mxu0 %v2343
    %3752 = vmatprep.subr.bf16.mxu0 %v2336
    %3753 = vmatpush1.bf16.msra.mxu0 %v2335
    %3754 = vmatprep.subr.bf16.mxu0 %v2328
    %3755 = vmatpush1.bf16.msra.mxu0 %v2327
    %3756 = vmatprep.subr.bf16.mxu0 %v2320
    %3757 = vmatpush1.bf16.msra.mxu0 %v2319
    %3758 = vmatprep.subr.bf16.mxu0 %v2440
    %3759 = vmatpush2.bf16.msra.mxu0 %v2439
    %3760 = vmatprep.subr.bf16.mxu0 %v2432
    %3761 = vmatpush2.bf16.msra.mxu0 %v2431
    %3762 = vmatprep.subr.bf16.mxu0 %v2424
    %3763 = vmatpush2.bf16.msra.mxu0 %v2423
    %3764 = vmatprep.subr.bf16.mxu0 %v2416
    %3765 = vmatpush2.bf16.msra.mxu0 %v2415
    %3766 = vmatprep.subr.bf16.mxu0 %v2408
    %3767 = vmatpush2.bf16.msra.mxu0 %v2407
    %3768 = vmatprep.subr.bf16.mxu0 %v2400
    %3769 = vmatpush2.bf16.msra.mxu0 %v2399
    %3770 = vmatprep.subr.bf16.mxu0 %v2392
    %3771 = vmatpush2.bf16.msra.mxu0 %v2391
    %3772 = vmatprep.subr.bf16.mxu0 %v2384
    %3773 = vmatpush2.bf16.msra.mxu0 %v2383
    %3774 = vmatprep.mubr.bf16.mxu0 %v636
    %3775 = vmatmul.mubr.bf16.gmra.mxu0 %v635
    %v3776 = vpop.f32.mrf.mxu0
    %v3777 = vadd.f32 %v3736, %v3776
    %v3778 = vpop.f32.mrf.mxu0
    %v3779 = vadd.f32 %v3738, %v3778
    %v3780 = vpop.f32.mrf.mxu0
    %v3781 = vpop.f32.mrf.mxu0
    %3782 = vdwg.mxu0
    %3783 = vmatprep.subr.bf16.mxu0 %v2504
    %3784 = vmatpush1.bf16.msra.mxu0 %v2503
    %3785 = vmatprep.subr.bf16.mxu0 %v2496
    %3786 = vmatpush1.bf16.msra.mxu0 %v2495
    %3787 = vmatprep.subr.bf16.mxu0 %v2488
    %3788 = vmatpush1.bf16.msra.mxu0 %v2487
    %3789 = vmatprep.subr.bf16.mxu0 %v2480
    %3790 = vmatpush1.bf16.msra.mxu0 %v2479
    %3791 = vmatprep.subr.bf16.mxu0 %v2472
    %3792 = vmatpush1.bf16.msra.mxu0 %v2471
    %3793 = vmatprep.subr.bf16.mxu0 %v2464
    %3794 = vmatpush1.bf16.msra.mxu0 %v2463
    %3795 = vmatprep.subr.bf16.mxu0 %v2456
    %3796 = vmatpush1.bf16.msra.mxu0 %v2455
    %3797 = vmatprep.subr.bf16.mxu0 %v2448
    %3798 = vmatpush1.bf16.msra.mxu0 %v2447
    %3799 = vmatprep.subr.bf16.mxu0 %v2568
    %3800 = vmatpush2.bf16.msra.mxu0 %v2567
    %3801 = vmatprep.subr.bf16.mxu0 %v2560
    %3802 = vmatpush2.bf16.msra.mxu0 %v2559
    %3803 = vmatprep.subr.bf16.mxu0 %v2552
    %3804 = vmatpush2.bf16.msra.mxu0 %v2551
    %3805 = vmatprep.subr.bf16.mxu0 %v2544
    %3806 = vmatpush2.bf16.msra.mxu0 %v2543
    %3807 = vmatprep.subr.bf16.mxu0 %v2536
    %3808 = vmatpush2.bf16.msra.mxu0 %v2535
    %3809 = vmatprep.subr.bf16.mxu0 %v2528
    %3810 = vmatpush2.bf16.msra.mxu0 %v2527
    %3811 = vmatprep.subr.bf16.mxu0 %v2520
    %3812 = vmatpush2.bf16.msra.mxu0 %v2519
    %3813 = vmatprep.subr.bf16.mxu0 %v2512
    %3814 = vmatpush2.bf16.msra.mxu0 %v2511
    %3815 = vmatprep.mubr.bf16.mxu0 %v638
    %3816 = vmatmul.mubr.bf16.gmra.mxu0 %v637
    %v3817 = vpop.f32.mrf.mxu0
    %v3818 = vadd.f32 %v3777, %v3817
    %v3819 = vpop.f32.mrf.mxu0
    %v3820 = vadd.f32 %v3779, %v3819
    %v3821 = vpop.f32.mrf.mxu0
    %v3822 = vpop.f32.mrf.mxu0
    %3823 = vdwg.mxu0
    %3824 = vmatprep.subr.bf16.mxu0 %v2632
    %3825 = vmatpush1.bf16.msra.mxu0 %v2631
    %3826 = vmatprep.subr.bf16.mxu0 %v2624
    %3827 = vmatpush1.bf16.msra.mxu0 %v2623
    %3828 = vmatprep.subr.bf16.mxu0 %v2616
    %3829 = vmatpush1.bf16.msra.mxu0 %v2615
    %3830 = vmatprep.subr.bf16.mxu0 %v2608
    %3831 = vmatpush1.bf16.msra.mxu0 %v2607
    %3832 = vmatprep.subr.bf16.mxu0 %v2600
    %3833 = vmatpush1.bf16.msra.mxu0 %v2599
    %3834 = vmatprep.subr.bf16.mxu0 %v2592
    %3835 = vmatpush1.bf16.msra.mxu0 %v2591
    %3836 = vmatprep.subr.bf16.mxu0 %v2584
    %3837 = vmatpush1.bf16.msra.mxu0 %v2583
    %3838 = vmatprep.subr.bf16.mxu0 %v2576
    %3839 = vmatpush1.bf16.msra.mxu0 %v2575
    %3840 = vmatprep.subr.bf16.mxu0 %v2696
    %3841 = vmatpush2.bf16.msra.mxu0 %v2695
    %3842 = vmatprep.subr.bf16.mxu0 %v2688
    %3843 = vmatpush2.bf16.msra.mxu0 %v2687
    %3844 = vmatprep.subr.bf16.mxu0 %v2680
    %3845 = vmatpush2.bf16.msra.mxu0 %v2679
    %3846 = vmatprep.subr.bf16.mxu0 %v2672
    %3847 = vmatpush2.bf16.msra.mxu0 %v2671
    %3848 = vmatprep.subr.bf16.mxu0 %v2664
    %3849 = vmatpush2.bf16.msra.mxu0 %v2663
    %3850 = vmatprep.subr.bf16.mxu0 %v2656
    %3851 = vmatpush2.bf16.msra.mxu0 %v2655
    %3852 = vmatprep.subr.bf16.mxu0 %v2648
    %3853 = vmatpush2.bf16.msra.mxu0 %v2647
    %3854 = vmatprep.subr.bf16.mxu0 %v2640
    %3855 = vmatpush2.bf16.msra.mxu0 %v2639
    %3856 = vmatprep.mubr.bf16.mxu0 %v640
    %3857 = vmatmul.mubr.bf16.gmra.mxu0 %v639
    %v3858 = vpop.f32.mrf.mxu0
    %v3859 = vadd.f32 %v3818, %v3858
    %v3860 = vpop.f32.mrf.mxu0
    %v3861 = vadd.f32 %v3820, %v3860
    %v3862 = vpop.f32.mrf.mxu0
    %v3863 = vpop.f32.mrf.mxu0
    %3864 = vdwg.mxu0
    %vm3865 = vcmp.ge.f32.partialorder %v3367, 0.0
    %vm3866 = vcmp.ge.f32.partialorder %v3369, 0.0
    %vm3867 = vcmp.ge.f32.partialorder %v3531, 0.0
    %vm3868 = vcmp.ge.f32.partialorder %v3533, 0.0
    %vm3869 = vcmp.ge.f32.partialorder %v3695, 0.0
    %vm3870 = vcmp.ge.f32.partialorder %v3697, 0.0
    %vm3871 = vcmp.ge.f32.partialorder %v3859, 0.0
    %vm3872 = vcmp.ge.f32.partialorder %v3861, 0.0
    %v3873 = vmul.f32 %v3367, 0.3
    %v3874 = vmul.f32 %v3369, 0.3
    %v3875 = vmul.f32 %v3531, 0.3
    %v3876 = vmul.f32 %v3533, 0.3
    %v3877 = vmul.f32 %v3695, 0.3
    %v3878 = vmul.f32 %v3697, 0.3
    %v3879 = vmul.f32 %v3859, 0.3
    %v3880 = vmul.f32 %v3861, 0.3
    %v3881 = vsel %vm3865, %v3367, %v3873
    %v3882 = vsel %vm3866, %v3369, %v3874
    %v3883 = vsel %vm3867, %v3531, %v3875
    %v3884 = vsel %vm3868, %v3533, %v3876
    %v3885 = vsel %vm3869, %v3695, %v3877
    %v3886 = vsel %vm3870, %v3697, %v3878
    %v3887 = vsel %vm3871, %v3859, %v3879
    %v3888 = vsel %vm3872, %v3861, %v3880
    %v3889 = vpack.c.bf16 %v3881, %v3881
    %v3890 = vpack.c.bf16 %v3882, %v3882
    %v3891 = vpack.c.bf16 %v3883, %v3883
    %v3892 = vpack.c.bf16 %v3884, %v3884
    %v3893 = vpack.c.bf16 %v3885, %v3885
    %v3894 = vpack.c.bf16 %v3886, %v3886
    %v3895 = vpack.c.bf16 %v3887, %v3887
    %v3896 = vpack.c.bf16 %v3888, %v3888
    %v3897 = vld [vmem:[#allocation7] sm:$0xff]
    %v3898 = vld [vmem:[#allocation7 + $0x8] sm:$0xff]
    %v3899 = vld [vmem:[#allocation7 + $0x10] sm:$0xff]
    %v3900 = vld [vmem:[#allocation7 + $0x18] sm:$0xff]
    %v3901 = vld [vmem:[#allocation7 + $0x20] sm:$0xff]
    %v3902 = vld [vmem:[#allocation7 + $0x28] sm:$0xff]
    %v3903 = vld [vmem:[#allocation7 + $0x30] sm:$0xff]
    %v3904 = vld [vmem:[#allocation7 + $0x38] sm:$0xff]
    %v3905 = vld [vmem:[#allocation7 + $0x40] sm:$0xff]
    %v3906 = vld [vmem:[#allocation7 + $0x48] sm:$0xff]
    %v3907 = vld [vmem:[#allocation7 + $0x50] sm:$0xff]
    %v3908 = vld [vmem:[#allocation7 + $0x58] sm:$0xff]
    %v3909 = vld [vmem:[#allocation7 + $0x60] sm:$0xff]
    %v3910 = vld [vmem:[#allocation7 + $0x68] sm:$0xff]
    %v3911 = vld [vmem:[#allocation7 + $0x70] sm:$0xff]
    %v3912 = vld [vmem:[#allocation7 + $0x78] sm:$0xff]
    %v3913 = vld [vmem:[#allocation7 + $0x80] sm:$0xff]
    %v3914 = vld [vmem:[#allocation7 + $0x88] sm:$0xff]
    %v3915 = vld [vmem:[#allocation7 + $0x90] sm:$0xff]
    %v3916 = vld [vmem:[#allocation7 + $0x98] sm:$0xff]
    %v3917 = vld [vmem:[#allocation7 + $0xa0] sm:$0xff]
    %v3918 = vld [vmem:[#allocation7 + $0xa8] sm:$0xff]
    %v3919 = vld [vmem:[#allocation7 + $0xb0] sm:$0xff]
    %v3920 = vld [vmem:[#allocation7 + $0xb8] sm:$0xff]
    %v3921 = vld [vmem:[#allocation7 + $0xc0] sm:$0xff]
    %v3922 = vld [vmem:[#allocation7 + $0xc8] sm:$0xff]
    %v3923 = vld [vmem:[#allocation7 + $0xd0] sm:$0xff]
    %v3924 = vld [vmem:[#allocation7 + $0xd8] sm:$0xff]
    %v3925 = vld [vmem:[#allocation7 + $0xe0] sm:$0xff]
    %v3926 = vld [vmem:[#allocation7 + $0xe8] sm:$0xff]
    %v3927 = vld [vmem:[#allocation7 + $0xf0] sm:$0xff]
    %v3928 = vld [vmem:[#allocation7 + $0xf8] sm:$0xff]
    %v3929 = vld [vmem:[#allocation7 + $0x100] sm:$0xff]
    %v3930 = vld [vmem:[#allocation7 + $0x108] sm:$0xff]
    %v3931 = vld [vmem:[#allocation7 + $0x110] sm:$0xff]
    %v3932 = vld [vmem:[#allocation7 + $0x118] sm:$0xff]
    %v3933 = vld [vmem:[#allocation7 + $0x120] sm:$0xff]
    %v3934 = vld [vmem:[#allocation7 + $0x128] sm:$0xff]
    %v3935 = vld [vmem:[#allocation7 + $0x130] sm:$0xff]
    %v3936 = vld [vmem:[#allocation7 + $0x138] sm:$0xff]
    %v3937 = vld [vmem:[#allocation7 + $0x140] sm:$0xff]
    %v3938 = vld [vmem:[#allocation7 + $0x148] sm:$0xff]
    %v3939 = vld [vmem:[#allocation7 + $0x150] sm:$0xff]
    %v3940 = vld [vmem:[#allocation7 + $0x158] sm:$0xff]
    %v3941 = vld [vmem:[#allocation7 + $0x160] sm:$0xff]
    %v3942 = vld [vmem:[#allocation7 + $0x168] sm:$0xff]
    %v3943 = vld [vmem:[#allocation7 + $0x170] sm:$0xff]
    %v3944 = vld [vmem:[#allocation7 + $0x178] sm:$0xff]
    %v3945 = vld [vmem:[#allocation7 + $0x180] sm:$0xff]
    %v3946 = vld [vmem:[#allocation7 + $0x188] sm:$0xff]
    %v3947 = vld [vmem:[#allocation7 + $0x190] sm:$0xff]
    %v3948 = vld [vmem:[#allocation7 + $0x198] sm:$0xff]
    %v3949 = vld [vmem:[#allocation7 + $0x1a0] sm:$0xff]
    %v3950 = vld [vmem:[#allocation7 + $0x1a8] sm:$0xff]
    %v3951 = vld [vmem:[#allocation7 + $0x1b0] sm:$0xff]
    %v3952 = vld [vmem:[#allocation7 + $0x1b8] sm:$0xff]
    %v3953 = vld [vmem:[#allocation7 + $0x1c0] sm:$0xff]
    %v3954 = vld [vmem:[#allocation7 + $0x1c8] sm:$0xff]
    %v3955 = vld [vmem:[#allocation7 + $0x1d0] sm:$0xff]
    %v3956 = vld [vmem:[#allocation7 + $0x1d8] sm:$0xff]
    %v3957 = vld [vmem:[#allocation7 + $0x1e0] sm:$0xff]
    %v3958 = vld [vmem:[#allocation7 + $0x1e8] sm:$0xff]
    %v3959 = vld [vmem:[#allocation7 + $0x1f0] sm:$0xff]
    %v3960 = vld [vmem:[#allocation7 + $0x1f8] sm:$0xff]
    %v3961 = vld [vmem:[#allocation7 + $0x200] sm:$0xff]
    %v3962 = vld [vmem:[#allocation7 + $0x208] sm:$0xff]
    %v3963 = vld [vmem:[#allocation7 + $0x210] sm:$0xff]
    %v3964 = vld [vmem:[#allocation7 + $0x218] sm:$0xff]
    %v3965 = vld [vmem:[#allocation7 + $0x220] sm:$0xff]
    %v3966 = vld [vmem:[#allocation7 + $0x228] sm:$0xff]
    %v3967 = vld [vmem:[#allocation7 + $0x230] sm:$0xff]
    %v3968 = vld [vmem:[#allocation7 + $0x238] sm:$0xff]
    %v3969 = vld [vmem:[#allocation7 + $0x240] sm:$0xff]
    %v3970 = vld [vmem:[#allocation7 + $0x248] sm:$0xff]
    %v3971 = vld [vmem:[#allocation7 + $0x250] sm:$0xff]
    %v3972 = vld [vmem:[#allocation7 + $0x258] sm:$0xff]
    %v3973 = vld [vmem:[#allocation7 + $0x260] sm:$0xff]
    %v3974 = vld [vmem:[#allocation7 + $0x268] sm:$0xff]
    %v3975 = vld [vmem:[#allocation7 + $0x270] sm:$0xff]
    %v3976 = vld [vmem:[#allocation7 + $0x278] sm:$0xff]
    %v3977 = vld [vmem:[#allocation7 + $0x280] sm:$0xff]
    %v3978 = vld [vmem:[#allocation7 + $0x288] sm:$0xff]
    %v3979 = vld [vmem:[#allocation7 + $0x290] sm:$0xff]
    %v3980 = vld [vmem:[#allocation7 + $0x298] sm:$0xff]
    %v3981 = vld [vmem:[#allocation7 + $0x2a0] sm:$0xff]
    %v3982 = vld [vmem:[#allocation7 + $0x2a8] sm:$0xff]
    %v3983 = vld [vmem:[#allocation7 + $0x2b0] sm:$0xff]
    %v3984 = vld [vmem:[#allocation7 + $0x2b8] sm:$0xff]
    %v3985 = vld [vmem:[#allocation7 + $0x2c0] sm:$0xff]
    %v3986 = vld [vmem:[#allocation7 + $0x2c8] sm:$0xff]
    %v3987 = vld [vmem:[#allocation7 + $0x2d0] sm:$0xff]
    %v3988 = vld [vmem:[#allocation7 + $0x2d8] sm:$0xff]
    %v3989 = vld [vmem:[#allocation7 + $0x2e0] sm:$0xff]
    %v3990 = vld [vmem:[#allocation7 + $0x2e8] sm:$0xff]
    %v3991 = vld [vmem:[#allocation7 + $0x2f0] sm:$0xff]
    %v3992 = vld [vmem:[#allocation7 + $0x2f8] sm:$0xff]
    %v3993 = vld [vmem:[#allocation7 + $0x300] sm:$0xff]
    %v3994 = vld [vmem:[#allocation7 + $0x308] sm:$0xff]
    %v3995 = vld [vmem:[#allocation7 + $0x310] sm:$0xff]
    %v3996 = vld [vmem:[#allocation7 + $0x318] sm:$0xff]
    %v3997 = vld [vmem:[#allocation7 + $0x320] sm:$0xff]
    %v3998 = vld [vmem:[#allocation7 + $0x328] sm:$0xff]
    %v3999 = vld [vmem:[#allocation7 + $0x330] sm:$0xff]
    %v4000 = vld [vmem:[#allocation7 + $0x338] sm:$0xff]
    %v4001 = vld [vmem:[#allocation7 + $0x340] sm:$0xff]
    %v4002 = vld [vmem:[#allocation7 + $0x348] sm:$0xff]
    %v4003 = vld [vmem:[#allocation7 + $0x350] sm:$0xff]
    %v4004 = vld [vmem:[#allocation7 + $0x358] sm:$0xff]
    %v4005 = vld [vmem:[#allocation7 + $0x360] sm:$0xff]
    %v4006 = vld [vmem:[#allocation7 + $0x368] sm:$0xff]
    %v4007 = vld [vmem:[#allocation7 + $0x370] sm:$0xff]
    %v4008 = vld [vmem:[#allocation7 + $0x378] sm:$0xff]
    %v4009 = vld [vmem:[#allocation7 + $0x380] sm:$0xff]
    %v4010 = vld [vmem:[#allocation7 + $0x388] sm:$0xff]
    %v4011 = vld [vmem:[#allocation7 + $0x390] sm:$0xff]
    %v4012 = vld [vmem:[#allocation7 + $0x398] sm:$0xff]
    %v4013 = vld [vmem:[#allocation7 + $0x3a0] sm:$0xff]
    %v4014 = vld [vmem:[#allocation7 + $0x3a8] sm:$0xff]
    %v4015 = vld [vmem:[#allocation7 + $0x3b0] sm:$0xff]
    %v4016 = vld [vmem:[#allocation7 + $0x3b8] sm:$0xff]
    %v4017 = vld [vmem:[#allocation7 + $0x3c0] sm:$0xff]
    %v4018 = vld [vmem:[#allocation7 + $0x3c8] sm:$0xff]
    %v4019 = vld [vmem:[#allocation7 + $0x3d0] sm:$0xff]
    %v4020 = vld [vmem:[#allocation7 + $0x3d8] sm:$0xff]
    %v4021 = vld [vmem:[#allocation7 + $0x3e0] sm:$0xff]
    %v4022 = vld [vmem:[#allocation7 + $0x3e8] sm:$0xff]
    %v4023 = vld [vmem:[#allocation7 + $0x3f0] sm:$0xff]
    %v4024 = vld [vmem:[#allocation7 + $0x3f8] sm:$0xff]
    %v4025 = vld [vmem:[#allocation7 + $0x400] sm:$0xff]
    %v4026 = vld [vmem:[#allocation7 + $0x408] sm:$0xff]
    %v4027 = vld [vmem:[#allocation7 + $0x410] sm:$0xff]
    %v4028 = vld [vmem:[#allocation7 + $0x418] sm:$0xff]
    %v4029 = vld [vmem:[#allocation7 + $0x420] sm:$0xff]
    %v4030 = vld [vmem:[#allocation7 + $0x428] sm:$0xff]
    %v4031 = vld [vmem:[#allocation7 + $0x430] sm:$0xff]
    %v4032 = vld [vmem:[#allocation7 + $0x438] sm:$0xff]
    %v4033 = vld [vmem:[#allocation7 + $0x440] sm:$0xff]
    %v4034 = vld [vmem:[#allocation7 + $0x448] sm:$0xff]
    %v4035 = vld [vmem:[#allocation7 + $0x450] sm:$0xff]
    %v4036 = vld [vmem:[#allocation7 + $0x458] sm:$0xff]
    %v4037 = vld [vmem:[#allocation7 + $0x460] sm:$0xff]
    %v4038 = vld [vmem:[#allocation7 + $0x468] sm:$0xff]
    %v4039 = vld [vmem:[#allocation7 + $0x470] sm:$0xff]
    %v4040 = vld [vmem:[#allocation7 + $0x478] sm:$0xff]
    %v4041 = vld [vmem:[#allocation7 + $0x480] sm:$0xff]
    %v4042 = vld [vmem:[#allocation7 + $0x488] sm:$0xff]
    %v4043 = vld [vmem:[#allocation7 + $0x490] sm:$0xff]
    %v4044 = vld [vmem:[#allocation7 + $0x498] sm:$0xff]
    %v4045 = vld [vmem:[#allocation7 + $0x4a0] sm:$0xff]
    %v4046 = vld [vmem:[#allocation7 + $0x4a8] sm:$0xff]
    %v4047 = vld [vmem:[#allocation7 + $0x4b0] sm:$0xff]
    %v4048 = vld [vmem:[#allocation7 + $0x4b8] sm:$0xff]
    %v4049 = vld [vmem:[#allocation7 + $0x4c0] sm:$0xff]
    %v4050 = vld [vmem:[#allocation7 + $0x4c8] sm:$0xff]
    %v4051 = vld [vmem:[#allocation7 + $0x4d0] sm:$0xff]
    %v4052 = vld [vmem:[#allocation7 + $0x4d8] sm:$0xff]
    %v4053 = vld [vmem:[#allocation7 + $0x4e0] sm:$0xff]
    %v4054 = vld [vmem:[#allocation7 + $0x4e8] sm:$0xff]
    %v4055 = vld [vmem:[#allocation7 + $0x4f0] sm:$0xff]
    %v4056 = vld [vmem:[#allocation7 + $0x4f8] sm:$0xff]
    %v4057 = vld [vmem:[#allocation7 + $0x500] sm:$0xff]
    %v4058 = vld [vmem:[#allocation7 + $0x508] sm:$0xff]
    %v4059 = vld [vmem:[#allocation7 + $0x510] sm:$0xff]
    %v4060 = vld [vmem:[#allocation7 + $0x518] sm:$0xff]
    %v4061 = vld [vmem:[#allocation7 + $0x520] sm:$0xff]
    %v4062 = vld [vmem:[#allocation7 + $0x528] sm:$0xff]
    %v4063 = vld [vmem:[#allocation7 + $0x530] sm:$0xff]
    %v4064 = vld [vmem:[#allocation7 + $0x538] sm:$0xff]
    %v4065 = vld [vmem:[#allocation7 + $0x540] sm:$0xff]
    %v4066 = vld [vmem:[#allocation7 + $0x548] sm:$0xff]
    %v4067 = vld [vmem:[#allocation7 + $0x550] sm:$0xff]
    %v4068 = vld [vmem:[#allocation7 + $0x558] sm:$0xff]
    %v4069 = vld [vmem:[#allocation7 + $0x560] sm:$0xff]
    %v4070 = vld [vmem:[#allocation7 + $0x568] sm:$0xff]
    %v4071 = vld [vmem:[#allocation7 + $0x570] sm:$0xff]
    %v4072 = vld [vmem:[#allocation7 + $0x578] sm:$0xff]
    %v4073 = vld [vmem:[#allocation7 + $0x580] sm:$0xff]
    %v4074 = vld [vmem:[#allocation7 + $0x588] sm:$0xff]
    %v4075 = vld [vmem:[#allocation7 + $0x590] sm:$0xff]
    %v4076 = vld [vmem:[#allocation7 + $0x598] sm:$0xff]
    %v4077 = vld [vmem:[#allocation7 + $0x5a0] sm:$0xff]
    %v4078 = vld [vmem:[#allocation7 + $0x5a8] sm:$0xff]
    %v4079 = vld [vmem:[#allocation7 + $0x5b0] sm:$0xff]
    %v4080 = vld [vmem:[#allocation7 + $0x5b8] sm:$0xff]
    %v4081 = vld [vmem:[#allocation7 + $0x5c0] sm:$0xff]
    %v4082 = vld [vmem:[#allocation7 + $0x5c8] sm:$0xff]
    %v4083 = vld [vmem:[#allocation7 + $0x5d0] sm:$0xff]
    %v4084 = vld [vmem:[#allocation7 + $0x5d8] sm:$0xff]
    %v4085 = vld [vmem:[#allocation7 + $0x5e0] sm:$0xff]
    %v4086 = vld [vmem:[#allocation7 + $0x5e8] sm:$0xff]
    %v4087 = vld [vmem:[#allocation7 + $0x5f0] sm:$0xff]
    %v4088 = vld [vmem:[#allocation7 + $0x5f8] sm:$0xff]
    %v4089 = vld [vmem:[#allocation7 + $0x600] sm:$0xff]
    %v4090 = vld [vmem:[#allocation7 + $0x608] sm:$0xff]
    %v4091 = vld [vmem:[#allocation7 + $0x610] sm:$0xff]
    %v4092 = vld [vmem:[#allocation7 + $0x618] sm:$0xff]
    %v4093 = vld [vmem:[#allocation7 + $0x620] sm:$0xff]
    %v4094 = vld [vmem:[#allocation7 + $0x628] sm:$0xff]
    %v4095 = vld [vmem:[#allocation7 + $0x630] sm:$0xff]
    %v4096 = vld [vmem:[#allocation7 + $0x638] sm:$0xff]
    %v4097 = vld [vmem:[#allocation7 + $0x640] sm:$0xff]
    %v4098 = vld [vmem:[#allocation7 + $0x648] sm:$0xff]
    %v4099 = vld [vmem:[#allocation7 + $0x650] sm:$0xff]
    %v4100 = vld [vmem:[#allocation7 + $0x658] sm:$0xff]
    %v4101 = vld [vmem:[#allocation7 + $0x660] sm:$0xff]
    %v4102 = vld [vmem:[#allocation7 + $0x668] sm:$0xff]
    %v4103 = vld [vmem:[#allocation7 + $0x670] sm:$0xff]
    %v4104 = vld [vmem:[#allocation7 + $0x678] sm:$0xff]
    %v4105 = vld [vmem:[#allocation7 + $0x680] sm:$0xff]
    %v4106 = vld [vmem:[#allocation7 + $0x688] sm:$0xff]
    %v4107 = vld [vmem:[#allocation7 + $0x690] sm:$0xff]
    %v4108 = vld [vmem:[#allocation7 + $0x698] sm:$0xff]
    %v4109 = vld [vmem:[#allocation7 + $0x6a0] sm:$0xff]
    %v4110 = vld [vmem:[#allocation7 + $0x6a8] sm:$0xff]
    %v4111 = vld [vmem:[#allocation7 + $0x6b0] sm:$0xff]
    %v4112 = vld [vmem:[#allocation7 + $0x6b8] sm:$0xff]
    %v4113 = vld [vmem:[#allocation7 + $0x6c0] sm:$0xff]
    %v4114 = vld [vmem:[#allocation7 + $0x6c8] sm:$0xff]
    %v4115 = vld [vmem:[#allocation7 + $0x6d0] sm:$0xff]
    %v4116 = vld [vmem:[#allocation7 + $0x6d8] sm:$0xff]
    %v4117 = vld [vmem:[#allocation7 + $0x6e0] sm:$0xff]
    %v4118 = vld [vmem:[#allocation7 + $0x6e8] sm:$0xff]
    %v4119 = vld [vmem:[#allocation7 + $0x6f0] sm:$0xff]
    %v4120 = vld [vmem:[#allocation7 + $0x6f8] sm:$0xff]
    %v4121 = vld [vmem:[#allocation7 + $0x700] sm:$0xff]
    %v4122 = vld [vmem:[#allocation7 + $0x708] sm:$0xff]
    %v4123 = vld [vmem:[#allocation7 + $0x710] sm:$0xff]
    %v4124 = vld [vmem:[#allocation7 + $0x718] sm:$0xff]
    %v4125 = vld [vmem:[#allocation7 + $0x720] sm:$0xff]
    %v4126 = vld [vmem:[#allocation7 + $0x728] sm:$0xff]
    %v4127 = vld [vmem:[#allocation7 + $0x730] sm:$0xff]
    %v4128 = vld [vmem:[#allocation7 + $0x738] sm:$0xff]
    %v4129 = vld [vmem:[#allocation7 + $0x740] sm:$0xff]
    %v4130 = vld [vmem:[#allocation7 + $0x748] sm:$0xff]
    %v4131 = vld [vmem:[#allocation7 + $0x750] sm:$0xff]
    %v4132 = vld [vmem:[#allocation7 + $0x758] sm:$0xff]
    %v4133 = vld [vmem:[#allocation7 + $0x760] sm:$0xff]
    %v4134 = vld [vmem:[#allocation7 + $0x768] sm:$0xff]
    %v4135 = vld [vmem:[#allocation7 + $0x770] sm:$0xff]
    %v4136 = vld [vmem:[#allocation7 + $0x778] sm:$0xff]
    %v4137 = vld [vmem:[#allocation7 + $0x780] sm:$0xff]
    %v4138 = vld [vmem:[#allocation7 + $0x788] sm:$0xff]
    %v4139 = vld [vmem:[#allocation7 + $0x790] sm:$0xff]
    %v4140 = vld [vmem:[#allocation7 + $0x798] sm:$0xff]
    %v4141 = vld [vmem:[#allocation7 + $0x7a0] sm:$0xff]
    %v4142 = vld [vmem:[#allocation7 + $0x7a8] sm:$0xff]
    %v4143 = vld [vmem:[#allocation7 + $0x7b0] sm:$0xff]
    %v4144 = vld [vmem:[#allocation7 + $0x7b8] sm:$0xff]
    %v4145 = vld [vmem:[#allocation7 + $0x7c0] sm:$0xff]
    %v4146 = vld [vmem:[#allocation7 + $0x7c8] sm:$0xff]
    %v4147 = vld [vmem:[#allocation7 + $0x7d0] sm:$0xff]
    %v4148 = vld [vmem:[#allocation7 + $0x7d8] sm:$0xff]
    %v4149 = vld [vmem:[#allocation7 + $0x7e0] sm:$0xff]
    %v4150 = vld [vmem:[#allocation7 + $0x7e8] sm:$0xff]
    %v4151 = vld [vmem:[#allocation7 + $0x7f0] sm:$0xff]
    %v4152 = vld [vmem:[#allocation7 + $0x7f8] sm:$0xff]
    %v4409 = vunpack.c.l.b16 %v3897
    %v4410 = vunpack.c.h.b16 %v3897
    %v4411 = vunpack.c.l.b16 %v3898
    %v4412 = vunpack.c.h.b16 %v3898
    %v4413 = vunpack.c.l.b16 %v3899
    %v4414 = vunpack.c.h.b16 %v3899
    %v4415 = vunpack.c.l.b16 %v3900
    %v4416 = vunpack.c.h.b16 %v3900
    %v4417 = vunpack.c.l.b16 %v3901
    %v4418 = vunpack.c.h.b16 %v3901
    %v4419 = vunpack.c.l.b16 %v3902
    %v4420 = vunpack.c.h.b16 %v3902
    %v4421 = vunpack.c.l.b16 %v3903
    %v4422 = vunpack.c.h.b16 %v3903
    %v4423 = vunpack.c.l.b16 %v3904
    %v4424 = vunpack.c.h.b16 %v3904
    %v4425 = vunpack.c.l.b16 %v3905
    %v4426 = vunpack.c.h.b16 %v3905
    %v4427 = vunpack.c.l.b16 %v3906
    %v4428 = vunpack.c.h.b16 %v3906
    %v4429 = vunpack.c.l.b16 %v3907
    %v4430 = vunpack.c.h.b16 %v3907
    %v4431 = vunpack.c.l.b16 %v3908
    %v4432 = vunpack.c.h.b16 %v3908
    %v4433 = vunpack.c.l.b16 %v3909
    %v4434 = vunpack.c.h.b16 %v3909
    %v4435 = vunpack.c.l.b16 %v3910
    %v4436 = vunpack.c.h.b16 %v3910
    %v4437 = vunpack.c.l.b16 %v3911
    %v4438 = vunpack.c.h.b16 %v3911
    %v4439 = vunpack.c.l.b16 %v3912
    %v4440 = vunpack.c.h.b16 %v3912
    %v4441 = vunpack.c.l.b16 %v3913
    %v4442 = vunpack.c.h.b16 %v3913
    %v4443 = vunpack.c.l.b16 %v3914
    %v4444 = vunpack.c.h.b16 %v3914
    %v4445 = vunpack.c.l.b16 %v3915
    %v4446 = vunpack.c.h.b16 %v3915
    %v4447 = vunpack.c.l.b16 %v3916
    %v4448 = vunpack.c.h.b16 %v3916
    %v4449 = vunpack.c.l.b16 %v3917
    %v4450 = vunpack.c.h.b16 %v3917
    %v4451 = vunpack.c.l.b16 %v3918
    %v4452 = vunpack.c.h.b16 %v3918
    %v4453 = vunpack.c.l.b16 %v3919
    %v4454 = vunpack.c.h.b16 %v3919
    %v4455 = vunpack.c.l.b16 %v3920
    %v4456 = vunpack.c.h.b16 %v3920
    %v4457 = vunpack.c.l.b16 %v3921
    %v4458 = vunpack.c.h.b16 %v3921
    %v4459 = vunpack.c.l.b16 %v3922
    %v4460 = vunpack.c.h.b16 %v3922
    %v4461 = vunpack.c.l.b16 %v3923
    %v4462 = vunpack.c.h.b16 %v3923
    %v4463 = vunpack.c.l.b16 %v3924
    %v4464 = vunpack.c.h.b16 %v3924
    %v4465 = vunpack.c.l.b16 %v3925
    %v4466 = vunpack.c.h.b16 %v3925
    %v4467 = vunpack.c.l.b16 %v3926
    %v4468 = vunpack.c.h.b16 %v3926
    %v4469 = vunpack.c.l.b16 %v3927
    %v4470 = vunpack.c.h.b16 %v3927
    %v4471 = vunpack.c.l.b16 %v3928
    %v4472 = vunpack.c.h.b16 %v3928
    %v4473 = vunpack.c.l.b16 %v3929
    %v4474 = vunpack.c.h.b16 %v3929
    %v4475 = vunpack.c.l.b16 %v3930
    %v4476 = vunpack.c.h.b16 %v3930
    %v4477 = vunpack.c.l.b16 %v3931
    %v4478 = vunpack.c.h.b16 %v3931
    %v4479 = vunpack.c.l.b16 %v3932
    %v4480 = vunpack.c.h.b16 %v3932
    %v4481 = vunpack.c.l.b16 %v3933
    %v4482 = vunpack.c.h.b16 %v3933
    %v4483 = vunpack.c.l.b16 %v3934
    %v4484 = vunpack.c.h.b16 %v3934
    %v4485 = vunpack.c.l.b16 %v3935
    %v4486 = vunpack.c.h.b16 %v3935
    %v4487 = vunpack.c.l.b16 %v3936
    %v4488 = vunpack.c.h.b16 %v3936
    %v4489 = vunpack.c.l.b16 %v3937
    %v4490 = vunpack.c.h.b16 %v3937
    %v4491 = vunpack.c.l.b16 %v3938
    %v4492 = vunpack.c.h.b16 %v3938
    %v4493 = vunpack.c.l.b16 %v3939
    %v4494 = vunpack.c.h.b16 %v3939
    %v4495 = vunpack.c.l.b16 %v3940
    %v4496 = vunpack.c.h.b16 %v3940
    %v4497 = vunpack.c.l.b16 %v3941
    %v4498 = vunpack.c.h.b16 %v3941
    %v4499 = vunpack.c.l.b16 %v3942
    %v4500 = vunpack.c.h.b16 %v3942
    %v4501 = vunpack.c.l.b16 %v3943
    %v4502 = vunpack.c.h.b16 %v3943
    %v4503 = vunpack.c.l.b16 %v3944
    %v4504 = vunpack.c.h.b16 %v3944
    %v4505 = vunpack.c.l.b16 %v3945
    %v4506 = vunpack.c.h.b16 %v3945
    %v4507 = vunpack.c.l.b16 %v3946
    %v4508 = vunpack.c.h.b16 %v3946
    %v4509 = vunpack.c.l.b16 %v3947
    %v4510 = vunpack.c.h.b16 %v3947
    %v4511 = vunpack.c.l.b16 %v3948
    %v4512 = vunpack.c.h.b16 %v3948
    %v4513 = vunpack.c.l.b16 %v3949
    %v4514 = vunpack.c.h.b16 %v3949
    %v4515 = vunpack.c.l.b16 %v3950
    %v4516 = vunpack.c.h.b16 %v3950
    %v4517 = vunpack.c.l.b16 %v3951
    %v4518 = vunpack.c.h.b16 %v3951
    %v4519 = vunpack.c.l.b16 %v3952
    %v4520 = vunpack.c.h.b16 %v3952
    %v4521 = vunpack.c.l.b16 %v3953
    %v4522 = vunpack.c.h.b16 %v3953
    %v4523 = vunpack.c.l.b16 %v3954
    %v4524 = vunpack.c.h.b16 %v3954
    %v4525 = vunpack.c.l.b16 %v3955
    %v4526 = vunpack.c.h.b16 %v3955
    %v4527 = vunpack.c.l.b16 %v3956
    %v4528 = vunpack.c.h.b16 %v3956
    %v4529 = vunpack.c.l.b16 %v3957
    %v4530 = vunpack.c.h.b16 %v3957
    %v4531 = vunpack.c.l.b16 %v3958
    %v4532 = vunpack.c.h.b16 %v3958
    %v4533 = vunpack.c.l.b16 %v3959
    %v4534 = vunpack.c.h.b16 %v3959
    %v4535 = vunpack.c.l.b16 %v3960
    %v4536 = vunpack.c.h.b16 %v3960
    %v4537 = vunpack.c.l.b16 %v3961
    %v4538 = vunpack.c.h.b16 %v3961
    %v4539 = vunpack.c.l.b16 %v3962
    %v4540 = vunpack.c.h.b16 %v3962
    %v4541 = vunpack.c.l.b16 %v3963
    %v4542 = vunpack.c.h.b16 %v3963
    %v4543 = vunpack.c.l.b16 %v3964
    %v4544 = vunpack.c.h.b16 %v3964
    %v4545 = vunpack.c.l.b16 %v3965
    %v4546 = vunpack.c.h.b16 %v3965
    %v4547 = vunpack.c.l.b16 %v3966
    %v4548 = vunpack.c.h.b16 %v3966
    %v4549 = vunpack.c.l.b16 %v3967
    %v4550 = vunpack.c.h.b16 %v3967
    %v4551 = vunpack.c.l.b16 %v3968
    %v4552 = vunpack.c.h.b16 %v3968
    %v4553 = vunpack.c.l.b16 %v3969
    %v4554 = vunpack.c.h.b16 %v3969
    %v4555 = vunpack.c.l.b16 %v3970
    %v4556 = vunpack.c.h.b16 %v3970
    %v4557 = vunpack.c.l.b16 %v3971
    %v4558 = vunpack.c.h.b16 %v3971
    %v4559 = vunpack.c.l.b16 %v3972
    %v4560 = vunpack.c.h.b16 %v3972
    %v4561 = vunpack.c.l.b16 %v3973
    %v4562 = vunpack.c.h.b16 %v3973
    %v4563 = vunpack.c.l.b16 %v3974
    %v4564 = vunpack.c.h.b16 %v3974
    %v4565 = vunpack.c.l.b16 %v3975
    %v4566 = vunpack.c.h.b16 %v3975
    %v4567 = vunpack.c.l.b16 %v3976
    %v4568 = vunpack.c.h.b16 %v3976
    %v4569 = vunpack.c.l.b16 %v3977
    %v4570 = vunpack.c.h.b16 %v3977
    %v4571 = vunpack.c.l.b16 %v3978
    %v4572 = vunpack.c.h.b16 %v3978
    %v4573 = vunpack.c.l.b16 %v3979
    %v4574 = vunpack.c.h.b16 %v3979
    %v4575 = vunpack.c.l.b16 %v3980
    %v4576 = vunpack.c.h.b16 %v3980
    %v4577 = vunpack.c.l.b16 %v3981
    %v4578 = vunpack.c.h.b16 %v3981
    %v4579 = vunpack.c.l.b16 %v3982
    %v4580 = vunpack.c.h.b16 %v3982
    %v4581 = vunpack.c.l.b16 %v3983
    %v4582 = vunpack.c.h.b16 %v3983
    %v4583 = vunpack.c.l.b16 %v3984
    %v4584 = vunpack.c.h.b16 %v3984
    %v4585 = vunpack.c.l.b16 %v3985
    %v4586 = vunpack.c.h.b16 %v3985
    %v4587 = vunpack.c.l.b16 %v3986
    %v4588 = vunpack.c.h.b16 %v3986
    %v4589 = vunpack.c.l.b16 %v3987
    %v4590 = vunpack.c.h.b16 %v3987
    %v4591 = vunpack.c.l.b16 %v3988
    %v4592 = vunpack.c.h.b16 %v3988
    %v4593 = vunpack.c.l.b16 %v3989
    %v4594 = vunpack.c.h.b16 %v3989
    %v4595 = vunpack.c.l.b16 %v3990
    %v4596 = vunpack.c.h.b16 %v3990
    %v4597 = vunpack.c.l.b16 %v3991
    %v4598 = vunpack.c.h.b16 %v3991
    %v4599 = vunpack.c.l.b16 %v3992
    %v4600 = vunpack.c.h.b16 %v3992
    %v4601 = vunpack.c.l.b16 %v3993
    %v4602 = vunpack.c.h.b16 %v3993
    %v4603 = vunpack.c.l.b16 %v3994
    %v4604 = vunpack.c.h.b16 %v3994
    %v4605 = vunpack.c.l.b16 %v3995
    %v4606 = vunpack.c.h.b16 %v3995
    %v4607 = vunpack.c.l.b16 %v3996
    %v4608 = vunpack.c.h.b16 %v3996
    %v4609 = vunpack.c.l.b16 %v3997
    %v4610 = vunpack.c.h.b16 %v3997
    %v4611 = vunpack.c.l.b16 %v3998
    %v4612 = vunpack.c.h.b16 %v3998
    %v4613 = vunpack.c.l.b16 %v3999
    %v4614 = vunpack.c.h.b16 %v3999
    %v4615 = vunpack.c.l.b16 %v4000
    %v4616 = vunpack.c.h.b16 %v4000
    %v4617 = vunpack.c.l.b16 %v4001
    %v4618 = vunpack.c.h.b16 %v4001
    %v4619 = vunpack.c.l.b16 %v4002
    %v4620 = vunpack.c.h.b16 %v4002
    %v4621 = vunpack.c.l.b16 %v4003
    %v4622 = vunpack.c.h.b16 %v4003
    %v4623 = vunpack.c.l.b16 %v4004
    %v4624 = vunpack.c.h.b16 %v4004
    %v4625 = vunpack.c.l.b16 %v4005
    %v4626 = vunpack.c.h.b16 %v4005
    %v4627 = vunpack.c.l.b16 %v4006
    %v4628 = vunpack.c.h.b16 %v4006
    %v4629 = vunpack.c.l.b16 %v4007
    %v4630 = vunpack.c.h.b16 %v4007
    %v4631 = vunpack.c.l.b16 %v4008
    %v4632 = vunpack.c.h.b16 %v4008
    %v4633 = vunpack.c.l.b16 %v4009
    %v4634 = vunpack.c.h.b16 %v4009
    %v4635 = vunpack.c.l.b16 %v4010
    %v4636 = vunpack.c.h.b16 %v4010
    %v4637 = vunpack.c.l.b16 %v4011
    %v4638 = vunpack.c.h.b16 %v4011
    %v4639 = vunpack.c.l.b16 %v4012
    %v4640 = vunpack.c.h.b16 %v4012
    %v4641 = vunpack.c.l.b16 %v4013
    %v4642 = vunpack.c.h.b16 %v4013
    %v4643 = vunpack.c.l.b16 %v4014
    %v4644 = vunpack.c.h.b16 %v4014
    %v4645 = vunpack.c.l.b16 %v4015
    %v4646 = vunpack.c.h.b16 %v4015
    %v4647 = vunpack.c.l.b16 %v4016
    %v4648 = vunpack.c.h.b16 %v4016
    %v4649 = vunpack.c.l.b16 %v4017
    %v4650 = vunpack.c.h.b16 %v4017
    %v4651 = vunpack.c.l.b16 %v4018
    %v4652 = vunpack.c.h.b16 %v4018
    %v4653 = vunpack.c.l.b16 %v4019
    %v4654 = vunpack.c.h.b16 %v4019
    %v4655 = vunpack.c.l.b16 %v4020
    %v4656 = vunpack.c.h.b16 %v4020
    %v4657 = vunpack.c.l.b16 %v4021
    %v4658 = vunpack.c.h.b16 %v4021
    %v4659 = vunpack.c.l.b16 %v4022
    %v4660 = vunpack.c.h.b16 %v4022
    %v4661 = vunpack.c.l.b16 %v4023
    %v4662 = vunpack.c.h.b16 %v4023
    %v4663 = vunpack.c.l.b16 %v4024
    %v4664 = vunpack.c.h.b16 %v4024
    %v4665 = vunpack.c.l.b16 %v4025
    %v4666 = vunpack.c.h.b16 %v4025
    %v4667 = vunpack.c.l.b16 %v4026
    %v4668 = vunpack.c.h.b16 %v4026
    %v4669 = vunpack.c.l.b16 %v4027
    %v4670 = vunpack.c.h.b16 %v4027
    %v4671 = vunpack.c.l.b16 %v4028
    %v4672 = vunpack.c.h.b16 %v4028
    %v4673 = vunpack.c.l.b16 %v4029
    %v4674 = vunpack.c.h.b16 %v4029
    %v4675 = vunpack.c.l.b16 %v4030
    %v4676 = vunpack.c.h.b16 %v4030
    %v4677 = vunpack.c.l.b16 %v4031
    %v4678 = vunpack.c.h.b16 %v4031
    %v4679 = vunpack.c.l.b16 %v4032
    %v4680 = vunpack.c.h.b16 %v4032
    %v4681 = vunpack.c.l.b16 %v4033
    %v4682 = vunpack.c.h.b16 %v4033
    %v4683 = vunpack.c.l.b16 %v4034
    %v4684 = vunpack.c.h.b16 %v4034
    %v4685 = vunpack.c.l.b16 %v4035
    %v4686 = vunpack.c.h.b16 %v4035
    %v4687 = vunpack.c.l.b16 %v4036
    %v4688 = vunpack.c.h.b16 %v4036
    %v4689 = vunpack.c.l.b16 %v4037
    %v4690 = vunpack.c.h.b16 %v4037
    %v4691 = vunpack.c.l.b16 %v4038
    %v4692 = vunpack.c.h.b16 %v4038
    %v4693 = vunpack.c.l.b16 %v4039
    %v4694 = vunpack.c.h.b16 %v4039
    %v4695 = vunpack.c.l.b16 %v4040
    %v4696 = vunpack.c.h.b16 %v4040
    %v4697 = vunpack.c.l.b16 %v4041
    %v4698 = vunpack.c.h.b16 %v4041
    %v4699 = vunpack.c.l.b16 %v4042
    %v4700 = vunpack.c.h.b16 %v4042
    %v4701 = vunpack.c.l.b16 %v4043
    %v4702 = vunpack.c.h.b16 %v4043
    %v4703 = vunpack.c.l.b16 %v4044
    %v4704 = vunpack.c.h.b16 %v4044
    %v4705 = vunpack.c.l.b16 %v4045
    %v4706 = vunpack.c.h.b16 %v4045
    %v4707 = vunpack.c.l.b16 %v4046
    %v4708 = vunpack.c.h.b16 %v4046
    %v4709 = vunpack.c.l.b16 %v4047
    %v4710 = vunpack.c.h.b16 %v4047
    %v4711 = vunpack.c.l.b16 %v4048
    %v4712 = vunpack.c.h.b16 %v4048
    %v4713 = vunpack.c.l.b16 %v4049
    %v4714 = vunpack.c.h.b16 %v4049
    %v4715 = vunpack.c.l.b16 %v4050
    %v4716 = vunpack.c.h.b16 %v4050
    %v4717 = vunpack.c.l.b16 %v4051
    %v4718 = vunpack.c.h.b16 %v4051
    %v4719 = vunpack.c.l.b16 %v4052
    %v4720 = vunpack.c.h.b16 %v4052
    %v4721 = vunpack.c.l.b16 %v4053
    %v4722 = vunpack.c.h.b16 %v4053
    %v4723 = vunpack.c.l.b16 %v4054
    %v4724 = vunpack.c.h.b16 %v4054
    %v4725 = vunpack.c.l.b16 %v4055
    %v4726 = vunpack.c.h.b16 %v4055
    %v4727 = vunpack.c.l.b16 %v4056
    %v4728 = vunpack.c.h.b16 %v4056
    %v4729 = vunpack.c.l.b16 %v4057
    %v4730 = vunpack.c.h.b16 %v4057
    %v4731 = vunpack.c.l.b16 %v4058
    %v4732 = vunpack.c.h.b16 %v4058
    %v4733 = vunpack.c.l.b16 %v4059
    %v4734 = vunpack.c.h.b16 %v4059
    %v4735 = vunpack.c.l.b16 %v4060
    %v4736 = vunpack.c.h.b16 %v4060
    %v4737 = vunpack.c.l.b16 %v4061
    %v4738 = vunpack.c.h.b16 %v4061
    %v4739 = vunpack.c.l.b16 %v4062
    %v4740 = vunpack.c.h.b16 %v4062
    %v4741 = vunpack.c.l.b16 %v4063
    %v4742 = vunpack.c.h.b16 %v4063
    %v4743 = vunpack.c.l.b16 %v4064
    %v4744 = vunpack.c.h.b16 %v4064
    %v4745 = vunpack.c.l.b16 %v4065
    %v4746 = vunpack.c.h.b16 %v4065
    %v4747 = vunpack.c.l.b16 %v4066
    %v4748 = vunpack.c.h.b16 %v4066
    %v4749 = vunpack.c.l.b16 %v4067
    %v4750 = vunpack.c.h.b16 %v4067
    %v4751 = vunpack.c.l.b16 %v4068
    %v4752 = vunpack.c.h.b16 %v4068
    %v4753 = vunpack.c.l.b16 %v4069
    %v4754 = vunpack.c.h.b16 %v4069
    %v4755 = vunpack.c.l.b16 %v4070
    %v4756 = vunpack.c.h.b16 %v4070
    %v4757 = vunpack.c.l.b16 %v4071
    %v4758 = vunpack.c.h.b16 %v4071
    %v4759 = vunpack.c.l.b16 %v4072
    %v4760 = vunpack.c.h.b16 %v4072
    %v4761 = vunpack.c.l.b16 %v4073
    %v4762 = vunpack.c.h.b16 %v4073
    %v4763 = vunpack.c.l.b16 %v4074
    %v4764 = vunpack.c.h.b16 %v4074
    %v4765 = vunpack.c.l.b16 %v4075
    %v4766 = vunpack.c.h.b16 %v4075
    %v4767 = vunpack.c.l.b16 %v4076
    %v4768 = vunpack.c.h.b16 %v4076
    %v4769 = vunpack.c.l.b16 %v4077
    %v4770 = vunpack.c.h.b16 %v4077
    %v4771 = vunpack.c.l.b16 %v4078
    %v4772 = vunpack.c.h.b16 %v4078
    %v4773 = vunpack.c.l.b16 %v4079
    %v4774 = vunpack.c.h.b16 %v4079
    %v4775 = vunpack.c.l.b16 %v4080
    %v4776 = vunpack.c.h.b16 %v4080
    %v4777 = vunpack.c.l.b16 %v4081
    %v4778 = vunpack.c.h.b16 %v4081
    %v4779 = vunpack.c.l.b16 %v4082
    %v4780 = vunpack.c.h.b16 %v4082
    %v4781 = vunpack.c.l.b16 %v4083
    %v4782 = vunpack.c.h.b16 %v4083
    %v4783 = vunpack.c.l.b16 %v4084
    %v4784 = vunpack.c.h.b16 %v4084
    %v4785 = vunpack.c.l.b16 %v4085
    %v4786 = vunpack.c.h.b16 %v4085
    %v4787 = vunpack.c.l.b16 %v4086
    %v4788 = vunpack.c.h.b16 %v4086
    %v4789 = vunpack.c.l.b16 %v4087
    %v4790 = vunpack.c.h.b16 %v4087
    %v4791 = vunpack.c.l.b16 %v4088
    %v4792 = vunpack.c.h.b16 %v4088
    %v4793 = vunpack.c.l.b16 %v4089
    %v4794 = vunpack.c.h.b16 %v4089
    %v4795 = vunpack.c.l.b16 %v4090
    %v4796 = vunpack.c.h.b16 %v4090
    %v4797 = vunpack.c.l.b16 %v4091
    %v4798 = vunpack.c.h.b16 %v4091
    %v4799 = vunpack.c.l.b16 %v4092
    %v4800 = vunpack.c.h.b16 %v4092
    %v4801 = vunpack.c.l.b16 %v4093
    %v4802 = vunpack.c.h.b16 %v4093
    %v4803 = vunpack.c.l.b16 %v4094
    %v4804 = vunpack.c.h.b16 %v4094
    %v4805 = vunpack.c.l.b16 %v4095
    %v4806 = vunpack.c.h.b16 %v4095
    %v4807 = vunpack.c.l.b16 %v4096
    %v4808 = vunpack.c.h.b16 %v4096
    %v4809 = vunpack.c.l.b16 %v4097
    %v4810 = vunpack.c.h.b16 %v4097
    %v4811 = vunpack.c.l.b16 %v4098
    %v4812 = vunpack.c.h.b16 %v4098
    %v4813 = vunpack.c.l.b16 %v4099
    %v4814 = vunpack.c.h.b16 %v4099
    %v4815 = vunpack.c.l.b16 %v4100
    %v4816 = vunpack.c.h.b16 %v4100
    %v4817 = vunpack.c.l.b16 %v4101
    %v4818 = vunpack.c.h.b16 %v4101
    %v4819 = vunpack.c.l.b16 %v4102
    %v4820 = vunpack.c.h.b16 %v4102
    %v4821 = vunpack.c.l.b16 %v4103
    %v4822 = vunpack.c.h.b16 %v4103
    %v4823 = vunpack.c.l.b16 %v4104
    %v4824 = vunpack.c.h.b16 %v4104
    %v4825 = vunpack.c.l.b16 %v4105
    %v4826 = vunpack.c.h.b16 %v4105
    %v4827 = vunpack.c.l.b16 %v4106
    %v4828 = vunpack.c.h.b16 %v4106
    %v4829 = vunpack.c.l.b16 %v4107
    %v4830 = vunpack.c.h.b16 %v4107
    %v4831 = vunpack.c.l.b16 %v4108
    %v4832 = vunpack.c.h.b16 %v4108
    %v4833 = vunpack.c.l.b16 %v4109
    %v4834 = vunpack.c.h.b16 %v4109
    %v4835 = vunpack.c.l.b16 %v4110
    %v4836 = vunpack.c.h.b16 %v4110
    %v4837 = vunpack.c.l.b16 %v4111
    %v4838 = vunpack.c.h.b16 %v4111
    %v4839 = vunpack.c.l.b16 %v4112
    %v4840 = vunpack.c.h.b16 %v4112
    %v4841 = vunpack.c.l.b16 %v4113
    %v4842 = vunpack.c.h.b16 %v4113
    %v4843 = vunpack.c.l.b16 %v4114
    %v4844 = vunpack.c.h.b16 %v4114
    %v4845 = vunpack.c.l.b16 %v4115
    %v4846 = vunpack.c.h.b16 %v4115
    %v4847 = vunpack.c.l.b16 %v4116
    %v4848 = vunpack.c.h.b16 %v4116
    %v4849 = vunpack.c.l.b16 %v4117
    %v4850 = vunpack.c.h.b16 %v4117
    %v4851 = vunpack.c.l.b16 %v4118
    %v4852 = vunpack.c.h.b16 %v4118
    %v4853 = vunpack.c.l.b16 %v4119
    %v4854 = vunpack.c.h.b16 %v4119
    %v4855 = vunpack.c.l.b16 %v4120
    %v4856 = vunpack.c.h.b16 %v4120
    %v4857 = vunpack.c.l.b16 %v4121
    %v4858 = vunpack.c.h.b16 %v4121
    %v4859 = vunpack.c.l.b16 %v4122
    %v4860 = vunpack.c.h.b16 %v4122
    %v4861 = vunpack.c.l.b16 %v4123
    %v4862 = vunpack.c.h.b16 %v4123
    %v4863 = vunpack.c.l.b16 %v4124
    %v4864 = vunpack.c.h.b16 %v4124
    %v4865 = vunpack.c.l.b16 %v4125
    %v4866 = vunpack.c.h.b16 %v4125
    %v4867 = vunpack.c.l.b16 %v4126
    %v4868 = vunpack.c.h.b16 %v4126
    %v4869 = vunpack.c.l.b16 %v4127
    %v4870 = vunpack.c.h.b16 %v4127
    %v4871 = vunpack.c.l.b16 %v4128
    %v4872 = vunpack.c.h.b16 %v4128
    %v4873 = vunpack.c.l.b16 %v4129
    %v4874 = vunpack.c.h.b16 %v4129
    %v4875 = vunpack.c.l.b16 %v4130
    %v4876 = vunpack.c.h.b16 %v4130
    %v4877 = vunpack.c.l.b16 %v4131
    %v4878 = vunpack.c.h.b16 %v4131
    %v4879 = vunpack.c.l.b16 %v4132
    %v4880 = vunpack.c.h.b16 %v4132
    %v4881 = vunpack.c.l.b16 %v4133
    %v4882 = vunpack.c.h.b16 %v4133
    %v4883 = vunpack.c.l.b16 %v4134
    %v4884 = vunpack.c.h.b16 %v4134
    %v4885 = vunpack.c.l.b16 %v4135
    %v4886 = vunpack.c.h.b16 %v4135
    %v4887 = vunpack.c.l.b16 %v4136
    %v4888 = vunpack.c.h.b16 %v4136
    %v4889 = vunpack.c.l.b16 %v4137
    %v4890 = vunpack.c.h.b16 %v4137
    %v4891 = vunpack.c.l.b16 %v4138
    %v4892 = vunpack.c.h.b16 %v4138
    %v4893 = vunpack.c.l.b16 %v4139
    %v4894 = vunpack.c.h.b16 %v4139
    %v4895 = vunpack.c.l.b16 %v4140
    %v4896 = vunpack.c.h.b16 %v4140
    %v4897 = vunpack.c.l.b16 %v4141
    %v4898 = vunpack.c.h.b16 %v4141
    %v4899 = vunpack.c.l.b16 %v4142
    %v4900 = vunpack.c.h.b16 %v4142
    %v4901 = vunpack.c.l.b16 %v4143
    %v4902 = vunpack.c.h.b16 %v4143
    %v4903 = vunpack.c.l.b16 %v4144
    %v4904 = vunpack.c.h.b16 %v4144
    %v4905 = vunpack.c.l.b16 %v4145
    %v4906 = vunpack.c.h.b16 %v4145
    %v4907 = vunpack.c.l.b16 %v4146
    %v4908 = vunpack.c.h.b16 %v4146
    %v4909 = vunpack.c.l.b16 %v4147
    %v4910 = vunpack.c.h.b16 %v4147
    %v4911 = vunpack.c.l.b16 %v4148
    %v4912 = vunpack.c.h.b16 %v4148
    %v4913 = vunpack.c.l.b16 %v4149
    %v4914 = vunpack.c.h.b16 %v4149
    %v4915 = vunpack.c.l.b16 %v4150
    %v4916 = vunpack.c.h.b16 %v4150
    %v4917 = vunpack.c.l.b16 %v4151
    %v4918 = vunpack.c.h.b16 %v4151
    %v4919 = vunpack.c.l.b16 %v4152
    %v4920 = vunpack.c.h.b16 %v4152
    %v4921 = vpack.c.b16 %v4413, %v4409
    %v4922 = vpack.c.b16 %v4414, %v4410
    %v4923 = vpack.c.b16 %v4415, %v4411
    %v4924 = vpack.c.b16 %v4416, %v4412
    %v4925 = vpack.c.b16 %v4421, %v4417
    %v4926 = vpack.c.b16 %v4422, %v4418
    %v4927 = vpack.c.b16 %v4423, %v4419
    %v4928 = vpack.c.b16 %v4424, %v4420
    %v4929 = vpack.c.b16 %v4429, %v4425
    %v4930 = vpack.c.b16 %v4430, %v4426
    %v4931 = vpack.c.b16 %v4431, %v4427
    %v4932 = vpack.c.b16 %v4432, %v4428
    %v4933 = vpack.c.b16 %v4437, %v4433
    %v4934 = vpack.c.b16 %v4438, %v4434
    %v4935 = vpack.c.b16 %v4439, %v4435
    %v4936 = vpack.c.b16 %v4440, %v4436
    %v4937 = vpack.c.b16 %v4445, %v4441
    %v4938 = vpack.c.b16 %v4446, %v4442
    %v4939 = vpack.c.b16 %v4447, %v4443
    %v4940 = vpack.c.b16 %v4448, %v4444
    %v4941 = vpack.c.b16 %v4453, %v4449
    %v4942 = vpack.c.b16 %v4454, %v4450
    %v4943 = vpack.c.b16 %v4455, %v4451
    %v4944 = vpack.c.b16 %v4456, %v4452
    %v4945 = vpack.c.b16 %v4461, %v4457
    %v4946 = vpack.c.b16 %v4462, %v4458
    %v4947 = vpack.c.b16 %v4463, %v4459
    %v4948 = vpack.c.b16 %v4464, %v4460
    %v4949 = vpack.c.b16 %v4469, %v4465
    %v4950 = vpack.c.b16 %v4470, %v4466
    %v4951 = vpack.c.b16 %v4471, %v4467
    %v4952 = vpack.c.b16 %v4472, %v4468
    %v4953 = vpack.c.b16 %v4477, %v4473
    %v4954 = vpack.c.b16 %v4478, %v4474
    %v4955 = vpack.c.b16 %v4479, %v4475
    %v4956 = vpack.c.b16 %v4480, %v4476
    %v4957 = vpack.c.b16 %v4485, %v4481
    %v4958 = vpack.c.b16 %v4486, %v4482
    %v4959 = vpack.c.b16 %v4487, %v4483
    %v4960 = vpack.c.b16 %v4488, %v4484
    %v4961 = vpack.c.b16 %v4493, %v4489
    %v4962 = vpack.c.b16 %v4494, %v4490
    %v4963 = vpack.c.b16 %v4495, %v4491
    %v4964 = vpack.c.b16 %v4496, %v4492
    %v4965 = vpack.c.b16 %v4501, %v4497
    %v4966 = vpack.c.b16 %v4502, %v4498
    %v4967 = vpack.c.b16 %v4503, %v4499
    %v4968 = vpack.c.b16 %v4504, %v4500
    %v4969 = vpack.c.b16 %v4509, %v4505
    %v4970 = vpack.c.b16 %v4510, %v4506
    %v4971 = vpack.c.b16 %v4511, %v4507
    %v4972 = vpack.c.b16 %v4512, %v4508
    %v4973 = vpack.c.b16 %v4517, %v4513
    %v4974 = vpack.c.b16 %v4518, %v4514
    %v4975 = vpack.c.b16 %v4519, %v4515
    %v4976 = vpack.c.b16 %v4520, %v4516
    %v4977 = vpack.c.b16 %v4525, %v4521
    %v4978 = vpack.c.b16 %v4526, %v4522
    %v4979 = vpack.c.b16 %v4527, %v4523
    %v4980 = vpack.c.b16 %v4528, %v4524
    %v4981 = vpack.c.b16 %v4533, %v4529
    %v4982 = vpack.c.b16 %v4534, %v4530
    %v4983 = vpack.c.b16 %v4535, %v4531
    %v4984 = vpack.c.b16 %v4536, %v4532
    %v4985 = vpack.c.b16 %v4541, %v4537
    %v4986 = vpack.c.b16 %v4542, %v4538
    %v4987 = vpack.c.b16 %v4543, %v4539
    %v4988 = vpack.c.b16 %v4544, %v4540
    %v4989 = vpack.c.b16 %v4549, %v4545
    %v4990 = vpack.c.b16 %v4550, %v4546
    %v4991 = vpack.c.b16 %v4551, %v4547
    %v4992 = vpack.c.b16 %v4552, %v4548
    %v4993 = vpack.c.b16 %v4557, %v4553
    %v4994 = vpack.c.b16 %v4558, %v4554
    %v4995 = vpack.c.b16 %v4559, %v4555
    %v4996 = vpack.c.b16 %v4560, %v4556
    %v4997 = vpack.c.b16 %v4565, %v4561
    %v4998 = vpack.c.b16 %v4566, %v4562
    %v4999 = vpack.c.b16 %v4567, %v4563
    %v5000 = vpack.c.b16 %v4568, %v4564
    %v5001 = vpack.c.b16 %v4573, %v4569
    %v5002 = vpack.c.b16 %v4574, %v4570
    %v5003 = vpack.c.b16 %v4575, %v4571
    %v5004 = vpack.c.b16 %v4576, %v4572
    %v5005 = vpack.c.b16 %v4581, %v4577
    %v5006 = vpack.c.b16 %v4582, %v4578
    %v5007 = vpack.c.b16 %v4583, %v4579
    %v5008 = vpack.c.b16 %v4584, %v4580
    %v5009 = vpack.c.b16 %v4589, %v4585
    %v5010 = vpack.c.b16 %v4590, %v4586
    %v5011 = vpack.c.b16 %v4591, %v4587
    %v5012 = vpack.c.b16 %v4592, %v4588
    %v5013 = vpack.c.b16 %v4597, %v4593
    %v5014 = vpack.c.b16 %v4598, %v4594
    %v5015 = vpack.c.b16 %v4599, %v4595
    %v5016 = vpack.c.b16 %v4600, %v4596
    %v5017 = vpack.c.b16 %v4605, %v4601
    %v5018 = vpack.c.b16 %v4606, %v4602
    %v5019 = vpack.c.b16 %v4607, %v4603
    %v5020 = vpack.c.b16 %v4608, %v4604
    %v5021 = vpack.c.b16 %v4613, %v4609
    %v5022 = vpack.c.b16 %v4614, %v4610
    %v5023 = vpack.c.b16 %v4615, %v4611
    %v5024 = vpack.c.b16 %v4616, %v4612
    %v5025 = vpack.c.b16 %v4621, %v4617
    %v5026 = vpack.c.b16 %v4622, %v4618
    %v5027 = vpack.c.b16 %v4623, %v4619
    %v5028 = vpack.c.b16 %v4624, %v4620
    %v5029 = vpack.c.b16 %v4629, %v4625
    %v5030 = vpack.c.b16 %v4630, %v4626
    %v5031 = vpack.c.b16 %v4631, %v4627
    %v5032 = vpack.c.b16 %v4632, %v4628
    %v5033 = vpack.c.b16 %v4637, %v4633
    %v5034 = vpack.c.b16 %v4638, %v4634
    %v5035 = vpack.c.b16 %v4639, %v4635
    %v5036 = vpack.c.b16 %v4640, %v4636
    %v5037 = vpack.c.b16 %v4645, %v4641
    %v5038 = vpack.c.b16 %v4646, %v4642
    %v5039 = vpack.c.b16 %v4647, %v4643
    %v5040 = vpack.c.b16 %v4648, %v4644
    %v5041 = vpack.c.b16 %v4653, %v4649
    %v5042 = vpack.c.b16 %v4654, %v4650
    %v5043 = vpack.c.b16 %v4655, %v4651
    %v5044 = vpack.c.b16 %v4656, %v4652
    %v5045 = vpack.c.b16 %v4661, %v4657
    %v5046 = vpack.c.b16 %v4662, %v4658
    %v5047 = vpack.c.b16 %v4663, %v4659
    %v5048 = vpack.c.b16 %v4664, %v4660
    %v5049 = vpack.c.b16 %v4669, %v4665
    %v5050 = vpack.c.b16 %v4670, %v4666
    %v5051 = vpack.c.b16 %v4671, %v4667
    %v5052 = vpack.c.b16 %v4672, %v4668
    %v5053 = vpack.c.b16 %v4677, %v4673
    %v5054 = vpack.c.b16 %v4678, %v4674
    %v5055 = vpack.c.b16 %v4679, %v4675
    %v5056 = vpack.c.b16 %v4680, %v4676
    %v5057 = vpack.c.b16 %v4685, %v4681
    %v5058 = vpack.c.b16 %v4686, %v4682
    %v5059 = vpack.c.b16 %v4687, %v4683
    %v5060 = vpack.c.b16 %v4688, %v4684
    %v5061 = vpack.c.b16 %v4693, %v4689
    %v5062 = vpack.c.b16 %v4694, %v4690
    %v5063 = vpack.c.b16 %v4695, %v4691
    %v5064 = vpack.c.b16 %v4696, %v4692
    %v5065 = vpack.c.b16 %v4701, %v4697
    %v5066 = vpack.c.b16 %v4702, %v4698
    %v5067 = vpack.c.b16 %v4703, %v4699
    %v5068 = vpack.c.b16 %v4704, %v4700
    %v5069 = vpack.c.b16 %v4709, %v4705
    %v5070 = vpack.c.b16 %v4710, %v4706
    %v5071 = vpack.c.b16 %v4711, %v4707
    %v5072 = vpack.c.b16 %v4712, %v4708
    %v5073 = vpack.c.b16 %v4717, %v4713
    %v5074 = vpack.c.b16 %v4718, %v4714
    %v5075 = vpack.c.b16 %v4719, %v4715
    %v5076 = vpack.c.b16 %v4720, %v4716
    %v5077 = vpack.c.b16 %v4725, %v4721
    %v5078 = vpack.c.b16 %v4726, %v4722
    %v5079 = vpack.c.b16 %v4727, %v4723
    %v5080 = vpack.c.b16 %v4728, %v4724
    %v5081 = vpack.c.b16 %v4733, %v4729
    %v5082 = vpack.c.b16 %v4734, %v4730
    %v5083 = vpack.c.b16 %v4735, %v4731
    %v5084 = vpack.c.b16 %v4736, %v4732
    %v5085 = vpack.c.b16 %v4741, %v4737
    %v5086 = vpack.c.b16 %v4742, %v4738
    %v5087 = vpack.c.b16 %v4743, %v4739
    %v5088 = vpack.c.b16 %v4744, %v4740
    %v5089 = vpack.c.b16 %v4749, %v4745
    %v5090 = vpack.c.b16 %v4750, %v4746
    %v5091 = vpack.c.b16 %v4751, %v4747
    %v5092 = vpack.c.b16 %v4752, %v4748
    %v5093 = vpack.c.b16 %v4757, %v4753
    %v5094 = vpack.c.b16 %v4758, %v4754
    %v5095 = vpack.c.b16 %v4759, %v4755
    %v5096 = vpack.c.b16 %v4760, %v4756
    %v5097 = vpack.c.b16 %v4765, %v4761
    %v5098 = vpack.c.b16 %v4766, %v4762
    %v5099 = vpack.c.b16 %v4767, %v4763
    %v5100 = vpack.c.b16 %v4768, %v4764
    %v5101 = vpack.c.b16 %v4773, %v4769
    %v5102 = vpack.c.b16 %v4774, %v4770
    %v5103 = vpack.c.b16 %v4775, %v4771
    %v5104 = vpack.c.b16 %v4776, %v4772
    %v5105 = vpack.c.b16 %v4781, %v4777
    %v5106 = vpack.c.b16 %v4782, %v4778
    %v5107 = vpack.c.b16 %v4783, %v4779
    %v5108 = vpack.c.b16 %v4784, %v4780
    %v5109 = vpack.c.b16 %v4789, %v4785
    %v5110 = vpack.c.b16 %v4790, %v4786
    %v5111 = vpack.c.b16 %v4791, %v4787
    %v5112 = vpack.c.b16 %v4792, %v4788
    %v5113 = vpack.c.b16 %v4797, %v4793
    %v5114 = vpack.c.b16 %v4798, %v4794
    %v5115 = vpack.c.b16 %v4799, %v4795
    %v5116 = vpack.c.b16 %v4800, %v4796
    %v5117 = vpack.c.b16 %v4805, %v4801
    %v5118 = vpack.c.b16 %v4806, %v4802
    %v5119 = vpack.c.b16 %v4807, %v4803
    %v5120 = vpack.c.b16 %v4808, %v4804
    %v5121 = vpack.c.b16 %v4813, %v4809
    %v5122 = vpack.c.b16 %v4814, %v4810
    %v5123 = vpack.c.b16 %v4815, %v4811
    %v5124 = vpack.c.b16 %v4816, %v4812
    %v5125 = vpack.c.b16 %v4821, %v4817
    %v5126 = vpack.c.b16 %v4822, %v4818
    %v5127 = vpack.c.b16 %v4823, %v4819
    %v5128 = vpack.c.b16 %v4824, %v4820
    %v5129 = vpack.c.b16 %v4829, %v4825
    %v5130 = vpack.c.b16 %v4830, %v4826
    %v5131 = vpack.c.b16 %v4831, %v4827
    %v5132 = vpack.c.b16 %v4832, %v4828
    %v5133 = vpack.c.b16 %v4837, %v4833
    %v5134 = vpack.c.b16 %v4838, %v4834
    %v5135 = vpack.c.b16 %v4839, %v4835
    %v5136 = vpack.c.b16 %v4840, %v4836
    %v5137 = vpack.c.b16 %v4845, %v4841
    %v5138 = vpack.c.b16 %v4846, %v4842
    %v5139 = vpack.c.b16 %v4847, %v4843
    %v5140 = vpack.c.b16 %v4848, %v4844
    %v5141 = vpack.c.b16 %v4853, %v4849
    %v5142 = vpack.c.b16 %v4854, %v4850
    %v5143 = vpack.c.b16 %v4855, %v4851
    %v5144 = vpack.c.b16 %v4856, %v4852
    %v5145 = vpack.c.b16 %v4861, %v4857
    %v5146 = vpack.c.b16 %v4862, %v4858
    %v5147 = vpack.c.b16 %v4863, %v4859
    %v5148 = vpack.c.b16 %v4864, %v4860
    %v5149 = vpack.c.b16 %v4869, %v4865
    %v5150 = vpack.c.b16 %v4870, %v4866
    %v5151 = vpack.c.b16 %v4871, %v4867
    %v5152 = vpack.c.b16 %v4872, %v4868
    %v5153 = vpack.c.b16 %v4877, %v4873
    %v5154 = vpack.c.b16 %v4878, %v4874
    %v5155 = vpack.c.b16 %v4879, %v4875
    %v5156 = vpack.c.b16 %v4880, %v4876
    %v5157 = vpack.c.b16 %v4885, %v4881
    %v5158 = vpack.c.b16 %v4886, %v4882
    %v5159 = vpack.c.b16 %v4887, %v4883
    %v5160 = vpack.c.b16 %v4888, %v4884
    %v5161 = vpack.c.b16 %v4893, %v4889
    %v5162 = vpack.c.b16 %v4894, %v4890
    %v5163 = vpack.c.b16 %v4895, %v4891
    %v5164 = vpack.c.b16 %v4896, %v4892
    %v5165 = vpack.c.b16 %v4901, %v4897
    %v5166 = vpack.c.b16 %v4902, %v4898
    %v5167 = vpack.c.b16 %v4903, %v4899
    %v5168 = vpack.c.b16 %v4904, %v4900
    %v5169 = vpack.c.b16 %v4909, %v4905
    %v5170 = vpack.c.b16 %v4910, %v4906
    %v5171 = vpack.c.b16 %v4911, %v4907
    %v5172 = vpack.c.b16 %v4912, %v4908
    %v5173 = vpack.c.b16 %v4917, %v4913
    %v5174 = vpack.c.b16 %v4918, %v4914
    %v5175 = vpack.c.b16 %v4919, %v4915
    %v5176 = vpack.c.b16 %v4920, %v4916
    %5433 = vmatprep.subr.bf16.mxu0 %v4950
    %5434 = vmatpush1.bf16.msra.mxu0 %v4949
    %5435 = vmatprep.subr.bf16.mxu0 %v4946
    %5436 = vmatpush1.bf16.msra.mxu0 %v4945
    %5437 = vmatprep.subr.bf16.mxu0 %v4942
    %5438 = vmatpush1.bf16.msra.mxu0 %v4941
    %5439 = vmatprep.subr.bf16.mxu0 %v4938
    %5440 = vmatpush1.bf16.msra.mxu0 %v4937
    %5441 = vmatprep.subr.bf16.mxu0 %v4934
    %5442 = vmatpush1.bf16.msra.mxu0 %v4933
    %5443 = vmatprep.subr.bf16.mxu0 %v4930
    %5444 = vmatpush1.bf16.msra.mxu0 %v4929
    %5445 = vmatprep.subr.bf16.mxu0 %v4926
    %5446 = vmatpush1.bf16.msra.mxu0 %v4925
    %5447 = vmatprep.subr.bf16.mxu0 %v4922
    %5448 = vmatpush1.bf16.msra.mxu0 %v4921
    %5449 = vmatprep.subr.bf16.mxu0 %v4982
    %5450 = vmatpush2.bf16.msra.mxu0 %v4981
    %5451 = vmatprep.subr.bf16.mxu0 %v4978
    %5452 = vmatpush2.bf16.msra.mxu0 %v4977
    %5453 = vmatprep.subr.bf16.mxu0 %v4974
    %5454 = vmatpush2.bf16.msra.mxu0 %v4973
    %5455 = vmatprep.subr.bf16.mxu0 %v4970
    %5456 = vmatpush2.bf16.msra.mxu0 %v4969
    %5457 = vmatprep.subr.bf16.mxu0 %v4966
    %5458 = vmatpush2.bf16.msra.mxu0 %v4965
    %5459 = vmatprep.subr.bf16.mxu0 %v4962
    %5460 = vmatpush2.bf16.msra.mxu0 %v4961
    %5461 = vmatprep.subr.bf16.mxu0 %v4958
    %5462 = vmatpush2.bf16.msra.mxu0 %v4957
    %5463 = vmatprep.subr.bf16.mxu0 %v4954
    %5464 = vmatpush2.bf16.msra.mxu0 %v4953
    %5465 = vmatprep.mubr.bf16.mxu0 %v3890
    %5466 = vmatmul.mubr.bf16.gmra.mxu0 %v3889
    %v5467 = vpop.f32.mrf.mxu0
    %v5468 = vadd.f32 0.0, %v5467
    %v5469 = vpop.f32.mrf.mxu0
    %v5470 = vadd.f32 0.0, %v5469
    %v5471 = vpop.f32.mrf.mxu0
    %v5472 = vpop.f32.mrf.mxu0
    %5473 = vdwg.mxu0
    %5474 = vmatprep.subr.bf16.mxu0 %v5014
    %5475 = vmatpush1.bf16.msra.mxu0 %v5013
    %5476 = vmatprep.subr.bf16.mxu0 %v5010
    %5477 = vmatpush1.bf16.msra.mxu0 %v5009
    %5478 = vmatprep.subr.bf16.mxu0 %v5006
    %5479 = vmatpush1.bf16.msra.mxu0 %v5005
    %5480 = vmatprep.subr.bf16.mxu0 %v5002
    %5481 = vmatpush1.bf16.msra.mxu0 %v5001
    %5482 = vmatprep.subr.bf16.mxu0 %v4998
    %5483 = vmatpush1.bf16.msra.mxu0 %v4997
    %5484 = vmatprep.subr.bf16.mxu0 %v4994
    %5485 = vmatpush1.bf16.msra.mxu0 %v4993
    %5486 = vmatprep.subr.bf16.mxu0 %v4990
    %5487 = vmatpush1.bf16.msra.mxu0 %v4989
    %5488 = vmatprep.subr.bf16.mxu0 %v4986
    %5489 = vmatpush1.bf16.msra.mxu0 %v4985
    %5490 = vmatprep.subr.bf16.mxu0 %v5046
    %5491 = vmatpush2.bf16.msra.mxu0 %v5045
    %5492 = vmatprep.subr.bf16.mxu0 %v5042
    %5493 = vmatpush2.bf16.msra.mxu0 %v5041
    %5494 = vmatprep.subr.bf16.mxu0 %v5038
    %5495 = vmatpush2.bf16.msra.mxu0 %v5037
    %5496 = vmatprep.subr.bf16.mxu0 %v5034
    %5497 = vmatpush2.bf16.msra.mxu0 %v5033
    %5498 = vmatprep.subr.bf16.mxu0 %v5030
    %5499 = vmatpush2.bf16.msra.mxu0 %v5029
    %5500 = vmatprep.subr.bf16.mxu0 %v5026
    %5501 = vmatpush2.bf16.msra.mxu0 %v5025
    %5502 = vmatprep.subr.bf16.mxu0 %v5022
    %5503 = vmatpush2.bf16.msra.mxu0 %v5021
    %5504 = vmatprep.subr.bf16.mxu0 %v5018
    %5505 = vmatpush2.bf16.msra.mxu0 %v5017
    %5506 = vmatprep.mubr.bf16.mxu0 %v3892
    %5507 = vmatmul.mubr.bf16.gmra.mxu0 %v3891
    %v5508 = vpop.f32.mrf.mxu0
    %v5509 = vadd.f32 %v5468, %v5508
    %v5510 = vpop.f32.mrf.mxu0
    %v5511 = vadd.f32 %v5470, %v5510
    %v5512 = vpop.f32.mrf.mxu0
    %v5513 = vpop.f32.mrf.mxu0
    %5514 = vdwg.mxu0
    %5515 = vmatprep.subr.bf16.mxu0 %v5078
    %5516 = vmatpush1.bf16.msra.mxu0 %v5077
    %5517 = vmatprep.subr.bf16.mxu0 %v5074
    %5518 = vmatpush1.bf16.msra.mxu0 %v5073
    %5519 = vmatprep.subr.bf16.mxu0 %v5070
    %5520 = vmatpush1.bf16.msra.mxu0 %v5069
    %5521 = vmatprep.subr.bf16.mxu0 %v5066
    %5522 = vmatpush1.bf16.msra.mxu0 %v5065
    %5523 = vmatprep.subr.bf16.mxu0 %v5062
    %5524 = vmatpush1.bf16.msra.mxu0 %v5061
    %5525 = vmatprep.subr.bf16.mxu0 %v5058
    %5526 = vmatpush1.bf16.msra.mxu0 %v5057
    %5527 = vmatprep.subr.bf16.mxu0 %v5054
    %5528 = vmatpush1.bf16.msra.mxu0 %v5053
    %5529 = vmatprep.subr.bf16.mxu0 %v5050
    %5530 = vmatpush1.bf16.msra.mxu0 %v5049
    %5531 = vmatprep.subr.bf16.mxu0 %v5110
    %5532 = vmatpush2.bf16.msra.mxu0 %v5109
    %5533 = vmatprep.subr.bf16.mxu0 %v5106
    %5534 = vmatpush2.bf16.msra.mxu0 %v5105
    %5535 = vmatprep.subr.bf16.mxu0 %v5102
    %5536 = vmatpush2.bf16.msra.mxu0 %v5101
    %5537 = vmatprep.subr.bf16.mxu0 %v5098
    %5538 = vmatpush2.bf16.msra.mxu0 %v5097
    %5539 = vmatprep.subr.bf16.mxu0 %v5094
    %5540 = vmatpush2.bf16.msra.mxu0 %v5093
    %5541 = vmatprep.subr.bf16.mxu0 %v5090
    %5542 = vmatpush2.bf16.msra.mxu0 %v5089
    %5543 = vmatprep.subr.bf16.mxu0 %v5086
    %5544 = vmatpush2.bf16.msra.mxu0 %v5085
    %5545 = vmatprep.subr.bf16.mxu0 %v5082
    %5546 = vmatpush2.bf16.msra.mxu0 %v5081
    %5547 = vmatprep.mubr.bf16.mxu0 %v3894
    %5548 = vmatmul.mubr.bf16.gmra.mxu0 %v3893
    %v5549 = vpop.f32.mrf.mxu0
    %v5550 = vadd.f32 %v5509, %v5549
    %v5551 = vpop.f32.mrf.mxu0
    %v5552 = vadd.f32 %v5511, %v5551
    %v5553 = vpop.f32.mrf.mxu0
    %v5554 = vpop.f32.mrf.mxu0
    %5555 = vdwg.mxu0
    %5556 = vmatprep.subr.bf16.mxu0 %v5142
    %5557 = vmatpush1.bf16.msra.mxu0 %v5141
    %5558 = vmatprep.subr.bf16.mxu0 %v5138
    %5559 = vmatpush1.bf16.msra.mxu0 %v5137
    %5560 = vmatprep.subr.bf16.mxu0 %v5134
    %5561 = vmatpush1.bf16.msra.mxu0 %v5133
    %5562 = vmatprep.subr.bf16.mxu0 %v5130
    %5563 = vmatpush1.bf16.msra.mxu0 %v5129
    %5564 = vmatprep.subr.bf16.mxu0 %v5126
    %5565 = vmatpush1.bf16.msra.mxu0 %v5125
    %5566 = vmatprep.subr.bf16.mxu0 %v5122
    %5567 = vmatpush1.bf16.msra.mxu0 %v5121
    %5568 = vmatprep.subr.bf16.mxu0 %v5118
    %5569 = vmatpush1.bf16.msra.mxu0 %v5117
    %5570 = vmatprep.subr.bf16.mxu0 %v5114
    %5571 = vmatpush1.bf16.msra.mxu0 %v5113
    %5572 = vmatprep.subr.bf16.mxu0 %v5174
    %5573 = vmatpush2.bf16.msra.mxu0 %v5173
    %5574 = vmatprep.subr.bf16.mxu0 %v5170
    %5575 = vmatpush2.bf16.msra.mxu0 %v5169
    %5576 = vmatprep.subr.bf16.mxu0 %v5166
    %5577 = vmatpush2.bf16.msra.mxu0 %v5165
    %5578 = vmatprep.subr.bf16.mxu0 %v5162
    %5579 = vmatpush2.bf16.msra.mxu0 %v5161
    %5580 = vmatprep.subr.bf16.mxu0 %v5158
    %5581 = vmatpush2.bf16.msra.mxu0 %v5157
    %5582 = vmatprep.subr.bf16.mxu0 %v5154
    %5583 = vmatpush2.bf16.msra.mxu0 %v5153
    %5584 = vmatprep.subr.bf16.mxu0 %v5150
    %5585 = vmatpush2.bf16.msra.mxu0 %v5149
    %5586 = vmatprep.subr.bf16.mxu0 %v5146
    %5587 = vmatpush2.bf16.msra.mxu0 %v5145
    %5588 = vmatprep.mubr.bf16.mxu0 %v3896
    %5589 = vmatmul.mubr.bf16.gmra.mxu0 %v3895
    %v5590 = vpop.f32.mrf.mxu0
    %v5591 = vadd.f32 %v5550, %v5590
    %v5592 = vpop.f32.mrf.mxu0
    %v5593 = vadd.f32 %v5552, %v5592
    %v5594 = vpop.f32.mrf.mxu0
    %v5595 = vpop.f32.mrf.mxu0
    %5596 = vdwg.mxu0
    %5597 = vmatprep.subr.bf16.mxu0 %v4952
    %5598 = vmatpush1.bf16.msra.mxu0 %v4951
    %5599 = vmatprep.subr.bf16.mxu0 %v4948
    %5600 = vmatpush1.bf16.msra.mxu0 %v4947
    %5601 = vmatprep.subr.bf16.mxu0 %v4944
    %5602 = vmatpush1.bf16.msra.mxu0 %v4943
    %5603 = vmatprep.subr.bf16.mxu0 %v4940
    %5604 = vmatpush1.bf16.msra.mxu0 %v4939
    %5605 = vmatprep.subr.bf16.mxu0 %v4936
    %5606 = vmatpush1.bf16.msra.mxu0 %v4935
    %5607 = vmatprep.subr.bf16.mxu0 %v4932
    %5608 = vmatpush1.bf16.msra.mxu0 %v4931
    %5609 = vmatprep.subr.bf16.mxu0 %v4928
    %5610 = vmatpush1.bf16.msra.mxu0 %v4927
    %5611 = vmatprep.subr.bf16.mxu0 %v4924
    %5612 = vmatpush1.bf16.msra.mxu0 %v4923
    %5613 = vmatprep.subr.bf16.mxu0 %v4984
    %5614 = vmatpush2.bf16.msra.mxu0 %v4983
    %5615 = vmatprep.subr.bf16.mxu0 %v4980
    %5616 = vmatpush2.bf16.msra.mxu0 %v4979
    %5617 = vmatprep.subr.bf16.mxu0 %v4976
    %5618 = vmatpush2.bf16.msra.mxu0 %v4975
    %5619 = vmatprep.subr.bf16.mxu0 %v4972
    %5620 = vmatpush2.bf16.msra.mxu0 %v4971
    %5621 = vmatprep.subr.bf16.mxu0 %v4968
    %5622 = vmatpush2.bf16.msra.mxu0 %v4967
    %5623 = vmatprep.subr.bf16.mxu0 %v4964
    %5624 = vmatpush2.bf16.msra.mxu0 %v4963
    %5625 = vmatprep.subr.bf16.mxu0 %v4960
    %5626 = vmatpush2.bf16.msra.mxu0 %v4959
    %5627 = vmatprep.subr.bf16.mxu0 %v4956
    %5628 = vmatpush2.bf16.msra.mxu0 %v4955
    %5629 = vmatprep.mubr.bf16.mxu0 %v3890
    %5630 = vmatmul.mubr.bf16.gmra.mxu0 %v3889
    %v5631 = vpop.f32.mrf.mxu0
    %v5632 = vadd.f32 0.0, %v5631
    %v5633 = vpop.f32.mrf.mxu0
    %v5634 = vadd.f32 0.0, %v5633
    %v5635 = vpop.f32.mrf.mxu0
    %v5636 = vpop.f32.mrf.mxu0
    %5637 = vdwg.mxu0
    %5638 = vmatprep.subr.bf16.mxu0 %v5016
    %5639 = vmatpush1.bf16.msra.mxu0 %v5015
    %5640 = vmatprep.subr.bf16.mxu0 %v5012
    %5641 = vmatpush1.bf16.msra.mxu0 %v5011
    %5642 = vmatprep.subr.bf16.mxu0 %v5008
    %5643 = vmatpush1.bf16.msra.mxu0 %v5007
    %5644 = vmatprep.subr.bf16.mxu0 %v5004
    %5645 = vmatpush1.bf16.msra.mxu0 %v5003
    %5646 = vmatprep.subr.bf16.mxu0 %v5000
    %5647 = vmatpush1.bf16.msra.mxu0 %v4999
    %5648 = vmatprep.subr.bf16.mxu0 %v4996
    %5649 = vmatpush1.bf16.msra.mxu0 %v4995
    %5650 = vmatprep.subr.bf16.mxu0 %v4992
    %5651 = vmatpush1.bf16.msra.mxu0 %v4991
    %5652 = vmatprep.subr.bf16.mxu0 %v4988
    %5653 = vmatpush1.bf16.msra.mxu0 %v4987
    %5654 = vmatprep.subr.bf16.mxu0 %v5048
    %5655 = vmatpush2.bf16.msra.mxu0 %v5047
    %5656 = vmatprep.subr.bf16.mxu0 %v5044
    %5657 = vmatpush2.bf16.msra.mxu0 %v5043
    %5658 = vmatprep.subr.bf16.mxu0 %v5040
    %5659 = vmatpush2.bf16.msra.mxu0 %v5039
    %5660 = vmatprep.subr.bf16.mxu0 %v5036
    %5661 = vmatpush2.bf16.msra.mxu0 %v5035
    %5662 = vmatprep.subr.bf16.mxu0 %v5032
    %5663 = vmatpush2.bf16.msra.mxu0 %v5031
    %5664 = vmatprep.subr.bf16.mxu0 %v5028
    %5665 = vmatpush2.bf16.msra.mxu0 %v5027
    %5666 = vmatprep.subr.bf16.mxu0 %v5024
    %5667 = vmatpush2.bf16.msra.mxu0 %v5023
    %5668 = vmatprep.subr.bf16.mxu0 %v5020
    %5669 = vmatpush2.bf16.msra.mxu0 %v5019
    %5670 = vmatprep.mubr.bf16.mxu0 %v3892
    %5671 = vmatmul.mubr.bf16.gmra.mxu0 %v3891
    %v5672 = vpop.f32.mrf.mxu0
    %v5673 = vadd.f32 %v5632, %v5672
    %v5674 = vpop.f32.mrf.mxu0
    %v5675 = vadd.f32 %v5634, %v5674
    %v5676 = vpop.f32.mrf.mxu0
    %v5677 = vpop.f32.mrf.mxu0
    %5678 = vdwg.mxu0
    %5679 = vmatprep.subr.bf16.mxu0 %v5080
    %5680 = vmatpush1.bf16.msra.mxu0 %v5079
    %5681 = vmatprep.subr.bf16.mxu0 %v5076
    %5682 = vmatpush1.bf16.msra.mxu0 %v5075
    %5683 = vmatprep.subr.bf16.mxu0 %v5072
    %5684 = vmatpush1.bf16.msra.mxu0 %v5071
    %5685 = vmatprep.subr.bf16.mxu0 %v5068
    %5686 = vmatpush1.bf16.msra.mxu0 %v5067
    %5687 = vmatprep.subr.bf16.mxu0 %v5064
    %5688 = vmatpush1.bf16.msra.mxu0 %v5063
    %5689 = vmatprep.subr.bf16.mxu0 %v5060
    %5690 = vmatpush1.bf16.msra.mxu0 %v5059
    %5691 = vmatprep.subr.bf16.mxu0 %v5056
    %5692 = vmatpush1.bf16.msra.mxu0 %v5055
    %5693 = vmatprep.subr.bf16.mxu0 %v5052
    %5694 = vmatpush1.bf16.msra.mxu0 %v5051
    %5695 = vmatprep.subr.bf16.mxu0 %v5112
    %5696 = vmatpush2.bf16.msra.mxu0 %v5111
    %5697 = vmatprep.subr.bf16.mxu0 %v5108
    %5698 = vmatpush2.bf16.msra.mxu0 %v5107
    %5699 = vmatprep.subr.bf16.mxu0 %v5104
    %5700 = vmatpush2.bf16.msra.mxu0 %v5103
    %5701 = vmatprep.subr.bf16.mxu0 %v5100
    %5702 = vmatpush2.bf16.msra.mxu0 %v5099
    %5703 = vmatprep.subr.bf16.mxu0 %v5096
    %5704 = vmatpush2.bf16.msra.mxu0 %v5095
    %5705 = vmatprep.subr.bf16.mxu0 %v5092
    %5706 = vmatpush2.bf16.msra.mxu0 %v5091
    %5707 = vmatprep.subr.bf16.mxu0 %v5088
    %5708 = vmatpush2.bf16.msra.mxu0 %v5087
    %5709 = vmatprep.subr.bf16.mxu0 %v5084
    %5710 = vmatpush2.bf16.msra.mxu0 %v5083
    %5711 = vmatprep.mubr.bf16.mxu0 %v3894
    %5712 = vmatmul.mubr.bf16.gmra.mxu0 %v3893
    %v5713 = vpop.f32.mrf.mxu0
    %v5714 = vadd.f32 %v5673, %v5713
    %v5715 = vpop.f32.mrf.mxu0
    %v5716 = vadd.f32 %v5675, %v5715
    %v5717 = vpop.f32.mrf.mxu0
    %v5718 = vpop.f32.mrf.mxu0
    %5719 = vdwg.mxu0
    %5720 = vmatprep.subr.bf16.mxu0 %v5144
    %5721 = vmatpush1.bf16.msra.mxu0 %v5143
    %5722 = vmatprep.subr.bf16.mxu0 %v5140
    %5723 = vmatpush1.bf16.msra.mxu0 %v5139
    %5724 = vmatprep.subr.bf16.mxu0 %v5136
    %5725 = vmatpush1.bf16.msra.mxu0 %v5135
    %5726 = vmatprep.subr.bf16.mxu0 %v5132
    %5727 = vmatpush1.bf16.msra.mxu0 %v5131
    %5728 = vmatprep.subr.bf16.mxu0 %v5128
    %5729 = vmatpush1.bf16.msra.mxu0 %v5127
    %5730 = vmatprep.subr.bf16.mxu0 %v5124
    %5731 = vmatpush1.bf16.msra.mxu0 %v5123
    %5732 = vmatprep.subr.bf16.mxu0 %v5120
    %5733 = vmatpush1.bf16.msra.mxu0 %v5119
    %5734 = vmatprep.subr.bf16.mxu0 %v5116
    %5735 = vmatpush1.bf16.msra.mxu0 %v5115
    %5736 = vmatprep.subr.bf16.mxu0 %v5176
    %5737 = vmatpush2.bf16.msra.mxu0 %v5175
    %5738 = vmatprep.subr.bf16.mxu0 %v5172
    %5739 = vmatpush2.bf16.msra.mxu0 %v5171
    %5740 = vmatprep.subr.bf16.mxu0 %v5168
    %5741 = vmatpush2.bf16.msra.mxu0 %v5167
    %5742 = vmatprep.subr.bf16.mxu0 %v5164
    %5743 = vmatpush2.bf16.msra.mxu0 %v5163
    %5744 = vmatprep.subr.bf16.mxu0 %v5160
    %5745 = vmatpush2.bf16.msra.mxu0 %v5159
    %5746 = vmatprep.subr.bf16.mxu0 %v5156
    %5747 = vmatpush2.bf16.msra.mxu0 %v5155
    %5748 = vmatprep.subr.bf16.mxu0 %v5152
    %5749 = vmatpush2.bf16.msra.mxu0 %v5151
    %5750 = vmatprep.subr.bf16.mxu0 %v5148
    %5751 = vmatpush2.bf16.msra.mxu0 %v5147
    %5752 = vmatprep.mubr.bf16.mxu0 %v3896
    %5753 = vmatmul.mubr.bf16.gmra.mxu0 %v3895
    %v5754 = vpop.f32.mrf.mxu0
    %v5755 = vadd.f32 %v5714, %v5754
    %v5756 = vpop.f32.mrf.mxu0
    %v5757 = vadd.f32 %v5716, %v5756
    %v5758 = vpop.f32.mrf.mxu0
    %v5759 = vpop.f32.mrf.mxu0
    %5760 = vdwg.mxu0
    %vm5761 = vcmp.ge.f32.partialorder %v5591, 0.0
    %vm5762 = vcmp.ge.f32.partialorder %v5593, 0.0
    %vm5763 = vcmp.ge.f32.partialorder %v5755, 0.0
    %vm5764 = vcmp.ge.f32.partialorder %v5757, 0.0
    %v5765 = vmul.f32 %v5591, 0.3
    %v5766 = vmul.f32 %v5593, 0.3
    %v5767 = vmul.f32 %v5755, 0.3
    %v5768 = vmul.f32 %v5757, 0.3
    %v5769 = vsel %vm5761, %v5591, %v5765
    %v5770 = vsel %vm5762, %v5593, %v5766
    %v5771 = vsel %vm5763, %v5755, %v5767
    %v5772 = vsel %vm5764, %v5757, %v5768
    %v5773 = vpack.c.bf16 %v5769, %v5769
    %v5774 = vpack.c.bf16 %v5770, %v5770
    %v5775 = vpack.c.bf16 %v5771, %v5771
    %v5776 = vpack.c.bf16 %v5772, %v5772
    %v5777 = vld [vmem:[#allocation8] sm:$0xff]
    %v5778 = vld [vmem:[#allocation8 + $0x8] sm:$0xff]
    %v5779 = vld [vmem:[#allocation8 + $0x10] sm:$0xff]
    %v5780 = vld [vmem:[#allocation8 + $0x18] sm:$0xff]
    %v5781 = vld [vmem:[#allocation8 + $0x20] sm:$0xff]
    %v5782 = vld [vmem:[#allocation8 + $0x28] sm:$0xff]
    %v5783 = vld [vmem:[#allocation8 + $0x30] sm:$0xff]
    %v5784 = vld [vmem:[#allocation8 + $0x38] sm:$0xff]
    %v5785 = vld [vmem:[#allocation8 + $0x40] sm:$0xff]
    %v5786 = vld [vmem:[#allocation8 + $0x48] sm:$0xff]
    %v5787 = vld [vmem:[#allocation8 + $0x50] sm:$0xff]
    %v5788 = vld [vmem:[#allocation8 + $0x58] sm:$0xff]
    %v5789 = vld [vmem:[#allocation8 + $0x60] sm:$0xff]
    %v5790 = vld [vmem:[#allocation8 + $0x68] sm:$0xff]
    %v5791 = vld [vmem:[#allocation8 + $0x70] sm:$0xff]
    %v5792 = vld [vmem:[#allocation8 + $0x78] sm:$0xff]
    %v5793 = vld [vmem:[#allocation8 + $0x80] sm:$0xff]
    %v5794 = vld [vmem:[#allocation8 + $0x88] sm:$0xff]
    %v5795 = vld [vmem:[#allocation8 + $0x90] sm:$0xff]
    %v5796 = vld [vmem:[#allocation8 + $0x98] sm:$0xff]
    %v5797 = vld [vmem:[#allocation8 + $0xa0] sm:$0xff]
    %v5798 = vld [vmem:[#allocation8 + $0xa8] sm:$0xff]
    %v5799 = vld [vmem:[#allocation8 + $0xb0] sm:$0xff]
    %v5800 = vld [vmem:[#allocation8 + $0xb8] sm:$0xff]
    %v5801 = vld [vmem:[#allocation8 + $0xc0] sm:$0xff]
    %v5802 = vld [vmem:[#allocation8 + $0xc8] sm:$0xff]
    %v5803 = vld [vmem:[#allocation8 + $0xd0] sm:$0xff]
    %v5804 = vld [vmem:[#allocation8 + $0xd8] sm:$0xff]
    %v5805 = vld [vmem:[#allocation8 + $0xe0] sm:$0xff]
    %v5806 = vld [vmem:[#allocation8 + $0xe8] sm:$0xff]
    %v5807 = vld [vmem:[#allocation8 + $0xf0] sm:$0xff]
    %v5808 = vld [vmem:[#allocation8 + $0xf8] sm:$0xff]
    %v5809 = vld [vmem:[#allocation8 + $0x100] sm:$0xff]
    %v5810 = vld [vmem:[#allocation8 + $0x108] sm:$0xff]
    %v5811 = vld [vmem:[#allocation8 + $0x110] sm:$0xff]
    %v5812 = vld [vmem:[#allocation8 + $0x118] sm:$0xff]
    %v5813 = vld [vmem:[#allocation8 + $0x120] sm:$0xff]
    %v5814 = vld [vmem:[#allocation8 + $0x128] sm:$0xff]
    %v5815 = vld [vmem:[#allocation8 + $0x130] sm:$0xff]
    %v5816 = vld [vmem:[#allocation8 + $0x138] sm:$0xff]
    %v5817 = vld [vmem:[#allocation8 + $0x140] sm:$0xff]
    %v5818 = vld [vmem:[#allocation8 + $0x148] sm:$0xff]
    %v5819 = vld [vmem:[#allocation8 + $0x150] sm:$0xff]
    %v5820 = vld [vmem:[#allocation8 + $0x158] sm:$0xff]
    %v5821 = vld [vmem:[#allocation8 + $0x160] sm:$0xff]
    %v5822 = vld [vmem:[#allocation8 + $0x168] sm:$0xff]
    %v5823 = vld [vmem:[#allocation8 + $0x170] sm:$0xff]
    %v5824 = vld [vmem:[#allocation8 + $0x178] sm:$0xff]
    %v5825 = vld [vmem:[#allocation8 + $0x180] sm:$0xff]
    %v5826 = vld [vmem:[#allocation8 + $0x188] sm:$0xff]
    %v5827 = vld [vmem:[#allocation8 + $0x190] sm:$0xff]
    %v5828 = vld [vmem:[#allocation8 + $0x198] sm:$0xff]
    %v5829 = vld [vmem:[#allocation8 + $0x1a0] sm:$0xff]
    %v5830 = vld [vmem:[#allocation8 + $0x1a8] sm:$0xff]
    %v5831 = vld [vmem:[#allocation8 + $0x1b0] sm:$0xff]
    %v5832 = vld [vmem:[#allocation8 + $0x1b8] sm:$0xff]
    %v5833 = vld [vmem:[#allocation8 + $0x1c0] sm:$0xff]
    %v5834 = vld [vmem:[#allocation8 + $0x1c8] sm:$0xff]
    %v5835 = vld [vmem:[#allocation8 + $0x1d0] sm:$0xff]
    %v5836 = vld [vmem:[#allocation8 + $0x1d8] sm:$0xff]
    %v5837 = vld [vmem:[#allocation8 + $0x1e0] sm:$0xff]
    %v5838 = vld [vmem:[#allocation8 + $0x1e8] sm:$0xff]
    %v5839 = vld [vmem:[#allocation8 + $0x1f0] sm:$0xff]
    %v5840 = vld [vmem:[#allocation8 + $0x1f8] sm:$0xff]
    %v5905 = vunpack.c.l.b16 %v5777
    %v5906 = vunpack.c.h.b16 %v5777
    %v5907 = vunpack.c.l.b16 %v5778
    %v5908 = vunpack.c.h.b16 %v5778
    %v5909 = vunpack.c.l.b16 %v5779
    %v5910 = vunpack.c.h.b16 %v5779
    %v5911 = vunpack.c.l.b16 %v5780
    %v5912 = vunpack.c.h.b16 %v5780
    %v5913 = vunpack.c.l.b16 %v5781
    %v5914 = vunpack.c.h.b16 %v5781
    %v5915 = vunpack.c.l.b16 %v5782
    %v5916 = vunpack.c.h.b16 %v5782
    %v5917 = vunpack.c.l.b16 %v5783
    %v5918 = vunpack.c.h.b16 %v5783
    %v5919 = vunpack.c.l.b16 %v5784
    %v5920 = vunpack.c.h.b16 %v5784
    %v5921 = vunpack.c.l.b16 %v5785
    %v5922 = vunpack.c.h.b16 %v5785
    %v5923 = vunpack.c.l.b16 %v5786
    %v5924 = vunpack.c.h.b16 %v5786
    %v5925 = vunpack.c.l.b16 %v5787
    %v5926 = vunpack.c.h.b16 %v5787
    %v5927 = vunpack.c.l.b16 %v5788
    %v5928 = vunpack.c.h.b16 %v5788
    %v5929 = vunpack.c.l.b16 %v5789
    %v5930 = vunpack.c.h.b16 %v5789
    %v5931 = vunpack.c.l.b16 %v5790
    %v5932 = vunpack.c.h.b16 %v5790
    %v5933 = vunpack.c.l.b16 %v5791
    %v5934 = vunpack.c.h.b16 %v5791
    %v5935 = vunpack.c.l.b16 %v5792
    %v5936 = vunpack.c.h.b16 %v5792
    %v5937 = vunpack.c.l.b16 %v5793
    %v5938 = vunpack.c.h.b16 %v5793
    %v5939 = vunpack.c.l.b16 %v5794
    %v5940 = vunpack.c.h.b16 %v5794
    %v5941 = vunpack.c.l.b16 %v5795
    %v5942 = vunpack.c.h.b16 %v5795
    %v5943 = vunpack.c.l.b16 %v5796
    %v5944 = vunpack.c.h.b16 %v5796
    %v5945 = vunpack.c.l.b16 %v5797
    %v5946 = vunpack.c.h.b16 %v5797
    %v5947 = vunpack.c.l.b16 %v5798
    %v5948 = vunpack.c.h.b16 %v5798
    %v5949 = vunpack.c.l.b16 %v5799
    %v5950 = vunpack.c.h.b16 %v5799
    %v5951 = vunpack.c.l.b16 %v5800
    %v5952 = vunpack.c.h.b16 %v5800
    %v5953 = vunpack.c.l.b16 %v5801
    %v5954 = vunpack.c.h.b16 %v5801
    %v5955 = vunpack.c.l.b16 %v5802
    %v5956 = vunpack.c.h.b16 %v5802
    %v5957 = vunpack.c.l.b16 %v5803
    %v5958 = vunpack.c.h.b16 %v5803
    %v5959 = vunpack.c.l.b16 %v5804
    %v5960 = vunpack.c.h.b16 %v5804
    %v5961 = vunpack.c.l.b16 %v5805
    %v5962 = vunpack.c.h.b16 %v5805
    %v5963 = vunpack.c.l.b16 %v5806
    %v5964 = vunpack.c.h.b16 %v5806
    %v5965 = vunpack.c.l.b16 %v5807
    %v5966 = vunpack.c.h.b16 %v5807
    %v5967 = vunpack.c.l.b16 %v5808
    %v5968 = vunpack.c.h.b16 %v5808
    %v5969 = vunpack.c.l.b16 %v5809
    %v5970 = vunpack.c.h.b16 %v5809
    %v5971 = vunpack.c.l.b16 %v5810
    %v5972 = vunpack.c.h.b16 %v5810
    %v5973 = vunpack.c.l.b16 %v5811
    %v5974 = vunpack.c.h.b16 %v5811
    %v5975 = vunpack.c.l.b16 %v5812
    %v5976 = vunpack.c.h.b16 %v5812
    %v5977 = vunpack.c.l.b16 %v5813
    %v5978 = vunpack.c.h.b16 %v5813
    %v5979 = vunpack.c.l.b16 %v5814
    %v5980 = vunpack.c.h.b16 %v5814
    %v5981 = vunpack.c.l.b16 %v5815
    %v5982 = vunpack.c.h.b16 %v5815
    %v5983 = vunpack.c.l.b16 %v5816
    %v5984 = vunpack.c.h.b16 %v5816
    %v5985 = vunpack.c.l.b16 %v5817
    %v5986 = vunpack.c.h.b16 %v5817
    %v5987 = vunpack.c.l.b16 %v5818
    %v5988 = vunpack.c.h.b16 %v5818
    %v5989 = vunpack.c.l.b16 %v5819
    %v5990 = vunpack.c.h.b16 %v5819
    %v5991 = vunpack.c.l.b16 %v5820
    %v5992 = vunpack.c.h.b16 %v5820
    %v5993 = vunpack.c.l.b16 %v5821
    %v5994 = vunpack.c.h.b16 %v5821
    %v5995 = vunpack.c.l.b16 %v5822
    %v5996 = vunpack.c.h.b16 %v5822
    %v5997 = vunpack.c.l.b16 %v5823
    %v5998 = vunpack.c.h.b16 %v5823
    %v5999 = vunpack.c.l.b16 %v5824
    %v6000 = vunpack.c.h.b16 %v5824
    %v6001 = vunpack.c.l.b16 %v5825
    %v6002 = vunpack.c.h.b16 %v5825
    %v6003 = vunpack.c.l.b16 %v5826
    %v6004 = vunpack.c.h.b16 %v5826
    %v6005 = vunpack.c.l.b16 %v5827
    %v6006 = vunpack.c.h.b16 %v5827
    %v6007 = vunpack.c.l.b16 %v5828
    %v6008 = vunpack.c.h.b16 %v5828
    %v6009 = vunpack.c.l.b16 %v5829
    %v6010 = vunpack.c.h.b16 %v5829
    %v6011 = vunpack.c.l.b16 %v5830
    %v6012 = vunpack.c.h.b16 %v5830
    %v6013 = vunpack.c.l.b16 %v5831
    %v6014 = vunpack.c.h.b16 %v5831
    %v6015 = vunpack.c.l.b16 %v5832
    %v6016 = vunpack.c.h.b16 %v5832
    %v6017 = vunpack.c.l.b16 %v5833
    %v6018 = vunpack.c.h.b16 %v5833
    %v6019 = vunpack.c.l.b16 %v5834
    %v6020 = vunpack.c.h.b16 %v5834
    %v6021 = vunpack.c.l.b16 %v5835
    %v6022 = vunpack.c.h.b16 %v5835
    %v6023 = vunpack.c.l.b16 %v5836
    %v6024 = vunpack.c.h.b16 %v5836
    %v6025 = vunpack.c.l.b16 %v5837
    %v6026 = vunpack.c.h.b16 %v5837
    %v6027 = vunpack.c.l.b16 %v5838
    %v6028 = vunpack.c.h.b16 %v5838
    %v6029 = vunpack.c.l.b16 %v5839
    %v6030 = vunpack.c.h.b16 %v5839
    %v6031 = vunpack.c.l.b16 %v5840
    %v6032 = vunpack.c.h.b16 %v5840
    %v6033 = vpack.c.b16 %v5907, %v5905
    %v6034 = vpack.c.b16 %v5908, %v5906
    %v6035 = vpack.c.b16 %v5911, %v5909
    %v6036 = vpack.c.b16 %v5912, %v5910
    %v6037 = vpack.c.b16 %v5915, %v5913
    %v6038 = vpack.c.b16 %v5916, %v5914
    %v6039 = vpack.c.b16 %v5919, %v5917
    %v6040 = vpack.c.b16 %v5920, %v5918
    %v6041 = vpack.c.b16 %v5923, %v5921
    %v6042 = vpack.c.b16 %v5924, %v5922
    %v6043 = vpack.c.b16 %v5927, %v5925
    %v6044 = vpack.c.b16 %v5928, %v5926
    %v6045 = vpack.c.b16 %v5931, %v5929
    %v6046 = vpack.c.b16 %v5932, %v5930
    %v6047 = vpack.c.b16 %v5935, %v5933
    %v6048 = vpack.c.b16 %v5936, %v5934
    %v6049 = vpack.c.b16 %v5939, %v5937
    %v6050 = vpack.c.b16 %v5940, %v5938
    %v6051 = vpack.c.b16 %v5943, %v5941
    %v6052 = vpack.c.b16 %v5944, %v5942
    %v6053 = vpack.c.b16 %v5947, %v5945
    %v6054 = vpack.c.b16 %v5948, %v5946
    %v6055 = vpack.c.b16 %v5951, %v5949
    %v6056 = vpack.c.b16 %v5952, %v5950
    %v6057 = vpack.c.b16 %v5955, %v5953
    %v6058 = vpack.c.b16 %v5956, %v5954
    %v6059 = vpack.c.b16 %v5959, %v5957
    %v6060 = vpack.c.b16 %v5960, %v5958
    %v6061 = vpack.c.b16 %v5963, %v5961
    %v6062 = vpack.c.b16 %v5964, %v5962
    %v6063 = vpack.c.b16 %v5967, %v5965
    %v6064 = vpack.c.b16 %v5968, %v5966
    %v6065 = vpack.c.b16 %v5971, %v5969
    %v6066 = vpack.c.b16 %v5972, %v5970
    %v6067 = vpack.c.b16 %v5975, %v5973
    %v6068 = vpack.c.b16 %v5976, %v5974
    %v6069 = vpack.c.b16 %v5979, %v5977
    %v6070 = vpack.c.b16 %v5980, %v5978
    %v6071 = vpack.c.b16 %v5983, %v5981
    %v6072 = vpack.c.b16 %v5984, %v5982
    %v6073 = vpack.c.b16 %v5987, %v5985
    %v6074 = vpack.c.b16 %v5988, %v5986
    %v6075 = vpack.c.b16 %v5991, %v5989
    %v6076 = vpack.c.b16 %v5992, %v5990
    %v6077 = vpack.c.b16 %v5995, %v5993
    %v6078 = vpack.c.b16 %v5996, %v5994
    %v6079 = vpack.c.b16 %v5999, %v5997
    %v6080 = vpack.c.b16 %v6000, %v5998
    %v6081 = vpack.c.b16 %v6003, %v6001
    %v6082 = vpack.c.b16 %v6004, %v6002
    %v6083 = vpack.c.b16 %v6007, %v6005
    %v6084 = vpack.c.b16 %v6008, %v6006
    %v6085 = vpack.c.b16 %v6011, %v6009
    %v6086 = vpack.c.b16 %v6012, %v6010
    %v6087 = vpack.c.b16 %v6015, %v6013
    %v6088 = vpack.c.b16 %v6016, %v6014
    %v6089 = vpack.c.b16 %v6019, %v6017
    %v6090 = vpack.c.b16 %v6020, %v6018
    %v6091 = vpack.c.b16 %v6023, %v6021
    %v6092 = vpack.c.b16 %v6024, %v6022
    %v6093 = vpack.c.b16 %v6027, %v6025
    %v6094 = vpack.c.b16 %v6028, %v6026
    %v6095 = vpack.c.b16 %v6031, %v6029
    %v6096 = vpack.c.b16 %v6032, %v6030
    %6161 = vmatprep.subr.bf16.mxu0 %v6048
    %6162 = vmatpush1.bf16.msra.mxu0 %v6047
    %6163 = vmatprep.subr.bf16.mxu0 %v6046
    %6164 = vmatpush1.bf16.msra.mxu0 %v6045
    %6165 = vmatprep.subr.bf16.mxu0 %v6044
    %6166 = vmatpush1.bf16.msra.mxu0 %v6043
    %6167 = vmatprep.subr.bf16.mxu0 %v6042
    %6168 = vmatpush1.bf16.msra.mxu0 %v6041
    %6169 = vmatprep.subr.bf16.mxu0 %v6040
    %6170 = vmatpush1.bf16.msra.mxu0 %v6039
    %6171 = vmatprep.subr.bf16.mxu0 %v6038
    %6172 = vmatpush1.bf16.msra.mxu0 %v6037
    %6173 = vmatprep.subr.bf16.mxu0 %v6036
    %6174 = vmatpush1.bf16.msra.mxu0 %v6035
    %6175 = vmatprep.subr.bf16.mxu0 %v6034
    %6176 = vmatpush1.bf16.msra.mxu0 %v6033
    %6177 = vmatprep.subr.bf16.mxu0 %v6064
    %6178 = vmatpush2.bf16.msra.mxu0 %v6063
    %6179 = vmatprep.subr.bf16.mxu0 %v6062
    %6180 = vmatpush2.bf16.msra.mxu0 %v6061
    %6181 = vmatprep.subr.bf16.mxu0 %v6060
    %6182 = vmatpush2.bf16.msra.mxu0 %v6059
    %6183 = vmatprep.subr.bf16.mxu0 %v6058
    %6184 = vmatpush2.bf16.msra.mxu0 %v6057
    %6185 = vmatprep.subr.bf16.mxu0 %v6056
    %6186 = vmatpush2.bf16.msra.mxu0 %v6055
    %6187 = vmatprep.subr.bf16.mxu0 %v6054
    %6188 = vmatpush2.bf16.msra.mxu0 %v6053
    %6189 = vmatprep.subr.bf16.mxu0 %v6052
    %6190 = vmatpush2.bf16.msra.mxu0 %v6051
    %6191 = vmatprep.subr.bf16.mxu0 %v6050
    %6192 = vmatpush2.bf16.msra.mxu0 %v6049
    %6193 = vmatprep.mubr.bf16.mxu0 %v5774
    %6194 = vmatmul.mubr.bf16.gmra.mxu0 %v5773
    %v6195 = vpop.f32.mrf.mxu0
    %v6196 = vadd.f32 0.0, %v6195
    %v6197 = vpop.f32.mrf.mxu0
    %v6198 = vadd.f32 0.0, %v6197
    %v6199 = vpop.f32.mrf.mxu0
    %v6200 = vpop.f32.mrf.mxu0
    %6201 = vdwg.mxu0
    %6202 = vmatprep.subr.bf16.mxu0 %v6080
    %6203 = vmatpush1.bf16.msra.mxu0 %v6079
    %6204 = vmatprep.subr.bf16.mxu0 %v6078
    %6205 = vmatpush1.bf16.msra.mxu0 %v6077
    %6206 = vmatprep.subr.bf16.mxu0 %v6076
    %6207 = vmatpush1.bf16.msra.mxu0 %v6075
    %6208 = vmatprep.subr.bf16.mxu0 %v6074
    %6209 = vmatpush1.bf16.msra.mxu0 %v6073
    %6210 = vmatprep.subr.bf16.mxu0 %v6072
    %6211 = vmatpush1.bf16.msra.mxu0 %v6071
    %6212 = vmatprep.subr.bf16.mxu0 %v6070
    %6213 = vmatpush1.bf16.msra.mxu0 %v6069
    %6214 = vmatprep.subr.bf16.mxu0 %v6068
    %6215 = vmatpush1.bf16.msra.mxu0 %v6067
    %6216 = vmatprep.subr.bf16.mxu0 %v6066
    %6217 = vmatpush1.bf16.msra.mxu0 %v6065
    %6218 = vmatprep.subr.bf16.mxu0 %v6096
    %6219 = vmatpush2.bf16.msra.mxu0 %v6095
    %6220 = vmatprep.subr.bf16.mxu0 %v6094
    %6221 = vmatpush2.bf16.msra.mxu0 %v6093
    %6222 = vmatprep.subr.bf16.mxu0 %v6092
    %6223 = vmatpush2.bf16.msra.mxu0 %v6091
    %6224 = vmatprep.subr.bf16.mxu0 %v6090
    %6225 = vmatpush2.bf16.msra.mxu0 %v6089
    %6226 = vmatprep.subr.bf16.mxu0 %v6088
    %6227 = vmatpush2.bf16.msra.mxu0 %v6087
    %6228 = vmatprep.subr.bf16.mxu0 %v6086
    %6229 = vmatpush2.bf16.msra.mxu0 %v6085
    %6230 = vmatprep.subr.bf16.mxu0 %v6084
    %6231 = vmatpush2.bf16.msra.mxu0 %v6083
    %6232 = vmatprep.subr.bf16.mxu0 %v6082
    %6233 = vmatpush2.bf16.msra.mxu0 %v6081
    %6234 = vmatprep.mubr.bf16.mxu0 %v5776
    %6235 = vmatmul.mubr.bf16.gmra.mxu0 %v5775
    %v6236 = vpop.f32.mrf.mxu0
    %v6237 = vadd.f32 %v6196, %v6236
    %v6238 = vpop.f32.mrf.mxu0
    %v6239 = vadd.f32 %v6198, %v6238
    %v6240 = vpop.f32.mrf.mxu0
    %v6241 = vpop.f32.mrf.mxu0
    %6242 = vdwg.mxu0
    %vm6243 = vcmp.ge.f32.partialorder %v6237, 0.0
    %vm6244 = vcmp.ge.f32.partialorder %v6239, 0.0
    %v6245 = vmul.f32 %v6237, 0.3
    %v6246 = vmul.f32 %v6239, 0.3
    %v6247 = vsel %vm6243, %v6237, %v6245
    %v6248 = vsel %vm6244, %v6239, %v6246
    %v6249 = vpack.c.bf16 %v6247, %v6247
    %v6250 = vpack.c.bf16 %v6248, %v6248
    %v6251 = vld [vmem:[#allocation10] sm:$0xf]
    %v6252 = vld [vmem:[#allocation10 + $0x4] sm:$0xf]
    %v6253 = vld [vmem:[#allocation10 + $0x8] sm:$0xf]
    %v6254 = vld [vmem:[#allocation10 + $0xc] sm:$0xf]
    %v6255 = vld [vmem:[#allocation10 + $0x10] sm:$0xf]
    %v6256 = vld [vmem:[#allocation10 + $0x14] sm:$0xf]
    %v6257 = vld [vmem:[#allocation10 + $0x18] sm:$0xf]
    %v6258 = vld [vmem:[#allocation10 + $0x1c] sm:$0xf]
    %v6259 = vld [vmem:[#allocation10 + $0x20] sm:$0xf]
    %v6260 = vld [vmem:[#allocation10 + $0x24] sm:$0xf]
    %v6261 = vld [vmem:[#allocation10 + $0x28] sm:$0xf]
    %v6262 = vld [vmem:[#allocation10 + $0x2c] sm:$0xf]
    %v6263 = vld [vmem:[#allocation10 + $0x30] sm:$0xf]
    %v6264 = vld [vmem:[#allocation10 + $0x34] sm:$0xf]
    %v6265 = vld [vmem:[#allocation10 + $0x38] sm:$0xf]
    %v6266 = vld [vmem:[#allocation10 + $0x3c] sm:$0xf]
    %v6267 = vld [vmem:[#allocation10 + $0x40] sm:$0xf]
    %v6268 = vld [vmem:[#allocation10 + $0x44] sm:$0xf]
    %v6269 = vld [vmem:[#allocation10 + $0x48] sm:$0xf]
    %v6270 = vld [vmem:[#allocation10 + $0x4c] sm:$0xf]
    %v6271 = vld [vmem:[#allocation10 + $0x50] sm:$0xf]
    %v6272 = vld [vmem:[#allocation10 + $0x54] sm:$0xf]
    %v6273 = vld [vmem:[#allocation10 + $0x58] sm:$0xf]
    %v6274 = vld [vmem:[#allocation10 + $0x5c] sm:$0xf]
    %v6275 = vld [vmem:[#allocation10 + $0x60] sm:$0xf]
    %v6276 = vld [vmem:[#allocation10 + $0x64] sm:$0xf]
    %v6277 = vld [vmem:[#allocation10 + $0x68] sm:$0xf]
    %v6278 = vld [vmem:[#allocation10 + $0x6c] sm:$0xf]
    %v6279 = vld [vmem:[#allocation10 + $0x70] sm:$0xf]
    %v6280 = vld [vmem:[#allocation10 + $0x74] sm:$0xf]
    %v6281 = vld [vmem:[#allocation10 + $0x78] sm:$0xf]
    %v6282 = vld [vmem:[#allocation10 + $0x7c] sm:$0xf]
    %v6315 = vunpack.c.l.b16 %v6251
    %v6316 = vunpack.c.l.b16 %v6252
    %v6317 = vunpack.c.l.b16 %v6253
    %v6318 = vunpack.c.l.b16 %v6254
    %v6319 = vunpack.c.l.b16 %v6255
    %v6320 = vunpack.c.l.b16 %v6256
    %v6321 = vunpack.c.l.b16 %v6257
    %v6322 = vunpack.c.l.b16 %v6258
    %v6323 = vunpack.c.l.b16 %v6259
    %v6324 = vunpack.c.l.b16 %v6260
    %v6325 = vunpack.c.l.b16 %v6261
    %v6326 = vunpack.c.l.b16 %v6262
    %v6327 = vunpack.c.l.b16 %v6263
    %v6328 = vunpack.c.l.b16 %v6264
    %v6329 = vunpack.c.l.b16 %v6265
    %v6330 = vunpack.c.l.b16 %v6266
    %v6331 = vunpack.c.l.b16 %v6267
    %v6332 = vunpack.c.l.b16 %v6268
    %v6333 = vunpack.c.l.b16 %v6269
    %v6334 = vunpack.c.l.b16 %v6270
    %v6335 = vunpack.c.l.b16 %v6271
    %v6336 = vunpack.c.l.b16 %v6272
    %v6337 = vunpack.c.l.b16 %v6273
    %v6338 = vunpack.c.l.b16 %v6274
    %v6339 = vunpack.c.l.b16 %v6275
    %v6340 = vunpack.c.l.b16 %v6276
    %v6341 = vunpack.c.l.b16 %v6277
    %v6342 = vunpack.c.l.b16 %v6278
    %v6343 = vunpack.c.l.b16 %v6279
    %v6344 = vunpack.c.l.b16 %v6280
    %v6345 = vunpack.c.l.b16 %v6281
    %v6346 = vunpack.c.l.b16 %v6282
    %v6347 = vpack.c.b16 %v6316, %v6315
    %v6348 = vpack.c.b16 %v6318, %v6317
    %v6349 = vpack.c.b16 %v6320, %v6319
    %v6350 = vpack.c.b16 %v6322, %v6321
    %v6351 = vpack.c.b16 %v6324, %v6323
    %v6352 = vpack.c.b16 %v6326, %v6325
    %v6353 = vpack.c.b16 %v6328, %v6327
    %v6354 = vpack.c.b16 %v6330, %v6329
    %v6355 = vpack.c.b16 %v6332, %v6331
    %v6356 = vpack.c.b16 %v6334, %v6333
    %v6357 = vpack.c.b16 %v6336, %v6335
    %v6358 = vpack.c.b16 %v6338, %v6337
    %v6359 = vpack.c.b16 %v6340, %v6339
    %v6360 = vpack.c.b16 %v6342, %v6341
    %v6361 = vpack.c.b16 %v6344, %v6343
    %v6362 = vpack.c.b16 %v6346, %v6345
    %6379 = vmatprep.subr.bf16.mxu0 0
    %6380 = vmatpush1.bf16.msra.mxu0 %v6354
    %6381 = vmatprep.subr.bf16.mxu0 0
    %6382 = vmatpush1.bf16.msra.mxu0 %v6353
    %6383 = vmatprep.subr.bf16.mxu0 0
    %6384 = vmatpush1.bf16.msra.mxu0 %v6352
    %6385 = vmatprep.subr.bf16.mxu0 0
    %6386 = vmatpush1.bf16.msra.mxu0 %v6351
    %6387 = vmatprep.subr.bf16.mxu0 0
    %6388 = vmatpush1.bf16.msra.mxu0 %v6350
    %6389 = vmatprep.subr.bf16.mxu0 0
    %6390 = vmatpush1.bf16.msra.mxu0 %v6349
    %6391 = vmatprep.subr.bf16.mxu0 0
    %6392 = vmatpush1.bf16.msra.mxu0 %v6348
    %6393 = vmatprep.subr.bf16.mxu0 0
    %6394 = vmatpush1.bf16.msra.mxu0 %v6347
    %6395 = vmatprep.subr.bf16.mxu0 0
    %6396 = vmatpush2.bf16.msra.mxu0 %v6362
    %6397 = vmatprep.subr.bf16.mxu0 0
    %6398 = vmatpush2.bf16.msra.mxu0 %v6361
    %6399 = vmatprep.subr.bf16.mxu0 0
    %6400 = vmatpush2.bf16.msra.mxu0 %v6360
    %6401 = vmatprep.subr.bf16.mxu0 0
    %6402 = vmatpush2.bf16.msra.mxu0 %v6359
    %6403 = vmatprep.subr.bf16.mxu0 0
    %6404 = vmatpush2.bf16.msra.mxu0 %v6358
    %6405 = vmatprep.subr.bf16.mxu0 0
    %6406 = vmatpush2.bf16.msra.mxu0 %v6357
    %6407 = vmatprep.subr.bf16.mxu0 0
    %6408 = vmatpush2.bf16.msra.mxu0 %v6356
    %6409 = vmatprep.subr.bf16.mxu0 0
    %6410 = vmatpush2.bf16.msra.mxu0 %v6355
    %6411 = vmatprep.mubr.bf16.mxu0 %v6250
    %6412 = vmatmul.mubr.bf16.gmra.mxu0 %v6249
    %v6413 = vpop.f32.mrf.mxu0
    %v6414 = vadd.f32 0.0, %v6413
    %v6415 = vpop.f32.mrf.mxu0
    %v6416 = vpop.f32.mrf.mxu0
    %v6417 = vpop.f32.mrf.mxu0
    %6418 = vdwg.mxu0
    %vm6419 = vcmp.ge.f32.partialorder %v6414, 0.0
    %v6420 = vmul.f32 %v6414, 0.3
    %v6421 = vsel %vm6419, %v6414, %v6420
    %v6422 = vpack.c.bf16 %v6421, %v6421
    %v6423 = vld [vmem:[#allocation11] sm:$0xf]
    %v6424 = vld [vmem:[#allocation11 + $0x4] sm:$0xf]
    %v6425 = vld [vmem:[#allocation11 + $0x8] sm:$0xf]
    %v6426 = vld [vmem:[#allocation11 + $0xc] sm:$0xf]
    %v6427 = vld [vmem:[#allocation11 + $0x10] sm:$0xf]
    %v6428 = vld [vmem:[#allocation11 + $0x14] sm:$0xf]
    %v6429 = vld [vmem:[#allocation11 + $0x18] sm:$0xf]
    %v6430 = vld [vmem:[#allocation11 + $0x1c] sm:$0xf]
    %v6431 = vld [vmem:[#allocation11 + $0x20] sm:$0xf]
    %v6432 = vld [vmem:[#allocation11 + $0x24] sm:$0xf]
    %v6433 = vld [vmem:[#allocation11 + $0x28] sm:$0xf]
    %v6434 = vld [vmem:[#allocation11 + $0x2c] sm:$0xf]
    %v6435 = vld [vmem:[#allocation11 + $0x30] sm:$0xf]
    %v6436 = vld [vmem:[#allocation11 + $0x34] sm:$0xf]
    %v6437 = vld [vmem:[#allocation11 + $0x38] sm:$0xf]
    %v6438 = vld [vmem:[#allocation11 + $0x3c] sm:$0xf]
    %v6455 = vunpack.c.l.b16 %v6423
    %v6456 = vunpack.c.l.b16 %v6424
    %v6457 = vunpack.c.l.b16 %v6425
    %v6458 = vunpack.c.l.b16 %v6426
    %v6459 = vunpack.c.l.b16 %v6427
    %v6460 = vunpack.c.l.b16 %v6428
    %v6461 = vunpack.c.l.b16 %v6429
    %v6462 = vunpack.c.l.b16 %v6430
    %v6463 = vunpack.c.l.b16 %v6431
    %v6464 = vunpack.c.l.b16 %v6432
    %v6465 = vunpack.c.l.b16 %v6433
    %v6466 = vunpack.c.l.b16 %v6434
    %v6467 = vunpack.c.l.b16 %v6435
    %v6468 = vunpack.c.l.b16 %v6436
    %v6469 = vunpack.c.l.b16 %v6437
    %v6470 = vunpack.c.l.b16 %v6438
    %v6471 = vpack.c.b16 %v6456, %v6455
    %v6472 = vpack.c.b16 %v6458, %v6457
    %v6473 = vpack.c.b16 %v6460, %v6459
    %v6474 = vpack.c.b16 %v6462, %v6461
    %v6475 = vpack.c.b16 %v6464, %v6463
    %v6476 = vpack.c.b16 %v6466, %v6465
    %v6477 = vpack.c.b16 %v6468, %v6467
    %v6478 = vpack.c.b16 %v6470, %v6469
    %6487 = vmatprep.subr.bf16.mxu0 0
    %6488 = vmatpush1.bf16.msra.mxu0 %v6478
    %6489 = vmatprep.subr.bf16.mxu0 0
    %6490 = vmatpush1.bf16.msra.mxu0 %v6477
    %6491 = vmatprep.subr.bf16.mxu0 0
    %6492 = vmatpush1.bf16.msra.mxu0 %v6476
    %6493 = vmatprep.subr.bf16.mxu0 0
    %6494 = vmatpush1.bf16.msra.mxu0 %v6475
    %6495 = vmatprep.subr.bf16.mxu0 0
    %6496 = vmatpush1.bf16.msra.mxu0 %v6474
    %6497 = vmatprep.subr.bf16.mxu0 0
    %6498 = vmatpush1.bf16.msra.mxu0 %v6473
    %6499 = vmatprep.subr.bf16.mxu0 0
    %6500 = vmatpush1.bf16.msra.mxu0 %v6472
    %6501 = vmatprep.subr.bf16.mxu0 0
    %6502 = vmatpush1.bf16.msra.mxu0 %v6471
    %6503 = vmatprep.subr.bf16.mxu0 0
    %6504 = vmatpush2.bf16.msra.mxu0 0
    %6505 = vmatprep.subr.bf16.mxu0 0
    %6506 = vmatpush2.bf16.msra.mxu0 0
    %6507 = vmatprep.subr.bf16.mxu0 0
    %6508 = vmatpush2.bf16.msra.mxu0 0
    %6509 = vmatprep.subr.bf16.mxu0 0
    %6510 = vmatpush2.bf16.msra.mxu0 0
    %6511 = vmatprep.subr.bf16.mxu0 0
    %6512 = vmatpush2.bf16.msra.mxu0 0
    %6513 = vmatprep.subr.bf16.mxu0 0
    %6514 = vmatpush2.bf16.msra.mxu0 0
    %6515 = vmatprep.subr.bf16.mxu0 0
    %6516 = vmatpush2.bf16.msra.mxu0 0
    %6517 = vmatprep.subr.bf16.mxu0 0
    %6518 = vmatpush2.bf16.msra.mxu0 0
    %6519 = vmatprep.mubr.bf16.mxu0 0
    %6520 = vmatmul.mubr.bf16.gmra.mxu0 %v6422
    %v6521 = vpop.f32.mrf.mxu0
    %v6522 = vadd.f32 0.0, %v6521
    %v6523 = vpop.f32.mrf.mxu0
    %v6524 = vpop.f32.mrf.mxu0
    %v6525 = vpop.f32.mrf.mxu0
    %6526 = vdwg.mxu0
    %6527 = vst [vmem:[#allocation13] sm:$0xff] %v6522
    // Predicated region
    $region50: #{tpu_custom_call.1} parent=1 // pred_check
      _
    $region51: #{tpu_custom_call.1} parent=1 // pred_check_branch
      %6529 = sbr.rel (0) target = $region53
    $region52: #{tpu_custom_call.1} parent=1 // pred_region
      %s6531 = ssub.s32 128, 128
      %6532 = vsyncadd [#allocation4], %s6531
      %s6534 = sshll.u32 [#allocation13], 4
      %s6535 = int_to_ptr.vmem [resolvable:$true] %s6534
      %6537 = dma.vmem_to_hbm [thread:$0]  %s6535, 128, %s6, [#allocation4]
    $region53: #{tpu_custom_call.1} parent=1 // pred_fallthru
      _
    // Predicated region
    $region54: #{tpu_custom_call.1} parent=1 // pred_check
      _
    $region55: #{tpu_custom_call.1} parent=1 // pred_check_branch
      %6539 = sbr.rel (0) target = $region57
    $region56: #{tpu_custom_call.1} parent=1 // pred_region
      %6540 = dma.done [#allocation4], 128
    $region57: #{tpu_custom_call.1} parent=1 // pred_fallthru
      _
    %6541 = vsyncpa [#allocation3], 1
    %6542 = vsyncpa [#allocation6], 1
    %6543 = vsyncpa [#allocation9], 1
    %6544 = vsyncpa [#allocation12], 1
    %6545 = vsyncpa [#allocation4], 1

</llo_original>
